<compile_context>
chip_gen: v6e
topology: v6e:2x2x1
jax: 0.10.0
libtpu: 0.0.40
codegen_flags: <defaults>
</compile_context>

<pallas_src>
import functools
import math

import jax
import jax.numpy as jnp
from jax import lax
from jax.experimental import pallas as pl
from jax.experimental.pallas import tpu as pltpu

_LANE = 128


def _round_up(x, m):
    return ((x + m - 1) // m) * m


# ----------------------------------------------------------------------------
# Small capability probes / chip-dependent knobs
# ----------------------------------------------------------------------------
_BUFFERED_OK = None


def _buffered_pipeline_mode():
    """pl.Buffered(1) on grid-invariant weight/bias specs avoids allocating a
    second (double-buffer) copy of operands whose index_map is constant.
    Probed once; silently disabled if this JAX build rejects buffer_count=1."""
    global _BUFFERED_OK
    if _BUFFERED_OK is None:
        try:
            def _probe_kernel(x_ref, o_ref):
                o_ref[...] = x_ref[...] * 2.0

            fn = pl.pallas_call(
                _probe_kernel,
                out_shape=jax.ShapeDtypeStruct((8, _LANE), jnp.float32),
                grid=(2,),
                in_specs=[pl.BlockSpec((8, _LANE), lambda i: (0, 0),
                                       pipeline_mode=pl.Buffered(buffer_count=1))],
                out_specs=pl.BlockSpec((8, _LANE), lambda i: (0, 0)),
            )
            jax.block_until_ready(fn(jnp.ones((8, _LANE), jnp.float32)))
            _BUFFERED_OK = True
        except Exception:
            _BUFFERED_OK = False
    return pl.Buffered(buffer_count=1) if _BUFFERED_OK else None


def _const_spec(block_shape, index_map):
    pm = _buffered_pipeline_mode()
    if pm is not None:
        return pl.BlockSpec(block_shape, index_map, pipeline_mode=pm)
    return pl.BlockSpec(block_shape, index_map)


@functools.lru_cache(maxsize=None)
def _vmem_limit_bytes():
    # v5e/v6e: 128 MiB physical VMEM, v7x: 64 MiB.  Use ~half of physical so the
    # compiler keeps headroom for its own scratch and double-buffered DMAs
    # (review: don't cap v6e/v5e at 32 MiB; don't overshoot v7x).
    try:
        cap = int(pltpu.get_tpu_info().vmem_capacity_bytes)
    except Exception:
        cap = 128 * 1024 * 1024
    return max(32 * 1024 * 1024, min(96 * 1024 * 1024, cap // 2))


# ----------------------------------------------------------------------------
# Fused (packed-K GEMM + bias + InstanceNorm + ReLU + residual + tanh) kernel
# ----------------------------------------------------------------------------
def _fused_gemm_kernel(*refs, groups, eps, use_in, relu, use_tanh, has_res):
    if has_res:
        x_ref, w_ref, b_ref, r_ref, o_ref = refs
    else:
        x_ref, w_ref, b_ref, o_ref = refs

    # One packed-K bf16 MXU GEMM, f32 accumulation: no per-tap accumulator
    # round trips through VMEM and no zero contraction lanes.
    y = jnp.dot(x_ref[0], w_ref[...], preferred_element_type=jnp.float32)
    y = y + b_ref[...]                                     # bias (1, Nc) f32

    if use_in:
        # InstanceNorm2d(affine=False, eps=1e-5), biased variance (PyTorch).
        # Every row of y is a real output pixel and every real channel sits at
        # column < Cout, so no masking temp / iota pass is required.
        nc = y.shape[-1]
        n_valid = y.shape[0] * groups
        s = jnp.sum(y, axis=0, keepdims=True)
        ss = jnp.sum(y * y, axis=0, keepdims=True)
        if groups > 1:
            # Sub-pixel deconv: the `groups` 128-lane column blocks hold the
            # same true channels at different output phases; IN statistics are
            # joint over them (== stats over the full upsampled map).
            cg = nc // groups
            s_f = s[:, 0:cg]
            ss_f = ss[:, 0:cg]
            for g in range(1, groups):
                s_f = s_f + s[:, g * cg:(g + 1) * cg]
                ss_f = ss_f + ss[:, g * cg:(g + 1) * cg]
            s, ss = s_f, ss_f
        inv_n = 1.0 / float(n_valid)
        mean = s * inv_n
        # TODO(synk): switch to a shifted / two-pass variance at production
        # spatial sizes (n ~ 65k pixels) if tight PyTorch agreement is needed.
        var = jnp.maximum(ss * inv_n - mean * mean, 0.0)
        inv = lax.rsqrt(var + eps)
        if groups > 1:
            # Broadcast per-true-channel stats back over the phase groups:
            # concat of 128-lane-aligned tiles of a tiny (1, cg) vector.
            mean = jnp.concatenate([mean] * groups, axis=1)
            inv = jnp.concatenate([inv] * groups, axis=1)
        y = (y - mean) * inv

    if relu:
        y = jnp.maximum(y, 0.0)
    if has_res:
        y = y + r_ref[0].astype(jnp.float32)
    if use_tanh:
        y = jnp.tanh(y)

    o_ref[0] = y.astype(o_ref.dtype)


def _fused_gemm_call(xp, w, b, res, *, groups, use_in, relu, use_tanh,
                     out_dtype, m_tile=None, eps=1e-5):
    B, M, Kp = xp.shape
    Kp_w, Nc = w.shape
    assert Kp_w == Kp
    has_res = res is not None

    # Row tiling is only legal when the epilogue has no cross-row coupling
    # (InstanceNorm statistics span all rows of a sample).
    if use_in or m_tile is None or (M % m_tile) != 0:
        m_tile = M
    n_mt = M // m_tile

    kern = functools.partial(
        _fused_gemm_kernel, groups=groups, eps=eps, use_in=use_in,
        relu=relu, use_tanh=use_tanh, has_res=has_res)

    in_specs = [
        pl.BlockSpec((1, m_tile, Kp), lambda i, j: (i, j, 0)),   # packed input
        _const_spec((Kp, Nc), lambda i, j: (0, 0)),              # weights (invariant)
        _const_spec((1, Nc), lambda i, j: (0, 0)),               # bias (invariant)
    ]
    inputs = [xp, w, b]
    if has_res:
        in_specs.append(pl.BlockSpec((1, m_tile, Nc), lambda i, j: (i, j, 0)))
        inputs.append(res)

    return pl.pallas_call(
        kern,
        out_shape=jax.ShapeDtypeStruct((B, M, Nc), out_dtype),
        grid_spec=pltpu.PrefetchScalarGridSpec(
            num_scalar_prefetch=0,
            grid=(B, n_mt),
            in_specs=in_specs,
            out_specs=pl.BlockSpec((1, m_tile, Nc), lambda i, j: (i, j, 0)),
        ),
        compiler_params=pltpu.CompilerParams(
            dimension_semantics=("parallel", "parallel"),
            vmem_limit_bytes=_vmem_limit_bytes(),
        ),
    )(*inputs)


# ----------------------------------------------------------------------------
# Layer glue (XLA-side layout plumbing: reflect pad + patch gather, fused by XLA)
# ----------------------------------------------------------------------------
def _extract_patches(x, kh, kw, stride):
    """(B, Hp, Wp, C) -> ((B, Ho*Wo, kh*kw*C), Ho, Wo); tap-major / channel-minor.
    Pure XLA layout glue; it fuses with the reflect-pad / channel slice feeding
    it, so each layer materializes a single packed activation slab in HBM."""
    B, Hp, Wp, C = x.shape
    Ho = (Hp - kh) // stride + 1
    Wo = (Wp - kw) // stride + 1
    taps = []
    for di in range(kh):
        for dj in range(kw):
            taps.append(lax.slice(
                x, (0, di, dj, 0),
                (B, di + (Ho - 1) * stride + 1, dj + (Wo - 1) * stride + 1, C),
                (1, stride, stride, 1)))
    patches = jnp.concatenate(taps, axis=-1)               # (B, Ho, Wo, kh*kw*C)
    return patches.reshape(B, Ho * Wo, kh * kw * C), Ho, Wo


def _conv_layer(x, layer, *, kh, kw, stride, pad, pad_mode="reflect",
                use_in=True, relu=True, groups=1, residual=None,
                use_tanh=False, out_dtype=jnp.bfloat16, m_tile=None):
    """x: (B, H, W, Cin_real) bf16; layer = (w (Kp, Nc) bf16, b (1, Nc) f32)."""
    w, b = layer
    Kp, Nc = w.shape
    if pad is not None:
        (pt, pb), (pl_, pr) = pad
        x = jnp.pad(x, ((0, 0), (pt, pb), (pl_, pr), (0, 0)), mode=pad_mode)
    patches, Ho, Wo = _extract_patches(x, kh, kw, stride)
    B, M, K = patches.shape
    if K < Kp:   # zero-pad the contraction dim up to the lane-aligned weight K
        patches = jnp.pad(patches, ((0, 0), (0, 0), (0, Kp - K)))
    res_flat = residual.reshape(B, M, Nc) if residual is not None else None
    y = _fused_gemm_call(patches, w, b, res_flat, groups=groups, use_in=use_in,
                         relu=relu, use_tanh=use_tanh, out_dtype=out_dtype,
                         m_tile=m_tile)
    return y.reshape(B, Ho, Wo, Nc)


def _upconv_layer(x, layer):
    """ConvTranspose2d(k=3, s=2, p=1, output_padding=1) + InstanceNorm + ReLU,
    decomposed sub-pixel style into an equivalent 2x2 forward conv emitting 4
    phase groups (no zero-stuffed dilated input, 4x fewer wasted MACs); the IN
    statistics are joint over the phase groups inside the kernel and the
    pixel-shuffle interleave is XLA layout glue."""
    B, H, W, _ = x.shape
    y = _conv_layer(x, layer, kh=2, kw=2, stride=1,
                    pad=((0, 1), (0, 1)), pad_mode="constant",
                    use_in=True, relu=True, groups=4)
    cp = y.shape[-1] // 4
    y = y.reshape(B, H, W, 2, 2, cp)            # phase g = 2r + s
    y = jnp.transpose(y, (0, 1, 3, 2, 4, 5))    # (B, H, r, W, s, C)
    return y.reshape(B, 2 * H, 2 * W, cp)


# ----------------------------------------------------------------------------
# Parameter init (PyTorch layouts) + Pallas-ready packing (packed-K, bf16)
# ----------------------------------------------------------------------------
def _init_conv_pt(key, cout, cin, k):
    k1, k2 = jax.random.split(key)
    bound = 1.0 / math.sqrt(cin * k * k)
    w = jax.random.uniform(k1, (cout, cin, k, k), jnp.float32, -bound, bound)
    b = jax.random.uniform(k2, (cout,), jnp.float32, -bound, bound)
    return w, b


def _init_deconv_pt(key, cin, cout, k):
    k1, k2 = jax.random.split(key)
    bound = 1.0 / math.sqrt(cout * k * k)
    w = jax.random.uniform(k1, (cin, cout, k, k), jnp.float32, -bound, bound)
    b = jax.random.uniform(k2, (cout,), jnp.float32, -bound, bound)
    return w, b


def _pack_conv(w, b):
    """PyTorch Conv2d weight (Cout, Cin, kh, kw) -> packed-K GEMM operand of
    shape (round_up(kh*kw*Cin, 128), round_up(Cout, 128)) bf16 (rows are
    tap-major / channel-minor, matching _extract_patches)."""
    cout, cin, kh, kw = w.shape
    K = kh * kw * cin
    kp, np_ = _round_up(K, _LANE), _round_up(cout, _LANE)
    wt = jnp.transpose(w, (2, 3, 1, 0)).reshape(K, cout)
    wp = jnp.zeros((kp, np_), jnp.float32).at[:K, :cout].set(wt)
    bp = jnp.zeros((1, np_), jnp.float32).at[0, :cout].set(b)
    return wp.astype(jnp.bfloat16), bp


def _pack_deconv(w, b):
    """PyTorch ConvTranspose2d weight (Cin, Cout, 3, 3) -> equivalent 2x2
    forward conv with 4 output phase groups (sub-pixel decomposition of
    stride=2, padding=1, output_padding=1)."""
    cin, cout, kh, kw = w.shape
    assert (kh, kw) == (3, 3)
    gp = _round_up(cout, _LANE)
    kp = _round_up(4 * cin, _LANE)
    w4 = jnp.zeros((kp, 4 * gp), jnp.float32)
    # (tap_di, tap_dj, phase g = 2r+s, kernel_ki, kernel_kj); output pixel
    # (2m+r, 2n+s) reads input (m+tap_di, n+tap_dj) with W[:, :, ki, kj].
    entries = [
        (0, 0, 0, 1, 1),
        (0, 0, 1, 1, 2), (0, 1, 1, 1, 0),
        (0, 0, 2, 2, 1), (1, 0, 2, 0, 1),
        (0, 0, 3, 2, 2), (0, 1, 3, 2, 0), (1, 0, 3, 0, 2), (1, 1, 3, 0, 0),
    ]
    for di, dj, g, ki, kj in entries:
        t = di * 2 + dj
        w4 = w4.at[t * cin:(t + 1) * cin, g * gp:g * gp + cout].set(w[:, :, ki, kj])
    bp = jnp.zeros((1, 4 * gp), jnp.float32)
    for g in range(4):
        bp = bp.at[0, g * gp:g * gp + cout].set(b)
    return w4.astype(jnp.bfloat16), bp


def init_generator_params(key, img_channels=3, num_features=8, num_residuals=2):
    """Raw PyTorch-layout float32 parameters (also consumed by the reference)."""
    nf = num_features
    keys = iter(jax.random.split(key, 6 + 2 * num_residuals))
    raw = {
        "img_channels": img_channels,
        "num_features": nf,
        "initial": _init_conv_pt(next(keys), nf, img_channels, 7),
        "down1": _init_conv_pt(next(keys), 2 * nf, nf, 3),
        "down2": _init_conv_pt(next(keys), 4 * nf, 2 * nf, 3),
        "res": [(_init_conv_pt(next(keys), 4 * nf, 4 * nf, 3),
                 _init_conv_pt(next(keys), 4 * nf, 4 * nf, 3))
                for _ in range(num_residuals)],
    }
    raw["up1"] = _init_deconv_pt(next(keys), 4 * nf, 2 * nf, 3)
    raw["up2"] = _init_deconv_pt(next(keys), 2 * nf, nf, 3)
    raw["final"] = _init_conv_pt(next(keys), img_channels, nf, 7)
    return raw


def pack_generator_params(raw):
    """Pallas-ready packed parameters (bf16 packed-K weights, f32 bias rows)."""
    return {
        "img_channels": raw["img_channels"],
        "num_features": raw["num_features"],
        "initial": _pack_conv(*raw["initial"]),
        "down1": _pack_conv(*raw["down1"]),
        "down2": _pack_conv(*raw["down2"]),
        "res": [(_pack_conv(*c1), _pack_conv(*c2)) for c1, c2 in raw["res"]],
        "up1": _pack_deconv(*raw["up1"]),
        "up2": _pack_deconv(*raw["up2"]),
        "final": _pack_conv(*raw["final"]),
    }


# ----------------------------------------------------------------------------
# Generator forward (NCHW in / NCHW out, matching the PyTorch module)
# ----------------------------------------------------------------------------
def generator_forward(params, x_nchw):
    nf = params["num_features"]
    ic = params["img_channels"]
    x = jnp.transpose(x_nchw, (0, 2, 3, 1)).astype(jnp.bfloat16)   # NHWC bf16

    # initial: 7x7 reflect conv -> IN -> ReLU
    h = _conv_layer(x, params["initial"], kh=7, kw=7, stride=1,
                    pad=((3, 3), (3, 3)))
    # down1 / down2: 3x3 stride-2 reflect conv -> IN -> ReLU
    h = _conv_layer(h[..., :nf], params["down1"], kh=3, kw=3, stride=2,
                    pad=((1, 1), (1, 1)))
    h = _conv_layer(h[..., :2 * nf], params["down2"], kh=3, kw=3, stride=2,
                    pad=((1, 1), (1, 1)))

    # residual blocks: (conv-IN-ReLU, conv-IN) + skip; skip fused into kernel 2
    for layer1, layer2 in params["res"]:
        y = _conv_layer(h[..., :4 * nf], layer1, kh=3, kw=3, stride=1,
                        pad=((1, 1), (1, 1)))
        h = _conv_layer(y[..., :4 * nf], layer2, kh=3, kw=3, stride=1,
                        pad=((1, 1), (1, 1)), relu=False, residual=h)

    # up1 / up2: ConvTranspose2d(s=2) -> IN -> ReLU (sub-pixel decomposition)
    h = _upconv_layer(h[..., :4 * nf], params["up1"])
    h = _upconv_layer(h[..., :2 * nf], params["up2"])

    # final: 7x7 reflect conv -> tanh (fused); no IN so the rows are tiled for
    # pipeline depth / megacore sharding.
    h = _conv_layer(h[..., :nf], params["final"], kh=7, kw=7, stride=1,
                    pad=((3, 3), (3, 3)), use_in=False, relu=False,
                    use_tanh=True, out_dtype=jnp.float32, m_tile=64)

    return jnp.transpose(h[..., :ic], (0, 3, 1, 2))                # NCHW


# ----------------------------------------------------------------------------
# Pure-JAX reference (lax.conv) mirroring the kernels' bf16/f32 dtype pipeline
# ----------------------------------------------------------------------------
def _ref_conv(x, w, b, *, stride=1, pad=0):
    wb = jnp.transpose(w.astype(jnp.bfloat16), (2, 3, 1, 0))       # HWIO
    if pad:
        x = jnp.pad(x, ((0, 0), (pad, pad), (pad, pad), (0, 0)), mode="reflect")
    y = lax.conv_general_dilated(
        x, wb, window_strides=(stride, stride), padding="VALID",
        dimension_numbers=("NHWC", "HWIO", "NHWC"),
        preferred_element_type=jnp.float32)
    return y + b.reshape(1, 1, 1, -1)


def _ref_deconv(x, w, b):
    # ConvTranspose2d(k=3, s=2, p=1, output_padding=1) == conv of the 2x-dilated
    # input padded (1, 2) per side with the spatially flipped kernel.
    wb = jnp.transpose(jnp.flip(w.astype(jnp.bfloat16), axis=(2, 3)), (2, 3, 0, 1))
    y = lax.conv_general_dilated(
        x, wb, window_strides=(1, 1), padding=((1, 2), (1, 2)),
        lhs_dilation=(2, 2), dimension_numbers=("NHWC", "HWIO", "NHWC"),
        preferred_element_type=jnp.float32)
    return y + b.reshape(1, 1, 1, -1)


def _ref_instance_norm(y, eps=1e-5):
    mean = jnp.mean(y, axis=(1, 2), keepdims=True)
    var = jnp.var(y, axis=(1, 2), keepdims=True)
    return (y - mean) * lax.rsqrt(var + eps)


def reference_forward(raw, x_nchw):
    x = jnp.transpose(x_nchw, (0, 2, 3, 1)).astype(jnp.bfloat16)

    def conv_block(x, wb, *, stride, pad, act=True):
        y = _ref_instance_norm(_ref_conv(x, *wb, stride=stride, pad=pad))
        if act:
            y = jnp.maximum(y, 0.0)
        return y.astype(jnp.bfloat16)

    h = conv_block(x, raw["initial"], stride=1, pad=3)
    h = conv_block(h, raw["down1"], stride=2, pad=1)
    h = conv_block(h, raw["down2"], stride=2, pad=1)
    for c1, c2 in raw["res"]:
        y = conv_block(h, c1, stride=1, pad=1)
        z = _ref_instance_norm(_ref_conv(y, *c2, stride=1, pad=1))
        h = (z + h.astype(jnp.float32)).astype(jnp.bfloat16)
    for name in ("up1", "up2"):
        y = _ref_instance_norm(_ref_deconv(h, *raw[name]))
        h = jnp.maximum(y, 0.0).astype(jnp.bfloat16)
    y = jnp.tanh(_ref_conv(h, *raw["final"], stride=1, pad=3))
    return jnp.transpose(y, (0, 3, 1, 2))


# ----------------------------------------------------------------------------
if __name__ == "__main__":
    key = jax.random.PRNGKey(0)
    k_param, k_x = jax.random.split(key)

    # Small shapes consistent with the module: batch=2, img_channels=3,
    # 16x16 images, num_features=8, num_residuals=2.
    B, C, H, W = 2, 3, 16, 16
    raw_params = init_generator_params(
        k_param, img_channels=C, num_features=8, num_residuals=2)
    params = pack_generator_params(raw_params)

    x_nchw = jax.random.normal(k_x, (B, C, H, W), jnp.float32)     # PyTorch layout

    fwd = jax.jit(functools.partial(generator_forward, params))
    out = fwd(x_nchw)
    jax.block_until_ready(out)

    assert out.shape == (B, C, H, W)
    assert bool(jnp.all(jnp.isfinite(out)))
    assert bool(jnp.all(jnp.abs(out) <= 1.0))   # tanh range

    # Numerical check against a pure-JAX lax.conv reference that mirrors the
    # bf16/f32 dtype pipeline (review correctness concern: validate the packed
    # taps, sub-pixel deconv mapping, stride-2 windows and IN statistics).
    ref = jax.jit(functools.partial(reference_forward, raw_params))(x_nchw)
    jax.block_until_ready(ref)
    max_err = float(jnp.max(jnp.abs(out - ref)))
    assert max_err < 3e-2, f"mismatch vs lax.conv reference: max_err={max_err}"

    print("KERNEL_OK")
</pallas_src>

<mosaic_0001>
module attributes {stable_mosaic.version = 11 : i64} {
  func.func @_fused_gemm_kernel(%arg0: i32, %arg1: i32, %arg2: memref<1x256x256xbf16, #tpu.memory_space<vmem>>, %arg3: memref<256x128xbf16, #tpu.memory_space<vmem>>, %arg4: memref<1x128xf32, #tpu.memory_space<vmem>>, %arg5: memref<1x256x128xbf16, #tpu.memory_space<vmem>>) attributes {dimension_semantics = [#tpu.dimension_semantics<parallel>, #tpu.dimension_semantics<parallel>], iteration_bounds = array<i64: 2, 1>, scalar_prefetch = 0 : i64, scratch_operands = 0 : i64, tpu.core_type = #tpu.core_type<tc>, window_params = [{transform_indices = @transform_0, window_bounds = array<i64: 1, 256, 256>}, {pipeline_mode = #tpu.pipeline_mode<synchronous>, transform_indices = @transform_1, window_bounds = array<i64: 256, 128>}, {pipeline_mode = #tpu.pipeline_mode<synchronous>, transform_indices = @transform_2, window_bounds = array<i64: 1, 128>}, {transform_indices = @transform_3, window_bounds = array<i64: 1, 256, 128>}]} {
    %c0 = arith.constant 0 : index
    %c0_0 = arith.constant 0 : index
    %c0_1 = arith.constant 0 : index
    %0 = vector.load %arg2[%c0, %c0_0, %c0_1] : memref<1x256x256xbf16, #tpu.memory_space<vmem>>, vector<1x256x256xbf16>
    %1 = vector.shape_cast %0 : vector<1x256x256xbf16> to vector<256x256xbf16>
    %c0_2 = arith.constant 0 : index
    %c0_3 = arith.constant 0 : index
    %2 = vector.load %arg3[%c0_2, %c0_3] : memref<256x128xbf16, #tpu.memory_space<vmem>>, vector<256x128xbf16>
    %cst = arith.constant dense<0.000000e+00> : vector<256x128xf32>
    %3 = tpu.matmul %1, %2, %cst {dimension_numbers = #tpu.dot_dimension_numbers<[1], [0], [0], [1], [0, 0, 1, 1], [], []>} : vector<256x256xbf16>, vector<256x128xbf16>, vector<256x128xf32> -> vector<256x128xf32>
    %c0_4 = arith.constant 0 : index
    %c0_5 = arith.constant 0 : index
    %4 = vector.load %arg4[%c0_4, %c0_5] : memref<1x128xf32, #tpu.memory_space<vmem>>, vector<1x128xf32>
    %5 = vector.broadcast %4 : vector<1x128xf32> to vector<256x128xf32>
    %6 = arith.addf %3, %5 : vector<256x128xf32>
    %cst_6 = arith.constant dense<0.000000e+00> : vector<128xf32>
    %7 = vector.multi_reduction <add>, %6, %cst_6 [0] : vector<256x128xf32> to vector<128xf32>
    %8 = vector.shape_cast %7 : vector<128xf32> to vector<1x128xf32>
    %9 = arith.mulf %6, %6 : vector<256x128xf32>
    %cst_7 = arith.constant dense<0.000000e+00> : vector<128xf32>
    %10 = vector.multi_reduction <add>, %9, %cst_7 [0] : vector<256x128xf32> to vector<128xf32>
    %11 = vector.shape_cast %10 : vector<128xf32> to vector<1x128xf32>
    %cst_8 = arith.constant 3.906250e-03 : f32
    %12 = vector.broadcast %cst_8 : f32 to vector<1x128xf32>
    %13 = arith.mulf %8, %12 : vector<1x128xf32>
    %cst_9 = arith.constant 3.906250e-03 : f32
    %14 = vector.broadcast %cst_9 : f32 to vector<1x128xf32>
    %15 = arith.mulf %11, %14 : vector<1x128xf32>
    %16 = arith.mulf %13, %13 : vector<1x128xf32>
    %17 = arith.subf %15, %16 : vector<1x128xf32>
    %cst_10 = arith.constant 0.000000e+00 : f32
    %18 = vector.broadcast %cst_10 : f32 to vector<1x128xf32>
    %19 = arith.maximumf %17, %18 : vector<1x128xf32>
    %cst_11 = arith.constant 9.99999974E-6 : f32
    %20 = vector.broadcast %cst_11 : f32 to vector<1x128xf32>
    %21 = arith.addf %19, %20 : vector<1x128xf32>
    %22 = math.rsqrt %21 : vector<1x128xf32>
    %23 = vector.broadcast %13 : vector<1x128xf32> to vector<256x128xf32>
    %24 = arith.subf %6, %23 : vector<256x128xf32>
    %25 = vector.broadcast %22 : vector<1x128xf32> to vector<256x128xf32>
    %26 = arith.mulf %24, %25 : vector<256x128xf32>
    %cst_12 = arith.constant 0.000000e+00 : f32
    %27 = vector.broadcast %cst_12 : f32 to vector<256x128xf32>
    %28 = arith.maximumf %26, %27 : vector<256x128xf32>
    %29 = arith.truncf %28 : vector<256x128xf32> to vector<256x128xbf16>
    %c0_13 = arith.constant 0 : index
    %c0_14 = arith.constant 0 : index
    %c0_15 = arith.constant 0 : index
    %30 = vector.load %arg5[%c0_13, %c0_14, %c0_15] : memref<1x256x128xbf16, #tpu.memory_space<vmem>>, vector<1x256x128xbf16>
    %31 = vector.shape_cast %30 : vector<1x256x128xbf16> to vector<256x128xbf16>
    %32 = vector.shape_cast %29 : vector<256x128xbf16> to vector<1x256x128xbf16>
    tpu.vector_store %arg5[%c0_13, %c0_14, %c0_15], %32 {strides = array<i32>} : memref<1x256x128xbf16, #tpu.memory_space<vmem>>, vector<1x256x128xbf16>,
    return
  }
  func.func @transform_0(%arg0: i32, %arg1: i32) -> (i32, i32, i32) {
    %c0_i32 = arith.constant 0 : i32
    %c0_i32_0 = arith.constant 0 : i32
    return %arg0, %arg1, %c0_i32 : i32, i32, i32
  }
  func.func @transform_1(%arg0: i32, %arg1: i32) -> (i32, i32) {
    %c0_i32 = arith.constant 0 : i32
    %c0_i32_0 = arith.constant 0 : i32
    %c0_i32_1 = arith.constant 0 : i32
    return %c0_i32, %c0_i32_0 : i32, i32
  }
  func.func @transform_2(%arg0: i32, %arg1: i32) -> (i32, i32) {
    %c0_i32 = arith.constant 0 : i32
    %c0_i32_0 = arith.constant 0 : i32
    %c0_i32_1 = arith.constant 0 : i32
    return %c0_i32, %c0_i32_0 : i32, i32
  }
  func.func @transform_3(%arg0: i32, %arg1: i32) -> (i32, i32, i32) {
    %c0_i32 = arith.constant 0 : i32
    %c0_i32_0 = arith.constant 0 : i32
    return %arg0, %arg1, %c0_i32 : i32, i32, i32
  }
}

module attributes {stable_mosaic.version = 11 : i64} {
  func.func @_fused_gemm_kernel(%arg0: i32, %arg1: i32, %arg2: memref<1x64x128xbf16, #tpu.memory_space<vmem>>, %arg3: memref<128x128xbf16, #tpu.memory_space<vmem>>, %arg4: memref<1x128xf32, #tpu.memory_space<vmem>>, %arg5: memref<1x64x128xbf16, #tpu.memory_space<vmem>>) attributes {dimension_semantics = [#tpu.dimension_semantics<parallel>, #tpu.dimension_semantics<parallel>], iteration_bounds = array<i64: 2, 1>, scalar_prefetch = 0 : i64, scratch_operands = 0 : i64, tpu.core_type = #tpu.core_type<tc>, window_params = [{transform_indices = @transform_0, window_bounds = array<i64: 1, 64, 128>}, {pipeline_mode = #tpu.pipeline_mode<synchronous>, transform_indices = @transform_1, window_bounds = array<i64: 128, 128>}, {pipeline_mode = #tpu.pipeline_mode<synchronous>, transform_indices = @transform_2, window_bounds = array<i64: 1, 128>}, {transform_indices = @transform_3, window_bounds = array<i64: 1, 64, 128>}]} {
    %c0 = arith.constant 0 : index
    %c0_0 = arith.constant 0 : index
    %c0_1 = arith.constant 0 : index
    %0 = vector.load %arg2[%c0, %c0_0, %c0_1] : memref<1x64x128xbf16, #tpu.memory_space<vmem>>, vector<1x64x128xbf16>
    %1 = vector.shape_cast %0 : vector<1x64x128xbf16> to vector<64x128xbf16>
    %c0_2 = arith.constant 0 : index
    %c0_3 = arith.constant 0 : index
    %2 = vector.load %arg3[%c0_2, %c0_3] : memref<128x128xbf16, #tpu.memory_space<vmem>>, vector<128x128xbf16>
    %cst = arith.constant dense<0.000000e+00> : vector<64x128xf32>
    %3 = tpu.matmul %1, %2, %cst {dimension_numbers = #tpu.dot_dimension_numbers<[1], [0], [0], [1], [0, 0, 1, 1], [], []>} : vector<64x128xbf16>, vector<128x128xbf16>, vector<64x128xf32> -> vector<64x128xf32>
    %c0_4 = arith.constant 0 : index
    %c0_5 = arith.constant 0 : index
    %4 = vector.load %arg4[%c0_4, %c0_5] : memref<1x128xf32, #tpu.memory_space<vmem>>, vector<1x128xf32>
    %5 = vector.broadcast %4 : vector<1x128xf32> to vector<64x128xf32>
    %6 = arith.addf %3, %5 : vector<64x128xf32>
    %cst_6 = arith.constant dense<0.000000e+00> : vector<128xf32>
    %7 = vector.multi_reduction <add>, %6, %cst_6 [0] : vector<64x128xf32> to vector<128xf32>
    %8 = vector.shape_cast %7 : vector<128xf32> to vector<1x128xf32>
    %9 = arith.mulf %6, %6 : vector<64x128xf32>
    %cst_7 = arith.constant dense<0.000000e+00> : vector<128xf32>
    %10 = vector.multi_reduction <add>, %9, %cst_7 [0] : vector<64x128xf32> to vector<128xf32>
    %11 = vector.shape_cast %10 : vector<128xf32> to vector<1x128xf32>
    %cst_8 = arith.constant 1.562500e-02 : f32
    %12 = vector.broadcast %cst_8 : f32 to vector<1x128xf32>
    %13 = arith.mulf %8, %12 : vector<1x128xf32>
    %cst_9 = arith.constant 1.562500e-02 : f32
    %14 = vector.broadcast %cst_9 : f32 to vector<1x128xf32>
    %15 = arith.mulf %11, %14 : vector<1x128xf32>
    %16 = arith.mulf %13, %13 : vector<1x128xf32>
    %17 = arith.subf %15, %16 : vector<1x128xf32>
    %cst_10 = arith.constant 0.000000e+00 : f32
    %18 = vector.broadcast %cst_10 : f32 to vector<1x128xf32>
    %19 = arith.maximumf %17, %18 : vector<1x128xf32>
    %cst_11 = arith.constant 9.99999974E-6 : f32
    %20 = vector.broadcast %cst_11 : f32 to vector<1x128xf32>
    %21 = arith.addf %19, %20 : vector<1x128xf32>
    %22 = math.rsqrt %21 : vector<1x128xf32>
    %23 = vector.broadcast %13 : vector<1x128xf32> to vector<64x128xf32>
    %24 = arith.subf %6, %23 : vector<64x128xf32>
    %25 = vector.broadcast %22 : vector<1x128xf32> to vector<64x128xf32>
    %26 = arith.mulf %24, %25 : vector<64x128xf32>
    %cst_12 = arith.constant 0.000000e+00 : f32
    %27 = vector.broadcast %cst_12 : f32 to vector<64x128xf32>
    %28 = arith.maximumf %26, %27 : vector<64x128xf32>
    %29 = arith.truncf %28 : vector<64x128xf32> to vector<64x128xbf16>
    %c0_13 = arith.constant 0 : index
    %c0_14 = arith.constant 0 : index
    %c0_15 = arith.constant 0 : index
    %30 = vector.load %arg5[%c0_13, %c0_14, %c0_15] : memref<1x64x128xbf16, #tpu.memory_space<vmem>>, vector<1x64x128xbf16>
    %31 = vector.shape_cast %30 : vector<1x64x128xbf16> to vector<64x128xbf16>
    %32 = vector.shape_cast %29 : vector<64x128xbf16> to vector<1x64x128xbf16>
    tpu.vector_store %arg5[%c0_13, %c0_14, %c0_15], %32 {strides = array<i32>} : memref<1x64x128xbf16, #tpu.memory_space<vmem>>, vector<1x64x128xbf16>,
    return
  }
  func.func @transform_0(%arg0: i32, %arg1: i32) -> (i32, i32, i32) {
    %c0_i32 = arith.constant 0 : i32
    %c0_i32_0 = arith.constant 0 : i32
    return %arg0, %arg1, %c0_i32 : i32, i32, i32
  }
  func.func @transform_1(%arg0: i32, %arg1: i32) -> (i32, i32) {
    %c0_i32 = arith.constant 0 : i32
    %c0_i32_0 = arith.constant 0 : i32
    %c0_i32_1 = arith.constant 0 : i32
    return %c0_i32, %c0_i32_0 : i32, i32
  }
  func.func @transform_2(%arg0: i32, %arg1: i32) -> (i32, i32) {
    %c0_i32 = arith.constant 0 : i32
    %c0_i32_0 = arith.constant 0 : i32
    %c0_i32_1 = arith.constant 0 : i32
    return %c0_i32, %c0_i32_0 : i32, i32
  }
  func.func @transform_3(%arg0: i32, %arg1: i32) -> (i32, i32, i32) {
    %c0_i32 = arith.constant 0 : i32
    %c0_i32_0 = arith.constant 0 : i32
    return %arg0, %arg1, %c0_i32 : i32, i32, i32
  }
}

module attributes {stable_mosaic.version = 11 : i64} {
  func.func @_fused_gemm_kernel(%arg0: i32, %arg1: i32, %arg2: memref<1x16x256xbf16, #tpu.memory_space<vmem>>, %arg3: memref<256x128xbf16, #tpu.memory_space<vmem>>, %arg4: memref<1x128xf32, #tpu.memory_space<vmem>>, %arg5: memref<1x16x128xbf16, #tpu.memory_space<vmem>>) attributes {dimension_semantics = [#tpu.dimension_semantics<parallel>, #tpu.dimension_semantics<parallel>], iteration_bounds = array<i64: 2, 1>, scalar_prefetch = 0 : i64, scratch_operands = 0 : i64, tpu.core_type = #tpu.core_type<tc>, window_params = [{transform_indices = @transform_0, window_bounds = array<i64: 1, 16, 256>}, {pipeline_mode = #tpu.pipeline_mode<synchronous>, transform_indices = @transform_1, window_bounds = array<i64: 256, 128>}, {pipeline_mode = #tpu.pipeline_mode<synchronous>, transform_indices = @transform_2, window_bounds = array<i64: 1, 128>}, {transform_indices = @transform_3, window_bounds = array<i64: 1, 16, 128>}]} {
    %c0 = arith.constant 0 : index
    %c0_0 = arith.constant 0 : index
    %c0_1 = arith.constant 0 : index
    %0 = vector.load %arg2[%c0, %c0_0, %c0_1] : memref<1x16x256xbf16, #tpu.memory_space<vmem>>, vector<1x16x256xbf16>
    %1 = vector.shape_cast %0 : vector<1x16x256xbf16> to vector<16x256xbf16>
    %c0_2 = arith.constant 0 : index
    %c0_3 = arith.constant 0 : index
    %2 = vector.load %arg3[%c0_2, %c0_3] : memref<256x128xbf16, #tpu.memory_space<vmem>>, vector<256x128xbf16>
    %cst = arith.constant dense<0.000000e+00> : vector<16x128xf32>
    %3 = tpu.matmul %1, %2, %cst {dimension_numbers = #tpu.dot_dimension_numbers<[1], [0], [0], [1], [0, 0, 1, 1], [], []>} : vector<16x256xbf16>, vector<256x128xbf16>, vector<16x128xf32> -> vector<16x128xf32>
    %c0_4 = arith.constant 0 : index
    %c0_5 = arith.constant 0 : index
    %4 = vector.load %arg4[%c0_4, %c0_5] : memref<1x128xf32, #tpu.memory_space<vmem>>, vector<1x128xf32>
    %5 = vector.broadcast %4 : vector<1x128xf32> to vector<16x128xf32>
    %6 = arith.addf %3, %5 : vector<16x128xf32>
    %cst_6 = arith.constant dense<0.000000e+00> : vector<128xf32>
    %7 = vector.multi_reduction <add>, %6, %cst_6 [0] : vector<16x128xf32> to vector<128xf32>
    %8 = vector.shape_cast %7 : vector<128xf32> to vector<1x128xf32>
    %9 = arith.mulf %6, %6 : vector<16x128xf32>
    %cst_7 = arith.constant dense<0.000000e+00> : vector<128xf32>
    %10 = vector.multi_reduction <add>, %9, %cst_7 [0] : vector<16x128xf32> to vector<128xf32>
    %11 = vector.shape_cast %10 : vector<128xf32> to vector<1x128xf32>
    %cst_8 = arith.constant 6.250000e-02 : f32
    %12 = vector.broadcast %cst_8 : f32 to vector<1x128xf32>
    %13 = arith.mulf %8, %12 : vector<1x128xf32>
    %cst_9 = arith.constant 6.250000e-02 : f32
    %14 = vector.broadcast %cst_9 : f32 to vector<1x128xf32>
    %15 = arith.mulf %11, %14 : vector<1x128xf32>
    %16 = arith.mulf %13, %13 : vector<1x128xf32>
    %17 = arith.subf %15, %16 : vector<1x128xf32>
    %cst_10 = arith.constant 0.000000e+00 : f32
    %18 = vector.broadcast %cst_10 : f32 to vector<1x128xf32>
    %19 = arith.maximumf %17, %18 : vector<1x128xf32>
    %cst_11 = arith.constant 9.99999974E-6 : f32
    %20 = vector.broadcast %cst_11 : f32 to vector<1x128xf32>
    %21 = arith.addf %19, %20 : vector<1x128xf32>
    %22 = math.rsqrt %21 : vector<1x128xf32>
    %23 = vector.broadcast %13 : vector<1x128xf32> to vector<16x128xf32>
    %24 = arith.subf %6, %23 : vector<16x128xf32>
    %25 = vector.broadcast %22 : vector<1x128xf32> to vector<16x128xf32>
    %26 = arith.mulf %24, %25 : vector<16x128xf32>
    %cst_12 = arith.constant 0.000000e+00 : f32
    %27 = vector.broadcast %cst_12 : f32 to vector<16x128xf32>
    %28 = arith.maximumf %26, %27 : vector<16x128xf32>
    %29 = arith.truncf %28 : vector<16x128xf32> to vector<16x128xbf16>
    %c0_13 = arith.constant 0 : index
    %c0_14 = arith.constant 0 : index
    %c0_15 = arith.constant 0 : index
    %30 = vector.load %arg5[%c0_13, %c0_14, %c0_15] : memref<1x16x128xbf16, #tpu.memory_space<vmem>>, vector<1x16x128xbf16>
    %31 = vector.shape_cast %30 : vector<1x16x128xbf16> to vector<16x128xbf16>
    %32 = vector.shape_cast %29 : vector<16x128xbf16> to vector<1x16x128xbf16>
    tpu.vector_store %arg5[%c0_13, %c0_14, %c0_15], %32 {strides = array<i32>} : memref<1x16x128xbf16, #tpu.memory_space<vmem>>, vector<1x16x128xbf16>,
    return
  }
  func.func @transform_0(%arg0: i32, %arg1: i32) -> (i32, i32, i32) {
    %c0_i32 = arith.constant 0 : i32
    %c0_i32_0 = arith.constant 0 : i32
    return %arg0, %arg1, %c0_i32 : i32, i32, i32
  }
  func.func @transform_1(%arg0: i32, %arg1: i32) -> (i32, i32) {
    %c0_i32 = arith.constant 0 : i32
    %c0_i32_0 = arith.constant 0 : i32
    %c0_i32_1 = arith.constant 0 : i32
    return %c0_i32, %c0_i32_0 : i32, i32
  }
  func.func @transform_2(%arg0: i32, %arg1: i32) -> (i32, i32) {
    %c0_i32 = arith.constant 0 : i32
    %c0_i32_0 = arith.constant 0 : i32
    %c0_i32_1 = arith.constant 0 : i32
    return %c0_i32, %c0_i32_0 : i32, i32
  }
  func.func @transform_3(%arg0: i32, %arg1: i32) -> (i32, i32, i32) {
    %c0_i32 = arith.constant 0 : i32
    %c0_i32_0 = arith.constant 0 : i32
    return %arg0, %arg1, %c0_i32 : i32, i32, i32
  }
}

module attributes {stable_mosaic.version = 11 : i64} {
  func.func @_fused_gemm_kernel(%arg0: i32, %arg1: i32, %arg2: memref<1x16x384xbf16, #tpu.memory_space<vmem>>, %arg3: memref<384x128xbf16, #tpu.memory_space<vmem>>, %arg4: memref<1x128xf32, #tpu.memory_space<vmem>>, %arg5: memref<1x16x128xbf16, #tpu.memory_space<vmem>>) attributes {dimension_semantics = [#tpu.dimension_semantics<parallel>, #tpu.dimension_semantics<parallel>], iteration_bounds = array<i64: 2, 1>, scalar_prefetch = 0 : i64, scratch_operands = 0 : i64, tpu.core_type = #tpu.core_type<tc>, window_params = [{transform_indices = @transform_0, window_bounds = array<i64: 1, 16, 384>}, {pipeline_mode = #tpu.pipeline_mode<synchronous>, transform_indices = @transform_1, window_bounds = array<i64: 384, 128>}, {pipeline_mode = #tpu.pipeline_mode<synchronous>, transform_indices = @transform_2, window_bounds = array<i64: 1, 128>}, {transform_indices = @transform_3, window_bounds = array<i64: 1, 16, 128>}]} {
    %c0 = arith.constant 0 : index
    %c0_0 = arith.constant 0 : index
    %c0_1 = arith.constant 0 : index
    %0 = vector.load %arg2[%c0, %c0_0, %c0_1] : memref<1x16x384xbf16, #tpu.memory_space<vmem>>, vector<1x16x384xbf16>
    %1 = vector.shape_cast %0 : vector<1x16x384xbf16> to vector<16x384xbf16>
    %c0_2 = arith.constant 0 : index
    %c0_3 = arith.constant 0 : index
    %2 = vector.load %arg3[%c0_2, %c0_3] : memref<384x128xbf16, #tpu.memory_space<vmem>>, vector<384x128xbf16>
    %cst = arith.constant dense<0.000000e+00> : vector<16x128xf32>
    %3 = tpu.matmul %1, %2, %cst {dimension_numbers = #tpu.dot_dimension_numbers<[1], [0], [0], [1], [0, 0, 1, 1], [], []>} : vector<16x384xbf16>, vector<384x128xbf16>, vector<16x128xf32> -> vector<16x128xf32>
    %c0_4 = arith.constant 0 : index
    %c0_5 = arith.constant 0 : index
    %4 = vector.load %arg4[%c0_4, %c0_5] : memref<1x128xf32, #tpu.memory_space<vmem>>, vector<1x128xf32>
    %5 = vector.broadcast %4 : vector<1x128xf32> to vector<16x128xf32>
    %6 = arith.addf %3, %5 : vector<16x128xf32>
    %cst_6 = arith.constant dense<0.000000e+00> : vector<128xf32>
    %7 = vector.multi_reduction <add>, %6, %cst_6 [0] : vector<16x128xf32> to vector<128xf32>
    %8 = vector.shape_cast %7 : vector<128xf32> to vector<1x128xf32>
    %9 = arith.mulf %6, %6 : vector<16x128xf32>
    %cst_7 = arith.constant dense<0.000000e+00> : vector<128xf32>
    %10 = vector.multi_reduction <add>, %9, %cst_7 [0] : vector<16x128xf32> to vector<128xf32>
    %11 = vector.shape_cast %10 : vector<128xf32> to vector<1x128xf32>
    %cst_8 = arith.constant 6.250000e-02 : f32
    %12 = vector.broadcast %cst_8 : f32 to vector<1x128xf32>
    %13 = arith.mulf %8, %12 : vector<1x128xf32>
    %cst_9 = arith.constant 6.250000e-02 : f32
    %14 = vector.broadcast %cst_9 : f32 to vector<1x128xf32>
    %15 = arith.mulf %11, %14 : vector<1x128xf32>
    %16 = arith.mulf %13, %13 : vector<1x128xf32>
    %17 = arith.subf %15, %16 : vector<1x128xf32>
    %cst_10 = arith.constant 0.000000e+00 : f32
    %18 = vector.broadcast %cst_10 : f32 to vector<1x128xf32>
    %19 = arith.maximumf %17, %18 : vector<1x128xf32>
    %cst_11 = arith.constant 9.99999974E-6 : f32
    %20 = vector.broadcast %cst_11 : f32 to vector<1x128xf32>
    %21 = arith.addf %19, %20 : vector<1x128xf32>
    %22 = math.rsqrt %21 : vector<1x128xf32>
    %23 = vector.broadcast %13 : vector<1x128xf32> to vector<16x128xf32>
    %24 = arith.subf %6, %23 : vector<16x128xf32>
    %25 = vector.broadcast %22 : vector<1x128xf32> to vector<16x128xf32>
    %26 = arith.mulf %24, %25 : vector<16x128xf32>
    %cst_12 = arith.constant 0.000000e+00 : f32
    %27 = vector.broadcast %cst_12 : f32 to vector<16x128xf32>
    %28 = arith.maximumf %26, %27 : vector<16x128xf32>
    %29 = arith.truncf %28 : vector<16x128xf32> to vector<16x128xbf16>
    %c0_13 = arith.constant 0 : index
    %c0_14 = arith.constant 0 : index
    %c0_15 = arith.constant 0 : index
    %30 = vector.load %arg5[%c0_13, %c0_14, %c0_15] : memref<1x16x128xbf16, #tpu.memory_space<vmem>>, vector<1x16x128xbf16>
    %31 = vector.shape_cast %30 : vector<1x16x128xbf16> to vector<16x128xbf16>
    %32 = vector.shape_cast %29 : vector<16x128xbf16> to vector<1x16x128xbf16>
    tpu.vector_store %arg5[%c0_13, %c0_14, %c0_15], %32 {strides = array<i32>} : memref<1x16x128xbf16, #tpu.memory_space<vmem>>, vector<1x16x128xbf16>,
    return
  }
  func.func @transform_0(%arg0: i32, %arg1: i32) -> (i32, i32, i32) {
    %c0_i32 = arith.constant 0 : i32
    %c0_i32_0 = arith.constant 0 : i32
    return %arg0, %arg1, %c0_i32 : i32, i32, i32
  }
  func.func @transform_1(%arg0: i32, %arg1: i32) -> (i32, i32) {
    %c0_i32 = arith.constant 0 : i32
    %c0_i32_0 = arith.constant 0 : i32
    %c0_i32_1 = arith.constant 0 : i32
    return %c0_i32, %c0_i32_0 : i32, i32
  }
  func.func @transform_2(%arg0: i32, %arg1: i32) -> (i32, i32) {
    %c0_i32 = arith.constant 0 : i32
    %c0_i32_0 = arith.constant 0 : i32
    %c0_i32_1 = arith.constant 0 : i32
    return %c0_i32, %c0_i32_0 : i32, i32
  }
  func.func @transform_3(%arg0: i32, %arg1: i32) -> (i32, i32, i32) {
    %c0_i32 = arith.constant 0 : i32
    %c0_i32_0 = arith.constant 0 : i32
    return %arg0, %arg1, %c0_i32 : i32, i32, i32
  }
}

module attributes {stable_mosaic.version = 11 : i64} {
  func.func @_fused_gemm_kernel(%arg0: i32, %arg1: i32, %arg2: memref<1x16x384xbf16, #tpu.memory_space<vmem>>, %arg3: memref<384x128xbf16, #tpu.memory_space<vmem>>, %arg4: memref<1x128xf32, #tpu.memory_space<vmem>>, %arg5: memref<1x16x128xbf16, #tpu.memory_space<vmem>>, %arg6: memref<1x16x128xbf16, #tpu.memory_space<vmem>>) attributes {dimension_semantics = [#tpu.dimension_semantics<parallel>, #tpu.dimension_semantics<parallel>], iteration_bounds = array<i64: 2, 1>, scalar_prefetch = 0 : i64, scratch_operands = 0 : i64, tpu.core_type = #tpu.core_type<tc>, window_params = [{transform_indices = @transform_0, window_bounds = array<i64: 1, 16, 384>}, {pipeline_mode = #tpu.pipeline_mode<synchronous>, transform_indices = @transform_1, window_bounds = array<i64: 384, 128>}, {pipeline_mode = #tpu.pipeline_mode<synchronous>, transform_indices = @transform_2, window_bounds = array<i64: 1, 128>}, {transform_indices = @transform_3, window_bounds = array<i64: 1, 16, 128>}, {transform_indices = @transform_4, window_bounds = array<i64: 1, 16, 128>}]} {
    %c0 = arith.constant 0 : index
    %c0_0 = arith.constant 0 : index
    %c0_1 = arith.constant 0 : index
    %0 = vector.load %arg2[%c0, %c0_0, %c0_1] : memref<1x16x384xbf16, #tpu.memory_space<vmem>>, vector<1x16x384xbf16>
    %1 = vector.shape_cast %0 : vector<1x16x384xbf16> to vector<16x384xbf16>
    %c0_2 = arith.constant 0 : index
    %c0_3 = arith.constant 0 : index
    %2 = vector.load %arg3[%c0_2, %c0_3] : memref<384x128xbf16, #tpu.memory_space<vmem>>, vector<384x128xbf16>
    %cst = arith.constant dense<0.000000e+00> : vector<16x128xf32>
    %3 = tpu.matmul %1, %2, %cst {dimension_numbers = #tpu.dot_dimension_numbers<[1], [0], [0], [1], [0, 0, 1, 1], [], []>} : vector<16x384xbf16>, vector<384x128xbf16>, vector<16x128xf32> -> vector<16x128xf32>
    %c0_4 = arith.constant 0 : index
    %c0_5 = arith.constant 0 : index
    %4 = vector.load %arg4[%c0_4, %c0_5] : memref<1x128xf32, #tpu.memory_space<vmem>>, vector<1x128xf32>
    %5 = vector.broadcast %4 : vector<1x128xf32> to vector<16x128xf32>
    %6 = arith.addf %3, %5 : vector<16x128xf32>
    %cst_6 = arith.constant dense<0.000000e+00> : vector<128xf32>
    %7 = vector.multi_reduction <add>, %6, %cst_6 [0] : vector<16x128xf32> to vector<128xf32>
    %8 = vector.shape_cast %7 : vector<128xf32> to vector<1x128xf32>
    %9 = arith.mulf %6, %6 : vector<16x128xf32>
    %cst_7 = arith.constant dense<0.000000e+00> : vector<128xf32>
    %10 = vector.multi_reduction <add>, %9, %cst_7 [0] : vector<16x128xf32> to vector<128xf32>
    %11 = vector.shape_cast %10 : vector<128xf32> to vector<1x128xf32>
    %cst_8 = arith.constant 6.250000e-02 : f32
    %12 = vector.broadcast %cst_8 : f32 to vector<1x128xf32>
    %13 = arith.mulf %8, %12 : vector<1x128xf32>
    %cst_9 = arith.constant 6.250000e-02 : f32
    %14 = vector.broadcast %cst_9 : f32 to vector<1x128xf32>
    %15 = arith.mulf %11, %14 : vector<1x128xf32>
    %16 = arith.mulf %13, %13 : vector<1x128xf32>
    %17 = arith.subf %15, %16 : vector<1x128xf32>
    %cst_10 = arith.constant 0.000000e+00 : f32
    %18 = vector.broadcast %cst_10 : f32 to vector<1x128xf32>
    %19 = arith.maximumf %17, %18 : vector<1x128xf32>
    %cst_11 = arith.constant 9.99999974E-6 : f32
    %20 = vector.broadcast %cst_11 : f32 to vector<1x128xf32>
    %21 = arith.addf %19, %20 : vector<1x128xf32>
    %22 = math.rsqrt %21 : vector<1x128xf32>
    %23 = vector.broadcast %13 : vector<1x128xf32> to vector<16x128xf32>
    %24 = arith.subf %6, %23 : vector<16x128xf32>
    %25 = vector.broadcast %22 : vector<1x128xf32> to vector<16x128xf32>
    %26 = arith.mulf %24, %25 : vector<16x128xf32>
    %c0_12 = arith.constant 0 : index
    %c0_13 = arith.constant 0 : index
    %c0_14 = arith.constant 0 : index
    %27 = vector.load %arg5[%c0_12, %c0_13, %c0_14] : memref<1x16x128xbf16, #tpu.memory_space<vmem>>, vector<1x16x128xbf16>
    %28 = vector.shape_cast %27 : vector<1x16x128xbf16> to vector<16x128xbf16>
    %29 = arith.extf %28 : vector<16x128xbf16> to vector<16x128xf32>
    %30 = arith.addf %26, %29 : vector<16x128xf32>
    %31 = arith.truncf %30 : vector<16x128xf32> to vector<16x128xbf16>
    %c0_15 = arith.constant 0 : index
    %c0_16 = arith.constant 0 : index
    %c0_17 = arith.constant 0 : index
    %32 = vector.load %arg6[%c0_15, %c0_16, %c0_17] : memref<1x16x128xbf16, #tpu.memory_space<vmem>>, vector<1x16x128xbf16>
    %33 = vector.shape_cast %32 : vector<1x16x128xbf16> to vector<16x128xbf16>
    %34 = vector.shape_cast %31 : vector<16x128xbf16> to vector<1x16x128xbf16>
    tpu.vector_store %arg6[%c0_15, %c0_16, %c0_17], %34 {strides = array<i32>} : memref<1x16x128xbf16, #tpu.memory_space<vmem>>, vector<1x16x128xbf16>,
    return
  }
  func.func @transform_0(%arg0: i32, %arg1: i32) -> (i32, i32, i32) {
    %c0_i32 = arith.constant 0 : i32
    %c0_i32_0 = arith.constant 0 : i32
    return %arg0, %arg1, %c0_i32 : i32, i32, i32
  }
  func.func @transform_1(%arg0: i32, %arg1: i32) -> (i32, i32) {
    %c0_i32 = arith.constant 0 : i32
    %c0_i32_0 = arith.constant 0 : i32
    %c0_i32_1 = arith.constant 0 : i32
    return %c0_i32, %c0_i32_0 : i32, i32
  }
  func.func @transform_2(%arg0: i32, %arg1: i32) -> (i32, i32) {
    %c0_i32 = arith.constant 0 : i32
    %c0_i32_0 = arith.constant 0 : i32
    %c0_i32_1 = arith.constant 0 : i32
    return %c0_i32, %c0_i32_0 : i32, i32
  }
  func.func @transform_3(%arg0: i32, %arg1: i32) -> (i32, i32, i32) {
    %c0_i32 = arith.constant 0 : i32
    %c0_i32_0 = arith.constant 0 : i32
    return %arg0, %arg1, %c0_i32 : i32, i32, i32
  }
  func.func @transform_4(%arg0: i32, %arg1: i32) -> (i32, i32, i32) {
    %c0_i32 = arith.constant 0 : i32
    %c0_i32_0 = arith.constant 0 : i32
    return %arg0, %arg1, %c0_i32 : i32, i32, i32
  }
}

module attributes {stable_mosaic.version = 11 : i64} {
  func.func @_fused_gemm_kernel(%arg0: i32, %arg1: i32, %arg2: memref<1x16x128xbf16, #tpu.memory_space<vmem>>, %arg3: memref<128x512xbf16, #tpu.memory_space<vmem>>, %arg4: memref<1x512xf32, #tpu.memory_space<vmem>>, %arg5: memref<1x16x512xbf16, #tpu.memory_space<vmem>>) attributes {dimension_semantics = [#tpu.dimension_semantics<parallel>, #tpu.dimension_semantics<parallel>], iteration_bounds = array<i64: 2, 1>, scalar_prefetch = 0 : i64, scratch_operands = 0 : i64, tpu.core_type = #tpu.core_type<tc>, window_params = [{transform_indices = @transform_0, window_bounds = array<i64: 1, 16, 128>}, {pipeline_mode = #tpu.pipeline_mode<synchronous>, transform_indices = @transform_1, window_bounds = array<i64: 128, 512>}, {pipeline_mode = #tpu.pipeline_mode<synchronous>, transform_indices = @transform_2, window_bounds = array<i64: 1, 512>}, {transform_indices = @transform_3, window_bounds = array<i64: 1, 16, 512>}]} {
    %c0 = arith.constant 0 : index
    %c0_0 = arith.constant 0 : index
    %c0_1 = arith.constant 0 : index
    %0 = vector.load %arg2[%c0, %c0_0, %c0_1] : memref<1x16x128xbf16, #tpu.memory_space<vmem>>, vector<1x16x128xbf16>
    %1 = vector.shape_cast %0 : vector<1x16x128xbf16> to vector<16x128xbf16>
    %c0_2 = arith.constant 0 : index
    %c0_3 = arith.constant 0 : index
    %2 = vector.load %arg3[%c0_2, %c0_3] : memref<128x512xbf16, #tpu.memory_space<vmem>>, vector<128x512xbf16>
    %cst = arith.constant dense<0.000000e+00> : vector<16x512xf32>
    %3 = tpu.matmul %1, %2, %cst {dimension_numbers = #tpu.dot_dimension_numbers<[1], [0], [0], [1], [0, 0, 1, 1], [], []>} : vector<16x128xbf16>, vector<128x512xbf16>, vector<16x512xf32> -> vector<16x512xf32>
    %c0_4 = arith.constant 0 : index
    %c0_5 = arith.constant 0 : index
    %4 = vector.load %arg4[%c0_4, %c0_5] : memref<1x512xf32, #tpu.memory_space<vmem>>, vector<1x512xf32>
    %5 = vector.broadcast %4 : vector<1x512xf32> to vector<16x512xf32>
    %6 = arith.addf %3, %5 : vector<16x512xf32>
    %cst_6 = arith.constant dense<0.000000e+00> : vector<512xf32>
    %7 = vector.multi_reduction <add>, %6, %cst_6 [0] : vector<16x512xf32> to vector<512xf32>
    %8 = vector.shape_cast %7 : vector<512xf32> to vector<1x512xf32>
    %9 = arith.mulf %6, %6 : vector<16x512xf32>
    %cst_7 = arith.constant dense<0.000000e+00> : vector<512xf32>
    %10 = vector.multi_reduction <add>, %9, %cst_7 [0] : vector<16x512xf32> to vector<512xf32>
    %11 = vector.shape_cast %10 : vector<512xf32> to vector<1x512xf32>
    %12 = vector.extract_strided_slice %8 {offsets = [0, 0], sizes = [1, 128], strides = [1, 1]} : vector<1x512xf32> to vector<1x128xf32>
    %13 = vector.extract_strided_slice %11 {offsets = [0, 0], sizes = [1, 128], strides = [1, 1]} : vector<1x512xf32> to vector<1x128xf32>
    %14 = vector.extract_strided_slice %8 {offsets = [0, 128], sizes = [1, 128], strides = [1, 1]} : vector<1x512xf32> to vector<1x128xf32>
    %15 = arith.addf %12, %14 : vector<1x128xf32>
    %16 = vector.extract_strided_slice %11 {offsets = [0, 128], sizes = [1, 128], strides = [1, 1]} : vector<1x512xf32> to vector<1x128xf32>
    %17 = arith.addf %13, %16 : vector<1x128xf32>
    %18 = vector.extract_strided_slice %8 {offsets = [0, 256], sizes = [1, 128], strides = [1, 1]} : vector<1x512xf32> to vector<1x128xf32>
    %19 = arith.addf %15, %18 : vector<1x128xf32>
    %20 = vector.extract_strided_slice %11 {offsets = [0, 256], sizes = [1, 128], strides = [1, 1]} : vector<1x512xf32> to vector<1x128xf32>
    %21 = arith.addf %17, %20 : vector<1x128xf32>
    %22 = vector.extract_strided_slice %8 {offsets = [0, 384], sizes = [1, 128], strides = [1, 1]} : vector<1x512xf32> to vector<1x128xf32>
    %23 = arith.addf %19, %22 : vector<1x128xf32>
    %24 = vector.extract_strided_slice %11 {offsets = [0, 384], sizes = [1, 128], strides = [1, 1]} : vector<1x512xf32> to vector<1x128xf32>
    %25 = arith.addf %21, %24 : vector<1x128xf32>
    %cst_8 = arith.constant 1.562500e-02 : f32
    %26 = vector.broadcast %cst_8 : f32 to vector<1x128xf32>
    %27 = arith.mulf %23, %26 : vector<1x128xf32>
    %cst_9 = arith.constant 1.562500e-02 : f32
    %28 = vector.broadcast %cst_9 : f32 to vector<1x128xf32>
    %29 = arith.mulf %25, %28 : vector<1x128xf32>
    %30 = arith.mulf %27, %27 : vector<1x128xf32>
    %31 = arith.subf %29, %30 : vector<1x128xf32>
    %cst_10 = arith.constant 0.000000e+00 : f32
    %32 = vector.broadcast %cst_10 : f32 to vector<1x128xf32>
    %33 = arith.maximumf %31, %32 : vector<1x128xf32>
    %cst_11 = arith.constant 9.99999974E-6 : f32
    %34 = vector.broadcast %cst_11 : f32 to vector<1x128xf32>
    %35 = arith.addf %33, %34 : vector<1x128xf32>
    %36 = math.rsqrt %35 : vector<1x128xf32>
    %37 = tpu.concatenate %27, %27, %27, %27 in 1 : vector<1x128xf32>, vector<1x128xf32>, vector<1x128xf32>, vector<1x128xf32> -> vector<1x512xf32>
    %38 = tpu.concatenate %36, %36, %36, %36 in 1 : vector<1x128xf32>, vector<1x128xf32>, vector<1x128xf32>, vector<1x128xf32> -> vector<1x512xf32>
    %39 = vector.broadcast %37 : vector<1x512xf32> to vector<16x512xf32>
    %40 = arith.subf %6, %39 : vector<16x512xf32>
    %41 = vector.broadcast %38 : vector<1x512xf32> to vector<16x512xf32>
    %42 = arith.mulf %40, %41 : vector<16x512xf32>
    %cst_12 = arith.constant 0.000000e+00 : f32
    %43 = vector.broadcast %cst_12 : f32 to vector<16x512xf32>
    %44 = arith.maximumf %42, %43 : vector<16x512xf32>
    %45 = arith.truncf %44 : vector<16x512xf32> to vector<16x512xbf16>
    %c0_13 = arith.constant 0 : index
    %c0_14 = arith.constant 0 : index
    %c0_15 = arith.constant 0 : index
    %46 = vector.load %arg5[%c0_13, %c0_14, %c0_15] : memref<1x16x512xbf16, #tpu.memory_space<vmem>>, vector<1x16x512xbf16>
    %47 = vector.shape_cast %46 : vector<1x16x512xbf16> to vector<16x512xbf16>
    %48 = vector.shape_cast %45 : vector<16x512xbf16> to vector<1x16x512xbf16>
    tpu.vector_store %arg5[%c0_13, %c0_14, %c0_15], %48 {strides = array<i32>} : memref<1x16x512xbf16, #tpu.memory_space<vmem>>, vector<1x16x512xbf16>,
    return
  }
  func.func @transform_0(%arg0: i32, %arg1: i32) -> (i32, i32, i32) {
    %c0_i32 = arith.constant 0 : i32
    %c0_i32_0 = arith.constant 0 : i32
    return %arg0, %arg1, %c0_i32 : i32, i32, i32
  }
  func.func @transform_1(%arg0: i32, %arg1: i32) -> (i32, i32) {
    %c0_i32 = arith.constant 0 : i32
    %c0_i32_0 = arith.constant 0 : i32
    %c0_i32_1 = arith.constant 0 : i32
    return %c0_i32, %c0_i32_0 : i32, i32
  }
  func.func @transform_2(%arg0: i32, %arg1: i32) -> (i32, i32) {
    %c0_i32 = arith.constant 0 : i32
    %c0_i32_0 = arith.constant 0 : i32
    %c0_i32_1 = arith.constant 0 : i32
    return %c0_i32, %c0_i32_0 : i32, i32
  }
  func.func @transform_3(%arg0: i32, %arg1: i32) -> (i32, i32, i32) {
    %c0_i32 = arith.constant 0 : i32
    %c0_i32_0 = arith.constant 0 : i32
    return %arg0, %arg1, %c0_i32 : i32, i32, i32
  }
}

module attributes {stable_mosaic.version = 11 : i64} {
  func.func @_fused_gemm_kernel(%arg0: i32, %arg1: i32, %arg2: memref<1x64x128xbf16, #tpu.memory_space<vmem>>, %arg3: memref<128x512xbf16, #tpu.memory_space<vmem>>, %arg4: memref<1x512xf32, #tpu.memory_space<vmem>>, %arg5: memref<1x64x512xbf16, #tpu.memory_space<vmem>>) attributes {dimension_semantics = [#tpu.dimension_semantics<parallel>, #tpu.dimension_semantics<parallel>], iteration_bounds = array<i64: 2, 1>, scalar_prefetch = 0 : i64, scratch_operands = 0 : i64, tpu.core_type = #tpu.core_type<tc>, window_params = [{transform_indices = @transform_0, window_bounds = array<i64: 1, 64, 128>}, {pipeline_mode = #tpu.pipeline_mode<synchronous>, transform_indices = @transform_1, window_bounds = array<i64: 128, 512>}, {pipeline_mode = #tpu.pipeline_mode<synchronous>, transform_indices = @transform_2, window_bounds = array<i64: 1, 512>}, {transform_indices = @transform_3, window_bounds = array<i64: 1, 64, 512>}]} {
    %c0 = arith.constant 0 : index
    %c0_0 = arith.constant 0 : index
    %c0_1 = arith.constant 0 : index
    %0 = vector.load %arg2[%c0, %c0_0, %c0_1] : memref<1x64x128xbf16, #tpu.memory_space<vmem>>, vector<1x64x128xbf16>
    %1 = vector.shape_cast %0 : vector<1x64x128xbf16> to vector<64x128xbf16>
    %c0_2 = arith.constant 0 : index
    %c0_3 = arith.constant 0 : index
    %2 = vector.load %arg3[%c0_2, %c0_3] : memref<128x512xbf16, #tpu.memory_space<vmem>>, vector<128x512xbf16>
    %cst = arith.constant dense<0.000000e+00> : vector<64x512xf32>
    %3 = tpu.matmul %1, %2, %cst {dimension_numbers = #tpu.dot_dimension_numbers<[1], [0], [0], [1], [0, 0, 1, 1], [], []>} : vector<64x128xbf16>, vector<128x512xbf16>, vector<64x512xf32> -> vector<64x512xf32>
    %c0_4 = arith.constant 0 : index
    %c0_5 = arith.constant 0 : index
    %4 = vector.load %arg4[%c0_4, %c0_5] : memref<1x512xf32, #tpu.memory_space<vmem>>, vector<1x512xf32>
    %5 = vector.broadcast %4 : vector<1x512xf32> to vector<64x512xf32>
    %6 = arith.addf %3, %5 : vector<64x512xf32>
    %cst_6 = arith.constant dense<0.000000e+00> : vector<512xf32>
    %7 = vector.multi_reduction <add>, %6, %cst_6 [0] : vector<64x512xf32> to vector<512xf32>
    %8 = vector.shape_cast %7 : vector<512xf32> to vector<1x512xf32>
    %9 = arith.mulf %6, %6 : vector<64x512xf32>
    %cst_7 = arith.constant dense<0.000000e+00> : vector<512xf32>
    %10 = vector.multi_reduction <add>, %9, %cst_7 [0] : vector<64x512xf32> to vector<512xf32>
    %11 = vector.shape_cast %10 : vector<512xf32> to vector<1x512xf32>
    %12 = vector.extract_strided_slice %8 {offsets = [0, 0], sizes = [1, 128], strides = [1, 1]} : vector<1x512xf32> to vector<1x128xf32>
    %13 = vector.extract_strided_slice %11 {offsets = [0, 0], sizes = [1, 128], strides = [1, 1]} : vector<1x512xf32> to vector<1x128xf32>
    %14 = vector.extract_strided_slice %8 {offsets = [0, 128], sizes = [1, 128], strides = [1, 1]} : vector<1x512xf32> to vector<1x128xf32>
    %15 = arith.addf %12, %14 : vector<1x128xf32>
    %16 = vector.extract_strided_slice %11 {offsets = [0, 128], sizes = [1, 128], strides = [1, 1]} : vector<1x512xf32> to vector<1x128xf32>
    %17 = arith.addf %13, %16 : vector<1x128xf32>
    %18 = vector.extract_strided_slice %8 {offsets = [0, 256], sizes = [1, 128], strides = [1, 1]} : vector<1x512xf32> to vector<1x128xf32>
    %19 = arith.addf %15, %18 : vector<1x128xf32>
    %20 = vector.extract_strided_slice %11 {offsets = [0, 256], sizes = [1, 128], strides = [1, 1]} : vector<1x512xf32> to vector<1x128xf32>
    %21 = arith.addf %17, %20 : vector<1x128xf32>
    %22 = vector.extract_strided_slice %8 {offsets = [0, 384], sizes = [1, 128], strides = [1, 1]} : vector<1x512xf32> to vector<1x128xf32>
    %23 = arith.addf %19, %22 : vector<1x128xf32>
    %24 = vector.extract_strided_slice %11 {offsets = [0, 384], sizes = [1, 128], strides = [1, 1]} : vector<1x512xf32> to vector<1x128xf32>
    %25 = arith.addf %21, %24 : vector<1x128xf32>
    %cst_8 = arith.constant 3.906250e-03 : f32
    %26 = vector.broadcast %cst_8 : f32 to vector<1x128xf32>
    %27 = arith.mulf %23, %26 : vector<1x128xf32>
    %cst_9 = arith.constant 3.906250e-03 : f32
    %28 = vector.broadcast %cst_9 : f32 to vector<1x128xf32>
    %29 = arith.mulf %25, %28 : vector<1x128xf32>
    %30 = arith.mulf %27, %27 : vector<1x128xf32>
    %31 = arith.subf %29, %30 : vector<1x128xf32>
    %cst_10 = arith.constant 0.000000e+00 : f32
    %32 = vector.broadcast %cst_10 : f32 to vector<1x128xf32>
    %33 = arith.maximumf %31, %32 : vector<1x128xf32>
    %cst_11 = arith.constant 9.99999974E-6 : f32
    %34 = vector.broadcast %cst_11 : f32 to vector<1x128xf32>
    %35 = arith.addf %33, %34 : vector<1x128xf32>
    %36 = math.rsqrt %35 : vector<1x128xf32>
    %37 = tpu.concatenate %27, %27, %27, %27 in 1 : vector<1x128xf32>, vector<1x128xf32>, vector<1x128xf32>, vector<1x128xf32> -> vector<1x512xf32>
    %38 = tpu.concatenate %36, %36, %36, %36 in 1 : vector<1x128xf32>, vector<1x128xf32>, vector<1x128xf32>, vector<1x128xf32> -> vector<1x512xf32>
    %39 = vector.broadcast %37 : vector<1x512xf32> to vector<64x512xf32>
    %40 = arith.subf %6, %39 : vector<64x512xf32>
    %41 = vector.broadcast %38 : vector<1x512xf32> to vector<64x512xf32>
    %42 = arith.mulf %40, %41 : vector<64x512xf32>
    %cst_12 = arith.constant 0.000000e+00 : f32
    %43 = vector.broadcast %cst_12 : f32 to vector<64x512xf32>
    %44 = arith.maximumf %42, %43 : vector<64x512xf32>
    %45 = arith.truncf %44 : vector<64x512xf32> to vector<64x512xbf16>
    %c0_13 = arith.constant 0 : index
    %c0_14 = arith.constant 0 : index
    %c0_15 = arith.constant 0 : index
    %46 = vector.load %arg5[%c0_13, %c0_14, %c0_15] : memref<1x64x512xbf16, #tpu.memory_space<vmem>>, vector<1x64x512xbf16>
    %47 = vector.shape_cast %46 : vector<1x64x512xbf16> to vector<64x512xbf16>
    %48 = vector.shape_cast %45 : vector<64x512xbf16> to vector<1x64x512xbf16>
    tpu.vector_store %arg5[%c0_13, %c0_14, %c0_15], %48 {strides = array<i32>} : memref<1x64x512xbf16, #tpu.memory_space<vmem>>, vector<1x64x512xbf16>,
    return
  }
  func.func @transform_0(%arg0: i32, %arg1: i32) -> (i32, i32, i32) {
    %c0_i32 = arith.constant 0 : i32
    %c0_i32_0 = arith.constant 0 : i32
    return %arg0, %arg1, %c0_i32 : i32, i32, i32
  }
  func.func @transform_1(%arg0: i32, %arg1: i32) -> (i32, i32) {
    %c0_i32 = arith.constant 0 : i32
    %c0_i32_0 = arith.constant 0 : i32
    %c0_i32_1 = arith.constant 0 : i32
    return %c0_i32, %c0_i32_0 : i32, i32
  }
  func.func @transform_2(%arg0: i32, %arg1: i32) -> (i32, i32) {
    %c0_i32 = arith.constant 0 : i32
    %c0_i32_0 = arith.constant 0 : i32
    %c0_i32_1 = arith.constant 0 : i32
    return %c0_i32, %c0_i32_0 : i32, i32
  }
  func.func @transform_3(%arg0: i32, %arg1: i32) -> (i32, i32, i32) {
    %c0_i32 = arith.constant 0 : i32
    %c0_i32_0 = arith.constant 0 : i32
    return %arg0, %arg1, %c0_i32 : i32, i32, i32
  }
}

module attributes {stable_mosaic.version = 11 : i64} {
  func.func @_fused_gemm_kernel(%arg0: i32, %arg1: i32, %arg2: memref<1x64x512xbf16, #tpu.memory_space<vmem>>, %arg3: memref<512x128xbf16, #tpu.memory_space<vmem>>, %arg4: memref<1x128xf32, #tpu.memory_space<vmem>>, %arg5: memref<1x64x128xf32, #tpu.memory_space<vmem>>) attributes {dimension_semantics = [#tpu.dimension_semantics<parallel>, #tpu.dimension_semantics<parallel>], iteration_bounds = array<i64: 2, 4>, scalar_prefetch = 0 : i64, scratch_operands = 0 : i64, tpu.core_type = #tpu.core_type<tc>, window_params = [{transform_indices = @transform_0, window_bounds = array<i64: 1, 64, 512>}, {pipeline_mode = #tpu.pipeline_mode<synchronous>, transform_indices = @transform_1, window_bounds = array<i64: 512, 128>}, {pipeline_mode = #tpu.pipeline_mode<synchronous>, transform_indices = @transform_2, window_bounds = array<i64: 1, 128>}, {transform_indices = @transform_3, window_bounds = array<i64: 1, 64, 128>}]} {
    %c0 = arith.constant 0 : index
    %c0_0 = arith.constant 0 : index
    %c0_1 = arith.constant 0 : index
    %0 = vector.load %arg2[%c0, %c0_0, %c0_1] : memref<1x64x512xbf16, #tpu.memory_space<vmem>>, vector<1x64x512xbf16>
    %1 = vector.shape_cast %0 : vector<1x64x512xbf16> to vector<64x512xbf16>
    %c0_2 = arith.constant 0 : index
    %c0_3 = arith.constant 0 : index
    %2 = vector.load %arg3[%c0_2, %c0_3] : memref<512x128xbf16, #tpu.memory_space<vmem>>, vector<512x128xbf16>
    %cst = arith.constant dense<0.000000e+00> : vector<64x128xf32>
    %3 = tpu.matmul %1, %2, %cst {dimension_numbers = #tpu.dot_dimension_numbers<[1], [0], [0], [1], [0, 0, 1, 1], [], []>} : vector<64x512xbf16>, vector<512x128xbf16>, vector<64x128xf32> -> vector<64x128xf32>
    %c0_4 = arith.constant 0 : index
    %c0_5 = arith.constant 0 : index
    %4 = vector.load %arg4[%c0_4, %c0_5] : memref<1x128xf32, #tpu.memory_space<vmem>>, vector<1x128xf32>
    %5 = vector.broadcast %4 : vector<1x128xf32> to vector<64x128xf32>
    %6 = arith.addf %3, %5 : vector<64x128xf32>
    %7 = math.tanh %6 : vector<64x128xf32>
    %c0_6 = arith.constant 0 : index
    %c0_7 = arith.constant 0 : index
    %c0_8 = arith.constant 0 : index
    %8 = vector.load %arg5[%c0_6, %c0_7, %c0_8] : memref<1x64x128xf32, #tpu.memory_space<vmem>>, vector<1x64x128xf32>
    %9 = vector.shape_cast %8 : vector<1x64x128xf32> to vector<64x128xf32>
    %10 = vector.shape_cast %7 : vector<64x128xf32> to vector<1x64x128xf32>
    tpu.vector_store %arg5[%c0_6, %c0_7, %c0_8], %10 {strides = array<i32>} : memref<1x64x128xf32, #tpu.memory_space<vmem>>, vector<1x64x128xf32>,
    return
  }
  func.func @transform_0(%arg0: i32, %arg1: i32) -> (i32, i32, i32) {
    %c0_i32 = arith.constant 0 : i32
    %c0_i32_0 = arith.constant 0 : i32
    return %arg0, %arg1, %c0_i32 : i32, i32, i32
  }
  func.func @transform_1(%arg0: i32, %arg1: i32) -> (i32, i32) {
    %c0_i32 = arith.constant 0 : i32
    %c0_i32_0 = arith.constant 0 : i32
    %c0_i32_1 = arith.constant 0 : i32
    return %c0_i32, %c0_i32_0 : i32, i32
  }
  func.func @transform_2(%arg0: i32, %arg1: i32) -> (i32, i32) {
    %c0_i32 = arith.constant 0 : i32
    %c0_i32_0 = arith.constant 0 : i32
    %c0_i32_1 = arith.constant 0 : i32
    return %c0_i32, %c0_i32_0 : i32, i32
  }
  func.func @transform_3(%arg0: i32, %arg1: i32) -> (i32, i32, i32) {
    %c0_i32 = arith.constant 0 : i32
    %c0_i32_0 = arith.constant 0 : i32
    return %arg0, %arg1, %c0_i32 : i32, i32, i32
  }
}

</mosaic_0001>

<llo_original>
// kernel: generator_forward.10
$region0: #{generator_forward.10}
  #allocation0 [shape = 'u32[]', space=smem, size = 0x4, offset = 0x4, fixed_abs, tag = 'smem constant byte address 0x4 - core index']
  #allocation1 [shape = 'u32[144,128]{1,0:T(1,128)}', space=vmem, size = 0x12000, scoped, tag = 'internal scratch']
  %s0 = inlined_call_operand.vmem [shape: bf16[2,256,256], index: 0, kind: input, shape index: {}]
  %s1 = inlined_call_operand.vmem [shape: bf16[256,128], index: 1, kind: input, shape index: {}]
  %s2 = inlined_call_operand.vmem [shape: f32[1,128], index: 2, kind: input, shape index: {}]
  %s3 = inlined_call_operand.vmem [shape: bf16[2,256,128], index: 3, kind: output, shape index: {}]
  %s4 = sld [smem:[#allocation0]]
  $region45: #{generator_forward.10} parent=0
    _
  %s6 = ssub.s32 1, %s4
  %s7 = scalar_select 0, %s6, %s4
  loop: start=0, step=1, limit=4
  $region2: #{generator_forward.10} parent=0 // loop_pre_header
    _
  $region3: #{generator_forward.10} parent=0 // loop_header
    %s9 = sphi 0, %s13
    %p10 = scmp.ge.s32.totalorder %s9, 4
    %s16 = sphi 0, %s28
    %s17 = sphi 0, %s24
    %s18 = sphi 0, %s16
    %s19 = sphi 0, %s17
    %s20 = sphi 0, %s18
    %s21 = sphi 0, %s19
    %s33 = sphi 0, %s35
    %s36 = sphi 0, %s33
    %s37 = sphi 0, %s36
    %s53 = sphi 0, %s37
    %s57 = sphi 0, %s57
    %s59 = sphi 0, %s57
    %s60 = sphi 0, %s59
    %s74 = sphi 0, %s60
    %s78 = sphi 0, %s78
    %s80 = sphi 0, %s78
    %s81 = sphi 0, %s80
    %s95 = sphi 0, %s81
    %s103 = sphi 0, %s105
    %s106 = sphi 0, %s103
    %s107 = sphi 0, %s106
    %s123 = sphi 0, %s107
  $region4: #{generator_forward.10} parent=0 // loop_header_branch
    %12 = sbr.rel (%p10) target = $region8
  $region5: #{generator_forward.10} parent=0 // loop_body
    %s14 = ssub.s32 %s9, 1
    %s15 = ssub.s32 %s9, 2
    %s22 = sadd.s32 1, %s17
    %p23 = scmp.ge.s32.totalorder %s22, 1
    %s24 = scalar_select %p23, 0, %s22
    %s25 = sadd.s32 1, %s16
    %s26 = scalar_select %p23, %s25, %s16
    %p27 = scmp.ge.s32.totalorder %s26, 2
    %s28 = scalar_select %p27, 0, %s26
    %s29 = ssub.s32 %s16, %s28
    %s30 = ssub.s32 %s17, %s24
    %s31 = sor.u32 %s29, %s30
    %p32 = scmp.eq.s32.totalorder %s31, 0
    %s34 = sadd.s32 %s33, 1
    %s35 = scalar_select %p32, %s33, %s34
    %p38 = pneg %p32
    %p39 = scmp.eq.s32.totalorder %s9, 1
    %p40 = por %p38, %p39
    %p41 = scmp.ne.s32.totalorder %s33, %s36
    %p42 = scmp.eq.s32.totalorder %s9, 0
    %p43 = por %p41, %p42
    %p44 = scmp.ne.s32.totalorder %s33, %s36
    %p45 = scmp.eq.s32.totalorder %s14, 1
    %p46 = por %p44, %p45
    %p47 = scmp.ne.s32.totalorder %s36, %s37
    %p48 = scmp.eq.s32.totalorder %s14, 0
    %p49 = por %p47, %p48
    %p50 = scmp.ne.s32.totalorder %s36, %s37
    %p51 = scmp.eq.s32.totalorder %s15, 1
    %p52 = por %p50, %p51
    %p54 = scmp.ne.s32.totalorder %s37, %s53
    %p55 = scmp.eq.s32.totalorder %s15, 0
    %p56 = por %p54, %p55
    %s58 = sadd.s32 %s57, 1
    %p61 = scmp.eq.s32.totalorder %s9, 1
    %p62 = scmp.ne.s32.totalorder %s57, %s59
    %p63 = scmp.eq.s32.totalorder %s9, 0
    %p64 = por %p62, %p63
    %p65 = scmp.ne.s32.totalorder %s57, %s59
    %p66 = scmp.eq.s32.totalorder %s14, 1
    %p67 = por %p65, %p66
    %p68 = scmp.ne.s32.totalorder %s59, %s60
    %p69 = scmp.eq.s32.totalorder %s14, 0
    %p70 = por %p68, %p69
    %p71 = scmp.ne.s32.totalorder %s59, %s60
    %p72 = scmp.eq.s32.totalorder %s15, 1
    %p73 = por %p71, %p72
    %p75 = scmp.ne.s32.totalorder %s60, %s74
    %p76 = scmp.eq.s32.totalorder %s15, 0
    %p77 = por %p75, %p76
    %s79 = sadd.s32 %s78, 1
    %p82 = scmp.eq.s32.totalorder %s9, 1
    %p83 = scmp.ne.s32.totalorder %s78, %s80
    %p84 = scmp.eq.s32.totalorder %s9, 0
    %p85 = por %p83, %p84
    %p86 = scmp.ne.s32.totalorder %s78, %s80
    %p87 = scmp.eq.s32.totalorder %s14, 1
    %p88 = por %p86, %p87
    %p89 = scmp.ne.s32.totalorder %s80, %s81
    %p90 = scmp.eq.s32.totalorder %s14, 0
    %p91 = por %p89, %p90
    %p92 = scmp.ne.s32.totalorder %s80, %s81
    %p93 = scmp.eq.s32.totalorder %s15, 1
    %p94 = por %p92, %p93
    %p96 = scmp.ne.s32.totalorder %s81, %s95
    %p97 = scmp.eq.s32.totalorder %s15, 0
    %p98 = por %p96, %p97
    %s99 = ssub.s32 %s16, %s28
    %s100 = ssub.s32 %s17, %s24
    %s101 = sor.u32 %s99, %s100
    %p102 = scmp.eq.s32.totalorder %s101, 0
    %s104 = sadd.s32 %s103, 1
    %s105 = scalar_select %p102, %s103, %s104
    %p108 = pneg %p102
    %p109 = scmp.eq.s32.totalorder %s9, 1
    %p110 = por %p108, %p109
    %p111 = scmp.ne.s32.totalorder %s103, %s106
    %p112 = scmp.eq.s32.totalorder %s9, 0
    %p113 = por %p111, %p112
    %p114 = scmp.ne.s32.totalorder %s103, %s106
    %p115 = scmp.eq.s32.totalorder %s14, 1
    %p116 = por %p114, %p115
    %p117 = scmp.ne.s32.totalorder %s106, %s107
    %p118 = scmp.eq.s32.totalorder %s14, 0
    %p119 = por %p117, %p118
    %p120 = scmp.ne.s32.totalorder %s106, %s107
    %p121 = scmp.eq.s32.totalorder %s15, 1
    %p122 = por %p120, %p121
    %p124 = scmp.ne.s32.totalorder %s107, %s123
    %p125 = scmp.eq.s32.totalorder %s15, 0
    %p126 = por %p124, %p125
    %p127 = scmp.le.s32.totalorder 1, %s9
    %p128 = scmp.lt.s32.totalorder %s9, 3
    %p129 = pnand %p127, %p128
    %p130 = pneg %p129
    // Predicated region
    $region9: #{generator_forward.10} parent=5 // pred_check
      _
    $region10: #{generator_forward.10} parent=5 // pred_check_branch
      %132 = sbr.rel (%p129) target = $region12
    $region11: #{generator_forward.10} parent=5 // pred_region
      %s133 = ssub.s32 %s9, 1
      // Predicated region
      $region13: #{generator_forward.10} parent=11 // pred_check
        %p134 = pneg %p70
      $region14: #{generator_forward.10} parent=11 // pred_check_branch
        %136 = sbr.rel (%p134) target = $region16
      $region15: #{generator_forward.10} parent=11 // pred_region
        _
      $region16: #{generator_forward.10} parent=11 // pred_fallthru
        _
      // Predicated region
      $region17: #{generator_forward.10} parent=11 // pred_check
        %p137 = pneg %p91
      $region18: #{generator_forward.10} parent=11 // pred_check_branch
        %139 = sbr.rel (%p137) target = $region20
      $region19: #{generator_forward.10} parent=11 // pred_region
        _
      $region20: #{generator_forward.10} parent=11 // pred_fallthru
        _
    $region12: #{generator_forward.10} parent=5 // pred_fallthru
      _
    %p140 = scmp.lt.s32.totalorder %s9, 2
    // Predicated region
    $region21: #{generator_forward.10} parent=5 // pred_check
      %p141 = pneg %p140
    $region22: #{generator_forward.10} parent=5 // pred_check_branch
      %143 = sbr.rel (%p141) target = $region24
    $region23: #{generator_forward.10} parent=5 // pred_region
      // Predicated region
      $region25: #{generator_forward.10} parent=23 // pred_check
        %p144 = pneg %p43
      $region26: #{generator_forward.10} parent=23 // pred_check_branch
        %146 = sbr.rel (%p144) target = $region28
      $region27: #{generator_forward.10} parent=23 // pred_region
        %s147 = smul.u32 32, %s17
        %p148 = scmp.lt.s32.totalorder %s16, 1
        %s149 = scalar_select %p148, %s16, 1
        %p150 = scmp.lt.s32.totalorder %s147, 31
        %s151 = scalar_select %p150, %s147, 31
        %s152 = smul.addr %s151, 2
        %s153 = smul.addr %s149, 64
        %s154 = sadd.s32 %s152, %s153
        %s155 = smul.addr %s154, 4
        %s156 = scalar_lea.vmem %s0, %s155
        %s157 = smul.u32 32, %s17
      $region28: #{generator_forward.10} parent=23 // pred_fallthru
        _
    $region24: #{generator_forward.10} parent=5 // pred_fallthru
      _
    %p158 = scmp.le.s32.totalorder 1, %s9
    %p159 = scmp.lt.s32.totalorder %s9, 3
    %p160 = pnand %p158, %p159
    %p161 = pneg %p160
    // Predicated region
    $region29: #{generator_forward.10} parent=5 // pred_check
      _
    $region30: #{generator_forward.10} parent=5 // pred_check_branch
      %163 = sbr.rel (%p160) target = $region32
    $region31: #{generator_forward.10} parent=5 // pred_region
      %s164 = ssub.s32 %s9, 1
      %s165 = smul.u32 32, %s19
      %p166 = scmp.lt.s32.totalorder %s18, 1
      %s167 = scalar_select %p166, %s18, 1
      %p168 = scmp.lt.s32.totalorder %s165, 31
      %s169 = scalar_select %p168, %s165, 31
      %s170 = smul.addr %s169, 2
      %s171 = smul.addr %s167, 64
      %s172 = sadd.s32 %s170, %s171
      %s173 = smul.addr %s172, 4
      %s174 = scalar_lea.vmem %s0, %s173
      %p175 = pneg %p49
      %p176 = pneg %p46
      %p177 = pneg %p70
      %p178 = pneg %p67
      %p179 = pneg %p91
      %p180 = pneg %p88
      %p181 = pneg %p119
      %p182 = pneg %p116
      %s183 = smul.u32 32, %s19
      %p184 = scmp.lt.s32.totalorder %s18, 1
      %s185 = scalar_select %p184, %s18, 1
      %p186 = scmp.lt.s32.totalorder %s183, 31
      %s187 = scalar_select %p186, %s183, 31
      %s188 = smul.addr %s185, 32
      %s189 = sadd.s32 %s187, %s188
      %s190 = smul.addr %s189, 4
      %s191 = scalar_lea.vmem %s3, %s190
      %s192 = smul.u32 32, %s19
      %p193 = scmp.lt.s32.totalorder %s18, 1
      %s194 = scalar_select %p193, %s18, 1
      %p195 = scmp.lt.s32.totalorder %s192, 31
      %s196 = scalar_select %p195, %s192, 31
      %s197 = smul.addr %s196, 2
      %s198 = smul.addr %s194, 64
      %s199 = sadd.s32 %s197, %s198
      %s200 = smul.addr %s199, 4
      %s201 = scalar_lea.vmem %s0, %s200
      %s202 = smul.u32 32, %s19
      %s203 = smul.u32 32, %s19
      %p204 = scmp.lt.s32.totalorder %s18, 1
      %s205 = scalar_select %p204, %s18, 1
      %p206 = scmp.lt.s32.totalorder %s203, 31
      %s207 = scalar_select %p206, %s203, 31
      %s208 = smul.addr %s205, 32
      %s209 = sadd.s32 %s207, %s208
      %s210 = smul.addr %s209, 4
      %s211 = scalar_lea.vmem %s3, %s210
      %s212 = smul.u32 32, %s19
      %v214 = vld [vmem:[%s201] sm:$0xff]
      %v215 = vld [vmem:[%s201 + $0x8] sm:$0xff]
      %v216 = vld [vmem:[%s201 + $0x10] sm:$0xff]
      %v217 = vld [vmem:[%s201 + $0x18] sm:$0xff]
      %v218 = vld [vmem:[%s201 + $0x20] sm:$0xff]
      %v219 = vld [vmem:[%s201 + $0x28] sm:$0xff]
      %v220 = vld [vmem:[%s201 + $0x30] sm:$0xff]
      %v221 = vld [vmem:[%s201 + $0x38] sm:$0xff]
      %v222 = vld [vmem:[%s201 + $0x40] sm:$0xff]
      %v223 = vld [vmem:[%s201 + $0x48] sm:$0xff]
      %v224 = vld [vmem:[%s201 + $0x50] sm:$0xff]
      %v225 = vld [vmem:[%s201 + $0x58] sm:$0xff]
      %v226 = vld [vmem:[%s201 + $0x60] sm:$0xff]
      %v227 = vld [vmem:[%s201 + $0x68] sm:$0xff]
      %v228 = vld [vmem:[%s201 + $0x70] sm:$0xff]
      %v229 = vld [vmem:[%s201 + $0x78] sm:$0xff]
      %v230 = vld [vmem:[%s201 + $0x80] sm:$0xff]
      %v231 = vld [vmem:[%s201 + $0x88] sm:$0xff]
      %v232 = vld [vmem:[%s201 + $0x90] sm:$0xff]
      %v233 = vld [vmem:[%s201 + $0x98] sm:$0xff]
      %v234 = vld [vmem:[%s201 + $0xa0] sm:$0xff]
      %v235 = vld [vmem:[%s201 + $0xa8] sm:$0xff]
      %v236 = vld [vmem:[%s201 + $0xb0] sm:$0xff]
      %v237 = vld [vmem:[%s201 + $0xb8] sm:$0xff]
      %v238 = vld [vmem:[%s201 + $0xc0] sm:$0xff]
      %v239 = vld [vmem:[%s201 + $0xc8] sm:$0xff]
      %v240 = vld [vmem:[%s201 + $0xd0] sm:$0xff]
      %v241 = vld [vmem:[%s201 + $0xd8] sm:$0xff]
      %v242 = vld [vmem:[%s201 + $0xe0] sm:$0xff]
      %v243 = vld [vmem:[%s201 + $0xe8] sm:$0xff]
      %v244 = vld [vmem:[%s201 + $0xf0] sm:$0xff]
      %v245 = vld [vmem:[%s201 + $0xf8] sm:$0xff]
      %v246 = vld [vmem:[%s1] sm:$0xf]
      %v247 = vld [vmem:[%s1 + $0x4] sm:$0xf]
      %v248 = vld [vmem:[%s1 + $0x8] sm:$0xf]
      %v249 = vld [vmem:[%s1 + $0xc] sm:$0xf]
      %v250 = vld [vmem:[%s1 + $0x10] sm:$0xf]
      %v251 = vld [vmem:[%s1 + $0x14] sm:$0xf]
      %v252 = vld [vmem:[%s1 + $0x18] sm:$0xf]
      %v253 = vld [vmem:[%s1 + $0x1c] sm:$0xf]
      %v254 = vld [vmem:[%s1 + $0x20] sm:$0xf]
      %v255 = vld [vmem:[%s1 + $0x24] sm:$0xf]
      %v256 = vld [vmem:[%s1 + $0x28] sm:$0xf]
      %v257 = vld [vmem:[%s1 + $0x2c] sm:$0xf]
      %v258 = vld [vmem:[%s1 + $0x30] sm:$0xf]
      %v259 = vld [vmem:[%s1 + $0x34] sm:$0xf]
      %v260 = vld [vmem:[%s1 + $0x38] sm:$0xf]
      %v261 = vld [vmem:[%s1 + $0x3c] sm:$0xf]
      %v262 = vld [vmem:[%s1 + $0x40] sm:$0xf]
      %v263 = vld [vmem:[%s1 + $0x44] sm:$0xf]
      %v264 = vld [vmem:[%s1 + $0x48] sm:$0xf]
      %v265 = vld [vmem:[%s1 + $0x4c] sm:$0xf]
      %v266 = vld [vmem:[%s1 + $0x50] sm:$0xf]
      %v267 = vld [vmem:[%s1 + $0x54] sm:$0xf]
      %v268 = vld [vmem:[%s1 + $0x58] sm:$0xf]
      %v269 = vld [vmem:[%s1 + $0x5c] sm:$0xf]
      %v270 = vld [vmem:[%s1 + $0x60] sm:$0xf]
      %v271 = vld [vmem:[%s1 + $0x64] sm:$0xf]
      %v272 = vld [vmem:[%s1 + $0x68] sm:$0xf]
      %v273 = vld [vmem:[%s1 + $0x6c] sm:$0xf]
      %v274 = vld [vmem:[%s1 + $0x70] sm:$0xf]
      %v275 = vld [vmem:[%s1 + $0x74] sm:$0xf]
      %v276 = vld [vmem:[%s1 + $0x78] sm:$0xf]
      %v277 = vld [vmem:[%s1 + $0x7c] sm:$0xf]
      %v278 = vld [vmem:[%s2] sm:$0x1]
      %v280 = vlaneseq
      %v281 = vshrl.u32 %v280, 7
      %v282 = vsub.s32 0, %v281
      %v283 = vrot.slane %v278, %v282
      %v317 = vunpack.c.l.b16 %v214
      %v318 = vunpack.c.h.b16 %v214
      %v319 = vunpack.c.l.b16 %v215
      %v320 = vunpack.c.h.b16 %v215
      %v321 = vunpack.c.l.b16 %v216
      %v322 = vunpack.c.h.b16 %v216
      %v323 = vunpack.c.l.b16 %v217
      %v324 = vunpack.c.h.b16 %v217
      %v325 = vunpack.c.l.b16 %v218
      %v326 = vunpack.c.h.b16 %v218
      %v327 = vunpack.c.l.b16 %v219
      %v328 = vunpack.c.h.b16 %v219
      %v329 = vunpack.c.l.b16 %v220
      %v330 = vunpack.c.h.b16 %v220
      %v331 = vunpack.c.l.b16 %v221
      %v332 = vunpack.c.h.b16 %v221
      %v333 = vunpack.c.l.b16 %v222
      %v334 = vunpack.c.h.b16 %v222
      %v335 = vunpack.c.l.b16 %v223
      %v336 = vunpack.c.h.b16 %v223
      %v337 = vunpack.c.l.b16 %v224
      %v338 = vunpack.c.h.b16 %v224
      %v339 = vunpack.c.l.b16 %v225
      %v340 = vunpack.c.h.b16 %v225
      %v341 = vunpack.c.l.b16 %v226
      %v342 = vunpack.c.h.b16 %v226
      %v343 = vunpack.c.l.b16 %v227
      %v344 = vunpack.c.h.b16 %v227
      %v345 = vunpack.c.l.b16 %v228
      %v346 = vunpack.c.h.b16 %v228
      %v347 = vunpack.c.l.b16 %v229
      %v348 = vunpack.c.h.b16 %v229
      %v349 = vunpack.c.l.b16 %v230
      %v350 = vunpack.c.h.b16 %v230
      %v351 = vunpack.c.l.b16 %v231
      %v352 = vunpack.c.h.b16 %v231
      %v353 = vunpack.c.l.b16 %v232
      %v354 = vunpack.c.h.b16 %v232
      %v355 = vunpack.c.l.b16 %v233
      %v356 = vunpack.c.h.b16 %v233
      %v357 = vunpack.c.l.b16 %v234
      %v358 = vunpack.c.h.b16 %v234
      %v359 = vunpack.c.l.b16 %v235
      %v360 = vunpack.c.h.b16 %v235
      %v361 = vunpack.c.l.b16 %v236
      %v362 = vunpack.c.h.b16 %v236
      %v363 = vunpack.c.l.b16 %v237
      %v364 = vunpack.c.h.b16 %v237
      %v365 = vunpack.c.l.b16 %v238
      %v366 = vunpack.c.h.b16 %v238
      %v367 = vunpack.c.l.b16 %v239
      %v368 = vunpack.c.h.b16 %v239
      %v369 = vunpack.c.l.b16 %v240
      %v370 = vunpack.c.h.b16 %v240
      %v371 = vunpack.c.l.b16 %v241
      %v372 = vunpack.c.h.b16 %v241
      %v373 = vunpack.c.l.b16 %v242
      %v374 = vunpack.c.h.b16 %v242
      %v375 = vunpack.c.l.b16 %v243
      %v376 = vunpack.c.h.b16 %v243
      %v377 = vunpack.c.l.b16 %v244
      %v378 = vunpack.c.h.b16 %v244
      %v379 = vunpack.c.l.b16 %v245
      %v380 = vunpack.c.h.b16 %v245
      %v381 = vpack.c.b16 %v319, %v317
      %v382 = vpack.c.b16 %v320, %v318
      %v383 = vpack.c.b16 %v323, %v321
      %v384 = vpack.c.b16 %v324, %v322
      %v385 = vpack.c.b16 %v327, %v325
      %v386 = vpack.c.b16 %v328, %v326
      %v387 = vpack.c.b16 %v331, %v329
      %v388 = vpack.c.b16 %v332, %v330
      %v389 = vpack.c.b16 %v335, %v333
      %v390 = vpack.c.b16 %v336, %v334
      %v391 = vpack.c.b16 %v339, %v337
      %v392 = vpack.c.b16 %v340, %v338
      %v393 = vpack.c.b16 %v343, %v341
      %v394 = vpack.c.b16 %v344, %v342
      %v395 = vpack.c.b16 %v347, %v345
      %v396 = vpack.c.b16 %v348, %v346
      %v397 = vpack.c.b16 %v351, %v349
      %v398 = vpack.c.b16 %v352, %v350
      %v399 = vpack.c.b16 %v355, %v353
      %v400 = vpack.c.b16 %v356, %v354
      %v401 = vpack.c.b16 %v359, %v357
      %v402 = vpack.c.b16 %v360, %v358
      %v403 = vpack.c.b16 %v363, %v361
      %v404 = vpack.c.b16 %v364, %v362
      %v405 = vpack.c.b16 %v367, %v365
      %v406 = vpack.c.b16 %v368, %v366
      %v407 = vpack.c.b16 %v371, %v369
      %v408 = vpack.c.b16 %v372, %v370
      %v409 = vpack.c.b16 %v375, %v373
      %v410 = vpack.c.b16 %v376, %v374
      %v411 = vpack.c.b16 %v379, %v377
      %v412 = vpack.c.b16 %v380, %v378
      %v477 = vunpack.c.l.b16 %v246
      %v478 = vunpack.c.l.b16 %v247
      %v479 = vunpack.c.l.b16 %v248
      %v480 = vunpack.c.l.b16 %v249
      %v481 = vunpack.c.l.b16 %v250
      %v482 = vunpack.c.l.b16 %v251
      %v483 = vunpack.c.l.b16 %v252
      %v484 = vunpack.c.l.b16 %v253
      %v485 = vunpack.c.l.b16 %v254
      %v486 = vunpack.c.l.b16 %v255
      %v487 = vunpack.c.l.b16 %v256
      %v488 = vunpack.c.l.b16 %v257
      %v489 = vunpack.c.l.b16 %v258
      %v490 = vunpack.c.l.b16 %v259
      %v491 = vunpack.c.l.b16 %v260
      %v492 = vunpack.c.l.b16 %v261
      %v493 = vunpack.c.l.b16 %v262
      %v494 = vunpack.c.l.b16 %v263
      %v495 = vunpack.c.l.b16 %v264
      %v496 = vunpack.c.l.b16 %v265
      %v497 = vunpack.c.l.b16 %v266
      %v498 = vunpack.c.l.b16 %v267
      %v499 = vunpack.c.l.b16 %v268
      %v500 = vunpack.c.l.b16 %v269
      %v501 = vunpack.c.l.b16 %v270
      %v502 = vunpack.c.l.b16 %v271
      %v503 = vunpack.c.l.b16 %v272
      %v504 = vunpack.c.l.b16 %v273
      %v505 = vunpack.c.l.b16 %v274
      %v506 = vunpack.c.l.b16 %v275
      %v507 = vunpack.c.l.b16 %v276
      %v508 = vunpack.c.l.b16 %v277
      %v509 = vpack.c.b16 %v478, %v477
      %v510 = vpack.c.b16 %v480, %v479
      %v511 = vpack.c.b16 %v482, %v481
      %v512 = vpack.c.b16 %v484, %v483
      %v513 = vpack.c.b16 %v486, %v485
      %v514 = vpack.c.b16 %v488, %v487
      %v515 = vpack.c.b16 %v490, %v489
      %v516 = vpack.c.b16 %v492, %v491
      %v517 = vpack.c.b16 %v494, %v493
      %v518 = vpack.c.b16 %v496, %v495
      %v519 = vpack.c.b16 %v498, %v497
      %v520 = vpack.c.b16 %v500, %v499
      %v521 = vpack.c.b16 %v502, %v501
      %v522 = vpack.c.b16 %v504, %v503
      %v523 = vpack.c.b16 %v506, %v505
      %v524 = vpack.c.b16 %v508, %v507
      %541 = vmatprep.subr.bf16.mxu0 0
      %542 = vmatpush1.bf16.msra.mxu0 %v516
      %543 = vmatprep.subr.bf16.mxu0 0
      %544 = vmatpush1.bf16.msra.mxu0 %v515
      %545 = vmatprep.subr.bf16.mxu0 0
      %546 = vmatpush1.bf16.msra.mxu0 %v514
      %547 = vmatprep.subr.bf16.mxu0 0
      %548 = vmatpush1.bf16.msra.mxu0 %v513
      %549 = vmatprep.subr.bf16.mxu0 0
      %550 = vmatpush1.bf16.msra.mxu0 %v512
      %551 = vmatprep.subr.bf16.mxu0 0
      %552 = vmatpush1.bf16.msra.mxu0 %v511
      %553 = vmatprep.subr.bf16.mxu0 0
      %554 = vmatpush1.bf16.msra.mxu0 %v510
      %555 = vmatprep.subr.bf16.mxu0 0
      %556 = vmatpush1.bf16.msra.mxu0 %v509
      %557 = vmatprep.subr.bf16.mxu0 0
      %558 = vmatpush2.bf16.msra.mxu0 %v524
      %559 = vmatprep.subr.bf16.mxu0 0
      %560 = vmatpush2.bf16.msra.mxu0 %v523
      %561 = vmatprep.subr.bf16.mxu0 0
      %562 = vmatpush2.bf16.msra.mxu0 %v522
      %563 = vmatprep.subr.bf16.mxu0 0
      %564 = vmatpush2.bf16.msra.mxu0 %v521
      %565 = vmatprep.subr.bf16.mxu0 0
      %566 = vmatpush2.bf16.msra.mxu0 %v520
      %567 = vmatprep.subr.bf16.mxu0 0
      %568 = vmatpush2.bf16.msra.mxu0 %v519
      %569 = vmatprep.subr.bf16.mxu0 0
      %570 = vmatpush2.bf16.msra.mxu0 %v518
      %571 = vmatprep.subr.bf16.mxu0 0
      %572 = vmatpush2.bf16.msra.mxu0 %v517
      %573 = vmatprep.mubr.bf16.mxu0 %v382
      %574 = vmatmul.mubr.bf16.gmra.mxu0 %v381
      %v575 = vpop.f32.mrf.mxu0
      %v576 = vadd.f32 %v283, %v575
      %v577 = vpop.f32.mrf.mxu0
      %v578 = vpop.f32.mrf.mxu0
      %v579 = vadd.f32 %v283, %v578
      %v580 = vpop.f32.mrf.mxu0
      %581 = vmatprep.mubr.bf16.mxu0 %v384
      %582 = vmatmul.mubr.bf16.gmra.mxu0 %v383
      %v583 = vpop.f32.mrf.mxu0
      %v584 = vadd.f32 %v283, %v583
      %v585 = vpop.f32.mrf.mxu0
      %v586 = vpop.f32.mrf.mxu0
      %v587 = vadd.f32 %v283, %v586
      %v588 = vpop.f32.mrf.mxu0
      %589 = vmatprep.mubr.bf16.mxu0 %v386
      %590 = vmatmul.mubr.bf16.gmra.mxu0 %v385
      %v591 = vpop.f32.mrf.mxu0
      %v592 = vadd.f32 %v283, %v591
      %v593 = vpop.f32.mrf.mxu0
      %v594 = vpop.f32.mrf.mxu0
      %v595 = vadd.f32 %v283, %v594
      %v596 = vpop.f32.mrf.mxu0
      %597 = vmatprep.mubr.bf16.mxu0 %v388
      %598 = vmatmul.mubr.bf16.gmra.mxu0 %v387
      %v599 = vpop.f32.mrf.mxu0
      %v600 = vadd.f32 %v283, %v599
      %v601 = vpop.f32.mrf.mxu0
      %v602 = vpop.f32.mrf.mxu0
      %v603 = vadd.f32 %v283, %v602
      %v604 = vpop.f32.mrf.mxu0
      %605 = vmatprep.mubr.bf16.mxu0 %v390
      %606 = vmatmul.mubr.bf16.gmra.mxu0 %v389
      %v607 = vpop.f32.mrf.mxu0
      %v608 = vadd.f32 %v283, %v607
      %v609 = vpop.f32.mrf.mxu0
      %v610 = vpop.f32.mrf.mxu0
      %v611 = vadd.f32 %v283, %v610
      %v612 = vpop.f32.mrf.mxu0
      %613 = vmatprep.mubr.bf16.mxu0 %v392
      %614 = vmatmul.mubr.bf16.gmra.mxu0 %v391
      %v615 = vpop.f32.mrf.mxu0
      %v616 = vadd.f32 %v283, %v615
      %v617 = vpop.f32.mrf.mxu0
      %v618 = vpop.f32.mrf.mxu0
      %v619 = vadd.f32 %v283, %v618
      %v620 = vpop.f32.mrf.mxu0
      %621 = vmatprep.mubr.bf16.mxu0 %v394
      %622 = vmatmul.mubr.bf16.gmra.mxu0 %v393
      %v623 = vpop.f32.mrf.mxu0
      %v624 = vadd.f32 %v283, %v623
      %v625 = vpop.f32.mrf.mxu0
      %v626 = vpop.f32.mrf.mxu0
      %v627 = vadd.f32 %v283, %v626
      %v628 = vpop.f32.mrf.mxu0
      %629 = vmatprep.mubr.bf16.mxu0 %v396
      %630 = vmatmul.mubr.bf16.gmra.mxu0 %v395
      %v631 = vpop.f32.mrf.mxu0
      %v632 = vadd.f32 %v283, %v631
      %v633 = vpop.f32.mrf.mxu0
      %v634 = vpop.f32.mrf.mxu0
      %v635 = vadd.f32 %v283, %v634
      %v636 = vpop.f32.mrf.mxu0
      %637 = vmatprep.mubr.bf16.mxu0 %v398
      %638 = vmatmul.mubr.bf16.gmra.mxu0 %v397
      %v639 = vpop.f32.mrf.mxu0
      %v640 = vadd.f32 %v283, %v639
      %v641 = vpop.f32.mrf.mxu0
      %v642 = vpop.f32.mrf.mxu0
      %v643 = vadd.f32 %v283, %v642
      %v644 = vpop.f32.mrf.mxu0
      %645 = vmatprep.mubr.bf16.mxu0 %v400
      %646 = vmatmul.mubr.bf16.gmra.mxu0 %v399
      %v647 = vpop.f32.mrf.mxu0
      %v648 = vadd.f32 %v283, %v647
      %v649 = vpop.f32.mrf.mxu0
      %v650 = vpop.f32.mrf.mxu0
      %v651 = vadd.f32 %v283, %v650
      %v652 = vpop.f32.mrf.mxu0
      %653 = vmatprep.mubr.bf16.mxu0 %v402
      %654 = vmatmul.mubr.bf16.gmra.mxu0 %v401
      %v655 = vpop.f32.mrf.mxu0
      %v656 = vadd.f32 %v283, %v655
      %v657 = vpop.f32.mrf.mxu0
      %v658 = vpop.f32.mrf.mxu0
      %v659 = vadd.f32 %v283, %v658
      %v660 = vpop.f32.mrf.mxu0
      %661 = vmatprep.mubr.bf16.mxu0 %v404
      %662 = vmatmul.mubr.bf16.gmra.mxu0 %v403
      %v663 = vpop.f32.mrf.mxu0
      %v664 = vadd.f32 %v283, %v663
      %v665 = vpop.f32.mrf.mxu0
      %v666 = vpop.f32.mrf.mxu0
      %v667 = vadd.f32 %v283, %v666
      %v668 = vpop.f32.mrf.mxu0
      %669 = vmatprep.mubr.bf16.mxu0 %v406
      %670 = vmatmul.mubr.bf16.gmra.mxu0 %v405
      %v671 = vpop.f32.mrf.mxu0
      %v672 = vadd.f32 %v283, %v671
      %v673 = vpop.f32.mrf.mxu0
      %v674 = vpop.f32.mrf.mxu0
      %v675 = vadd.f32 %v283, %v674
      %v676 = vpop.f32.mrf.mxu0
      %677 = vmatprep.mubr.bf16.mxu0 %v408
      %678 = vmatmul.mubr.bf16.gmra.mxu0 %v407
      %v679 = vpop.f32.mrf.mxu0
      %v680 = vadd.f32 %v283, %v679
      %v681 = vpop.f32.mrf.mxu0
      %v682 = vpop.f32.mrf.mxu0
      %v683 = vadd.f32 %v283, %v682
      %v684 = vpop.f32.mrf.mxu0
      %685 = vmatprep.mubr.bf16.mxu0 %v410
      %686 = vmatmul.mubr.bf16.gmra.mxu0 %v409
      %v687 = vpop.f32.mrf.mxu0
      %v688 = vadd.f32 %v283, %v687
      %v689 = vpop.f32.mrf.mxu0
      %v690 = vpop.f32.mrf.mxu0
      %v691 = vadd.f32 %v283, %v690
      %v692 = vpop.f32.mrf.mxu0
      %693 = vmatprep.mubr.bf16.mxu0 %v412
      %694 = vmatmul.mubr.bf16.gmra.mxu0 %v411
      %v695 = vpop.f32.mrf.mxu0
      %v696 = vadd.f32 %v283, %v695
      %v697 = vpop.f32.mrf.mxu0
      %v698 = vpop.f32.mrf.mxu0
      %v699 = vadd.f32 %v283, %v698
      %v700 = vpop.f32.mrf.mxu0
      %701 = vdwg.mxu0
      %v702 = vadd.f32 %v576, %v579
      %v703 = vadd.f32 %v702, %v584
      %v704 = vadd.f32 %v703, %v587
      %v705 = vadd.f32 %v704, %v592
      %v706 = vadd.f32 %v705, %v595
      %v707 = vadd.f32 %v706, %v600
      %v708 = vadd.f32 %v707, %v603
      %v709 = vadd.f32 %v708, %v608
      %v710 = vadd.f32 %v709, %v611
      %v711 = vadd.f32 %v710, %v616
      %v712 = vadd.f32 %v711, %v619
      %v713 = vadd.f32 %v712, %v624
      %v714 = vadd.f32 %v713, %v627
      %v715 = vadd.f32 %v714, %v632
      %v716 = vadd.f32 %v715, %v635
      %v717 = vadd.f32 %v716, %v640
      %v718 = vadd.f32 %v717, %v643
      %v719 = vadd.f32 %v718, %v648
      %v720 = vadd.f32 %v719, %v651
      %v721 = vadd.f32 %v720, %v656
      %v722 = vadd.f32 %v721, %v659
      %v723 = vadd.f32 %v722, %v664
      %v724 = vadd.f32 %v723, %v667
      %v725 = vadd.f32 %v724, %v672
      %v726 = vadd.f32 %v725, %v675
      %v727 = vadd.f32 %v726, %v680
      %v728 = vadd.f32 %v727, %v683
      %v729 = vadd.f32 %v728, %v688
      %v730 = vadd.f32 %v729, %v691
      %v731 = vadd.f32 %v730, %v696
      %v732 = vadd.f32 %v731, %v699
      %v733 = vrot.slane %v732, 4
      %v734 = vadd.f32 %v732, %v733
      %v735 = vrot.slane %v734, 2
      %v736 = vadd.f32 %v734, %v735
      %v737 = vrot.slane %v736, 1
      %v738 = vadd.f32 %v736, %v737
      %v739 = vmul.f32 %v576, %v576
      %v740 = vmul.f32 %v579, %v579
      %v741 = vmul.f32 %v584, %v584
      %v742 = vmul.f32 %v587, %v587
      %v743 = vmul.f32 %v592, %v592
      %v744 = vmul.f32 %v595, %v595
      %v745 = vmul.f32 %v600, %v600
      %v746 = vmul.f32 %v603, %v603
      %v747 = vmul.f32 %v608, %v608
      %v748 = vmul.f32 %v611, %v611
      %v749 = vmul.f32 %v616, %v616
      %v750 = vmul.f32 %v619, %v619
      %v751 = vmul.f32 %v624, %v624
      %v752 = vmul.f32 %v627, %v627
      %v753 = vmul.f32 %v632, %v632
      %v754 = vmul.f32 %v635, %v635
      %v755 = vmul.f32 %v640, %v640
      %v756 = vmul.f32 %v643, %v643
      %v757 = vmul.f32 %v648, %v648
      %v758 = vmul.f32 %v651, %v651
      %v759 = vmul.f32 %v656, %v656
      %v760 = vmul.f32 %v659, %v659
      %v761 = vmul.f32 %v664, %v664
      %v762 = vmul.f32 %v667, %v667
      %v763 = vmul.f32 %v672, %v672
      %v764 = vmul.f32 %v675, %v675
      %v765 = vmul.f32 %v680, %v680
      %v766 = vmul.f32 %v683, %v683
      %v767 = vmul.f32 %v688, %v688
      %v768 = vmul.f32 %v691, %v691
      %v769 = vmul.f32 %v696, %v696
      %v770 = vmul.f32 %v699, %v699
      %v771 = vadd.f32 %v739, %v740
      %v772 = vadd.f32 %v771, %v741
      %v773 = vadd.f32 %v772, %v742
      %v774 = vadd.f32 %v773, %v743
      %v775 = vadd.f32 %v774, %v744
      %v776 = vadd.f32 %v775, %v745
      %v777 = vadd.f32 %v776, %v746
      %v778 = vadd.f32 %v777, %v747
      %v779 = vadd.f32 %v778, %v748
      %v780 = vadd.f32 %v779, %v749
      %v781 = vadd.f32 %v780, %v750
      %v782 = vadd.f32 %v781, %v751
      %v783 = vadd.f32 %v782, %v752
      %v784 = vadd.f32 %v783, %v753
      %v785 = vadd.f32 %v784, %v754
      %v786 = vadd.f32 %v785, %v755
      %v787 = vadd.f32 %v786, %v756
      %v788 = vadd.f32 %v787, %v757
      %v789 = vadd.f32 %v788, %v758
      %v790 = vadd.f32 %v789, %v759
      %v791 = vadd.f32 %v790, %v760
      %v792 = vadd.f32 %v791, %v761
      %v793 = vadd.f32 %v792, %v762
      %v794 = vadd.f32 %v793, %v763
      %v795 = vadd.f32 %v794, %v764
      %v796 = vadd.f32 %v795, %v765
      %v797 = vadd.f32 %v796, %v766
      %v798 = vadd.f32 %v797, %v767
      %v799 = vadd.f32 %v798, %v768
      %v800 = vadd.f32 %v799, %v769
      %v801 = vadd.f32 %v800, %v770
      %v802 = vrot.slane %v801, 4
      %v803 = vadd.f32 %v801, %v802
      %v804 = vrot.slane %v803, 2
      %v805 = vadd.f32 %v803, %v804
      %v806 = vrot.slane %v805, 1
      %v807 = vadd.f32 %v805, %v806
      %v808 = vmul.f32 %v738, 0.00390625
      %v809 = vmul.f32 %v807, 0.00390625
      %v810 = vmul.f32 %v808, %v808
      %v811 = vsub.f32 %v809, %v810
      %v812 = vmax.f32 %v811, 0.0
      %v813 = vadd.f32 %v812, 1e-05
      %v814 = vrsqrt.pop %v813
      %v815 = vsub.f32 %v576, %v808
      %v816 = vsub.f32 %v579, %v808
      %v817 = vsub.f32 %v584, %v808
      %v818 = vsub.f32 %v587, %v808
      %v819 = vsub.f32 %v592, %v808
      %v820 = vsub.f32 %v595, %v808
      %v821 = vsub.f32 %v600, %v808
      %v822 = vsub.f32 %v603, %v808
      %v823 = vsub.f32 %v608, %v808
      %v824 = vsub.f32 %v611, %v808
      %v825 = vsub.f32 %v616, %v808
      %v826 = vsub.f32 %v619, %v808
      %v827 = vsub.f32 %v624, %v808
      %v828 = vsub.f32 %v627, %v808
      %v829 = vsub.f32 %v632, %v808
      %v830 = vsub.f32 %v635, %v808
      %v831 = vsub.f32 %v640, %v808
      %v832 = vsub.f32 %v643, %v808
      %v833 = vsub.f32 %v648, %v808
      %v834 = vsub.f32 %v651, %v808
      %v835 = vsub.f32 %v656, %v808
      %v836 = vsub.f32 %v659, %v808
      %v837 = vsub.f32 %v664, %v808
      %v838 = vsub.f32 %v667, %v808
      %v839 = vsub.f32 %v672, %v808
      %v840 = vsub.f32 %v675, %v808
      %v841 = vsub.f32 %v680, %v808
      %v842 = vsub.f32 %v683, %v808
      %v843 = vsub.f32 %v688, %v808
      %v844 = vsub.f32 %v691, %v808
      %v845 = vsub.f32 %v696, %v808
      %v846 = vsub.f32 %v699, %v808
      %v847 = vmul.f32 %v815, %v814
      %v848 = vmul.f32 %v816, %v814
      %v849 = vmul.f32 %v817, %v814
      %v850 = vmul.f32 %v818, %v814
      %v851 = vmul.f32 %v819, %v814
      %v852 = vmul.f32 %v820, %v814
      %v853 = vmul.f32 %v821, %v814
      %v854 = vmul.f32 %v822, %v814
      %v855 = vmul.f32 %v823, %v814
      %v856 = vmul.f32 %v824, %v814
      %v857 = vmul.f32 %v825, %v814
      %v858 = vmul.f32 %v826, %v814
      %v859 = vmul.f32 %v827, %v814
      %v860 = vmul.f32 %v828, %v814
      %v861 = vmul.f32 %v829, %v814
      %v862 = vmul.f32 %v830, %v814
      %v863 = vmul.f32 %v831, %v814
      %v864 = vmul.f32 %v832, %v814
      %v865 = vmul.f32 %v833, %v814
      %v866 = vmul.f32 %v834, %v814
      %v867 = vmul.f32 %v835, %v814
      %v868 = vmul.f32 %v836, %v814
      %v869 = vmul.f32 %v837, %v814
      %v870 = vmul.f32 %v838, %v814
      %v871 = vmul.f32 %v839, %v814
      %v872 = vmul.f32 %v840, %v814
      %v873 = vmul.f32 %v841, %v814
      %v874 = vmul.f32 %v842, %v814
      %v875 = vmul.f32 %v843, %v814
      %v876 = vmul.f32 %v844, %v814
      %v877 = vmul.f32 %v845, %v814
      %v878 = vmul.f32 %v846, %v814
      %v879 = vmax.f32 %v847, 0.0
      %v880 = vmax.f32 %v848, 0.0
      %v881 = vmax.f32 %v849, 0.0
      %v882 = vmax.f32 %v850, 0.0
      %v883 = vmax.f32 %v851, 0.0
      %v884 = vmax.f32 %v852, 0.0
      %v885 = vmax.f32 %v853, 0.0
      %v886 = vmax.f32 %v854, 0.0
      %v887 = vmax.f32 %v855, 0.0
      %v888 = vmax.f32 %v856, 0.0
      %v889 = vmax.f32 %v857, 0.0
      %v890 = vmax.f32 %v858, 0.0
      %v891 = vmax.f32 %v859, 0.0
      %v892 = vmax.f32 %v860, 0.0
      %v893 = vmax.f32 %v861, 0.0
      %v894 = vmax.f32 %v862, 0.0
      %v895 = vmax.f32 %v863, 0.0
      %v896 = vmax.f32 %v864, 0.0
      %v897 = vmax.f32 %v865, 0.0
      %v898 = vmax.f32 %v866, 0.0
      %v899 = vmax.f32 %v867, 0.0
      %v900 = vmax.f32 %v868, 0.0
      %v901 = vmax.f32 %v869, 0.0
      %v902 = vmax.f32 %v870, 0.0
      %v903 = vmax.f32 %v871, 0.0
      %v904 = vmax.f32 %v872, 0.0
      %v905 = vmax.f32 %v873, 0.0
      %v906 = vmax.f32 %v874, 0.0
      %v907 = vmax.f32 %v875, 0.0
      %v908 = vmax.f32 %v876, 0.0
      %v909 = vmax.f32 %v877, 0.0
      %v910 = vmax.f32 %v878, 0.0
      %v911 = vpack.c.bf16 %v880, %v879
      %v912 = vpack.c.bf16 %v882, %v881
      %v913 = vpack.c.bf16 %v884, %v883
      %v914 = vpack.c.bf16 %v886, %v885
      %v915 = vpack.c.bf16 %v888, %v887
      %v916 = vpack.c.bf16 %v890, %v889
      %v917 = vpack.c.bf16 %v892, %v891
      %v918 = vpack.c.bf16 %v894, %v893
      %v919 = vpack.c.bf16 %v896, %v895
      %v920 = vpack.c.bf16 %v898, %v897
      %v921 = vpack.c.bf16 %v900, %v899
      %v922 = vpack.c.bf16 %v902, %v901
      %v923 = vpack.c.bf16 %v904, %v903
      %v924 = vpack.c.bf16 %v906, %v905
      %v925 = vpack.c.bf16 %v908, %v907
      %v926 = vpack.c.bf16 %v910, %v909
      %v943 = vunpack.c.l.b16 %v911
      %v944 = vunpack.c.h.b16 %v911
      %v945 = vunpack.c.l.b16 %v912
      %v946 = vunpack.c.h.b16 %v912
      %v947 = vunpack.c.l.b16 %v913
      %v948 = vunpack.c.h.b16 %v913
      %v949 = vunpack.c.l.b16 %v914
      %v950 = vunpack.c.h.b16 %v914
      %v951 = vunpack.c.l.b16 %v915
      %v952 = vunpack.c.h.b16 %v915
      %v953 = vunpack.c.l.b16 %v916
      %v954 = vunpack.c.h.b16 %v916
      %v955 = vunpack.c.l.b16 %v917
      %v956 = vunpack.c.h.b16 %v917
      %v957 = vunpack.c.l.b16 %v918
      %v958 = vunpack.c.h.b16 %v918
      %v959 = vunpack.c.l.b16 %v919
      %v960 = vunpack.c.h.b16 %v919
      %v961 = vunpack.c.l.b16 %v920
      %v962 = vunpack.c.h.b16 %v920
      %v963 = vunpack.c.l.b16 %v921
      %v964 = vunpack.c.h.b16 %v921
      %v965 = vunpack.c.l.b16 %v922
      %v966 = vunpack.c.h.b16 %v922
      %v967 = vunpack.c.l.b16 %v923
      %v968 = vunpack.c.h.b16 %v923
      %v969 = vunpack.c.l.b16 %v924
      %v970 = vunpack.c.h.b16 %v924
      %v971 = vunpack.c.l.b16 %v925
      %v972 = vunpack.c.h.b16 %v925
      %v973 = vunpack.c.l.b16 %v926
      %v974 = vunpack.c.h.b16 %v926
      %v975 = vpack.c.b16 %v943, %v943
      %v976 = vpack.c.b16 %v944, %v944
      %v977 = vpack.c.b16 %v945, %v945
      %v978 = vpack.c.b16 %v946, %v946
      %v979 = vpack.c.b16 %v947, %v947
      %v980 = vpack.c.b16 %v948, %v948
      %v981 = vpack.c.b16 %v949, %v949
      %v982 = vpack.c.b16 %v950, %v950
      %v983 = vpack.c.b16 %v951, %v951
      %v984 = vpack.c.b16 %v952, %v952
      %v985 = vpack.c.b16 %v953, %v953
      %v986 = vpack.c.b16 %v954, %v954
      %v987 = vpack.c.b16 %v955, %v955
      %v988 = vpack.c.b16 %v956, %v956
      %v989 = vpack.c.b16 %v957, %v957
      %v990 = vpack.c.b16 %v958, %v958
      %v991 = vpack.c.b16 %v959, %v959
      %v992 = vpack.c.b16 %v960, %v960
      %v993 = vpack.c.b16 %v961, %v961
      %v994 = vpack.c.b16 %v962, %v962
      %v995 = vpack.c.b16 %v963, %v963
      %v996 = vpack.c.b16 %v964, %v964
      %v997 = vpack.c.b16 %v965, %v965
      %v998 = vpack.c.b16 %v966, %v966
      %v999 = vpack.c.b16 %v967, %v967
      %v1000 = vpack.c.b16 %v968, %v968
      %v1001 = vpack.c.b16 %v969, %v969
      %v1002 = vpack.c.b16 %v970, %v970
      %v1003 = vpack.c.b16 %v971, %v971
      %v1004 = vpack.c.b16 %v972, %v972
      %v1005 = vpack.c.b16 %v973, %v973
      %v1006 = vpack.c.b16 %v974, %v974
      %1039 = vst [vmem:[%s211] sm:$0xf] %v975
      %1040 = vst [vmem:[%s211 + $0x4] sm:$0xf] %v976
      %1041 = vst [vmem:[%s211 + $0x8] sm:$0xf] %v977
      %1042 = vst [vmem:[%s211 + $0xc] sm:$0xf] %v978
      %1043 = vst [vmem:[%s211 + $0x10] sm:$0xf] %v979
      %1044 = vst [vmem:[%s211 + $0x14] sm:$0xf] %v980
      %1045 = vst [vmem:[%s211 + $0x18] sm:$0xf] %v981
      %1046 = vst [vmem:[%s211 + $0x1c] sm:$0xf] %v982
      %1047 = vst [vmem:[%s211 + $0x20] sm:$0xf] %v983
      %1048 = vst [vmem:[%s211 + $0x24] sm:$0xf] %v984
      %1049 = vst [vmem:[%s211 + $0x28] sm:$0xf] %v985
      %1050 = vst [vmem:[%s211 + $0x2c] sm:$0xf] %v986
      %1051 = vst [vmem:[%s211 + $0x30] sm:$0xf] %v987
      %1052 = vst [vmem:[%s211 + $0x34] sm:$0xf] %v988
      %1053 = vst [vmem:[%s211 + $0x38] sm:$0xf] %v989
      %1054 = vst [vmem:[%s211 + $0x3c] sm:$0xf] %v990
      %1055 = vst [vmem:[%s211 + $0x40] sm:$0xf] %v991
      %1056 = vst [vmem:[%s211 + $0x44] sm:$0xf] %v992
      %1057 = vst [vmem:[%s211 + $0x48] sm:$0xf] %v993
      %1058 = vst [vmem:[%s211 + $0x4c] sm:$0xf] %v994
      %1059 = vst [vmem:[%s211 + $0x50] sm:$0xf] %v995
      %1060 = vst [vmem:[%s211 + $0x54] sm:$0xf] %v996
      %1061 = vst [vmem:[%s211 + $0x58] sm:$0xf] %v997
      %1062 = vst [vmem:[%s211 + $0x5c] sm:$0xf] %v998
      %1063 = vst [vmem:[%s211 + $0x60] sm:$0xf] %v999
      %1064 = vst [vmem:[%s211 + $0x64] sm:$0xf] %v1000
      %1065 = vst [vmem:[%s211 + $0x68] sm:$0xf] %v1001
      %1066 = vst [vmem:[%s211 + $0x6c] sm:$0xf] %v1002
      %1067 = vst [vmem:[%s211 + $0x70] sm:$0xf] %v1003
      %1068 = vst [vmem:[%s211 + $0x74] sm:$0xf] %v1004
      %1069 = vst [vmem:[%s211 + $0x78] sm:$0xf] %v1005
      %1070 = vst [vmem:[%s211 + $0x7c] sm:$0xf] %v1006
      %s1071 = smul.u32 32, %s19
      %p1072 = scmp.lt.s32.totalorder %s18, 1
      %s1073 = scalar_select %p1072, %s18, 1
      %p1074 = scmp.lt.s32.totalorder %s1071, 31
      %s1075 = scalar_select %p1074, %s1071, 31
      %s1076 = smul.addr %s1073, 32
      %s1077 = sadd.s32 %s1075, %s1076
      %s1078 = smul.addr %s1077, 4
      %s1079 = scalar_lea.vmem %s3, %s1078
      // Predicated region
      $region33: #{generator_forward.10} parent=31 // pred_check
        %p1080 = pneg %p116
      $region34: #{generator_forward.10} parent=31 // pred_check_branch
        %1082 = sbr.rel (%p1080) target = $region36
      $region35: #{generator_forward.10} parent=31 // pred_region
        %s1083 = smul.u32 32, %s19
      $region36: #{generator_forward.10} parent=31 // pred_fallthru
        _
    $region32: #{generator_forward.10} parent=5 // pred_fallthru
      _
    %p1084 = scmp.le.s32.totalorder 2, %s9
    // Predicated region
    $region37: #{generator_forward.10} parent=5 // pred_check
      %p1085 = pneg %p1084
    $region38: #{generator_forward.10} parent=5 // pred_check_branch
      %1087 = sbr.rel (%p1085) target = $region40
    $region39: #{generator_forward.10} parent=5 // pred_region
      %s1088 = ssub.s32 %s9, 2
      // Predicated region
      $region41: #{generator_forward.10} parent=39 // pred_check
        %p1089 = pneg %p122
      $region42: #{generator_forward.10} parent=39 // pred_check_branch
        %1091 = sbr.rel (%p1089) target = $region44
      $region43: #{generator_forward.10} parent=39 // pred_region
        %s1092 = smul.u32 32, %s21
        %p1093 = scmp.lt.s32.totalorder %s20, 1
        %s1094 = scalar_select %p1093, %s20, 1
        %p1095 = scmp.lt.s32.totalorder %s1092, 31
        %s1096 = scalar_select %p1095, %s1092, 31
        %s1097 = smul.addr %s1094, 32
        %s1098 = sadd.s32 %s1096, %s1097
        %s1099 = smul.addr %s1098, 4
        %s1100 = scalar_lea.vmem %s3, %s1099
      $region44: #{generator_forward.10} parent=39 // pred_fallthru
        _
    $region40: #{generator_forward.10} parent=5 // pred_fallthru
      _
  $region6: #{generator_forward.10} parent=0 // loop_footer
    %s13 = sadd.s32 1, %s9
  $region7: #{generator_forward.10} parent=0 // loop_footer_branch
    %8 = sbr.rel target = $region3
  $region8: #{generator_forward.10} parent=0 // loop_exit
    _

// kernel: generator_forward.11
$region0: #{generator_forward.11}
  #allocation0 [shape = 'u32[]', space=smem, size = 0x4, offset = 0x4, fixed_abs, tag = 'smem constant byte address 0x4 - core index']
  #allocation1 [shape = 'u32[144,128]{1,0:T(1,128)}', space=vmem, size = 0x12000, scoped, tag = 'internal scratch']
  %s0 = inlined_call_operand.vmem [shape: bf16[2,64,128], index: 0, kind: input, shape index: {}]
  %s1 = inlined_call_operand.vmem [shape: bf16[128,128], index: 1, kind: input, shape index: {}]
  %s2 = inlined_call_operand.vmem [shape: f32[1,128], index: 2, kind: input, shape index: {}]
  %s3 = inlined_call_operand.vmem [shape: bf16[2,64,128], index: 3, kind: output, shape index: {}]
  %s4 = sld [smem:[#allocation0]]
  $region45: #{generator_forward.11} parent=0
    _
  %s6 = ssub.s32 1, %s4
  %s7 = scalar_select 0, %s6, %s4
  loop: start=0, step=1, limit=4
  $region2: #{generator_forward.11} parent=0 // loop_pre_header
    _
  $region3: #{generator_forward.11} parent=0 // loop_header
    %s9 = sphi 0, %s13
    %p10 = scmp.ge.s32.totalorder %s9, 4
    %s16 = sphi 0, %s28
    %s17 = sphi 0, %s24
    %s18 = sphi 0, %s16
    %s19 = sphi 0, %s17
    %s20 = sphi 0, %s18
    %s21 = sphi 0, %s19
    %s33 = sphi 0, %s35
    %s36 = sphi 0, %s33
    %s37 = sphi 0, %s36
    %s53 = sphi 0, %s37
    %s57 = sphi 0, %s57
    %s59 = sphi 0, %s57
    %s60 = sphi 0, %s59
    %s74 = sphi 0, %s60
    %s78 = sphi 0, %s78
    %s80 = sphi 0, %s78
    %s81 = sphi 0, %s80
    %s95 = sphi 0, %s81
    %s103 = sphi 0, %s105
    %s106 = sphi 0, %s103
    %s107 = sphi 0, %s106
    %s123 = sphi 0, %s107
  $region4: #{generator_forward.11} parent=0 // loop_header_branch
    %12 = sbr.rel (%p10) target = $region8
  $region5: #{generator_forward.11} parent=0 // loop_body
    %s14 = ssub.s32 %s9, 1
    %s15 = ssub.s32 %s9, 2
    %s22 = sadd.s32 1, %s17
    %p23 = scmp.ge.s32.totalorder %s22, 1
    %s24 = scalar_select %p23, 0, %s22
    %s25 = sadd.s32 1, %s16
    %s26 = scalar_select %p23, %s25, %s16
    %p27 = scmp.ge.s32.totalorder %s26, 2
    %s28 = scalar_select %p27, 0, %s26
    %s29 = ssub.s32 %s16, %s28
    %s30 = ssub.s32 %s17, %s24
    %s31 = sor.u32 %s29, %s30
    %p32 = scmp.eq.s32.totalorder %s31, 0
    %s34 = sadd.s32 %s33, 1
    %s35 = scalar_select %p32, %s33, %s34
    %p38 = pneg %p32
    %p39 = scmp.eq.s32.totalorder %s9, 1
    %p40 = por %p38, %p39
    %p41 = scmp.ne.s32.totalorder %s33, %s36
    %p42 = scmp.eq.s32.totalorder %s9, 0
    %p43 = por %p41, %p42
    %p44 = scmp.ne.s32.totalorder %s33, %s36
    %p45 = scmp.eq.s32.totalorder %s14, 1
    %p46 = por %p44, %p45
    %p47 = scmp.ne.s32.totalorder %s36, %s37
    %p48 = scmp.eq.s32.totalorder %s14, 0
    %p49 = por %p47, %p48
    %p50 = scmp.ne.s32.totalorder %s36, %s37
    %p51 = scmp.eq.s32.totalorder %s15, 1
    %p52 = por %p50, %p51
    %p54 = scmp.ne.s32.totalorder %s37, %s53
    %p55 = scmp.eq.s32.totalorder %s15, 0
    %p56 = por %p54, %p55
    %s58 = sadd.s32 %s57, 1
    %p61 = scmp.eq.s32.totalorder %s9, 1
    %p62 = scmp.ne.s32.totalorder %s57, %s59
    %p63 = scmp.eq.s32.totalorder %s9, 0
    %p64 = por %p62, %p63
    %p65 = scmp.ne.s32.totalorder %s57, %s59
    %p66 = scmp.eq.s32.totalorder %s14, 1
    %p67 = por %p65, %p66
    %p68 = scmp.ne.s32.totalorder %s59, %s60
    %p69 = scmp.eq.s32.totalorder %s14, 0
    %p70 = por %p68, %p69
    %p71 = scmp.ne.s32.totalorder %s59, %s60
    %p72 = scmp.eq.s32.totalorder %s15, 1
    %p73 = por %p71, %p72
    %p75 = scmp.ne.s32.totalorder %s60, %s74
    %p76 = scmp.eq.s32.totalorder %s15, 0
    %p77 = por %p75, %p76
    %s79 = sadd.s32 %s78, 1
    %p82 = scmp.eq.s32.totalorder %s9, 1
    %p83 = scmp.ne.s32.totalorder %s78, %s80
    %p84 = scmp.eq.s32.totalorder %s9, 0
    %p85 = por %p83, %p84
    %p86 = scmp.ne.s32.totalorder %s78, %s80
    %p87 = scmp.eq.s32.totalorder %s14, 1
    %p88 = por %p86, %p87
    %p89 = scmp.ne.s32.totalorder %s80, %s81
    %p90 = scmp.eq.s32.totalorder %s14, 0
    %p91 = por %p89, %p90
    %p92 = scmp.ne.s32.totalorder %s80, %s81
    %p93 = scmp.eq.s32.totalorder %s15, 1
    %p94 = por %p92, %p93
    %p96 = scmp.ne.s32.totalorder %s81, %s95
    %p97 = scmp.eq.s32.totalorder %s15, 0
    %p98 = por %p96, %p97
    %s99 = ssub.s32 %s16, %s28
    %s100 = ssub.s32 %s17, %s24
    %s101 = sor.u32 %s99, %s100
    %p102 = scmp.eq.s32.totalorder %s101, 0
    %s104 = sadd.s32 %s103, 1
    %s105 = scalar_select %p102, %s103, %s104
    %p108 = pneg %p102
    %p109 = scmp.eq.s32.totalorder %s9, 1
    %p110 = por %p108, %p109
    %p111 = scmp.ne.s32.totalorder %s103, %s106
    %p112 = scmp.eq.s32.totalorder %s9, 0
    %p113 = por %p111, %p112
    %p114 = scmp.ne.s32.totalorder %s103, %s106
    %p115 = scmp.eq.s32.totalorder %s14, 1
    %p116 = por %p114, %p115
    %p117 = scmp.ne.s32.totalorder %s106, %s107
    %p118 = scmp.eq.s32.totalorder %s14, 0
    %p119 = por %p117, %p118
    %p120 = scmp.ne.s32.totalorder %s106, %s107
    %p121 = scmp.eq.s32.totalorder %s15, 1
    %p122 = por %p120, %p121
    %p124 = scmp.ne.s32.totalorder %s107, %s123
    %p125 = scmp.eq.s32.totalorder %s15, 0
    %p126 = por %p124, %p125
    %p127 = scmp.le.s32.totalorder 1, %s9
    %p128 = scmp.lt.s32.totalorder %s9, 3
    %p129 = pnand %p127, %p128
    %p130 = pneg %p129
    // Predicated region
    $region9: #{generator_forward.11} parent=5 // pred_check
      _
    $region10: #{generator_forward.11} parent=5 // pred_check_branch
      %132 = sbr.rel (%p129) target = $region12
    $region11: #{generator_forward.11} parent=5 // pred_region
      %s133 = ssub.s32 %s9, 1
      // Predicated region
      $region13: #{generator_forward.11} parent=11 // pred_check
        %p134 = pneg %p70
      $region14: #{generator_forward.11} parent=11 // pred_check_branch
        %136 = sbr.rel (%p134) target = $region16
      $region15: #{generator_forward.11} parent=11 // pred_region
        _
      $region16: #{generator_forward.11} parent=11 // pred_fallthru
        _
      // Predicated region
      $region17: #{generator_forward.11} parent=11 // pred_check
        %p137 = pneg %p91
      $region18: #{generator_forward.11} parent=11 // pred_check_branch
        %139 = sbr.rel (%p137) target = $region20
      $region19: #{generator_forward.11} parent=11 // pred_region
        _
      $region20: #{generator_forward.11} parent=11 // pred_fallthru
        _
    $region12: #{generator_forward.11} parent=5 // pred_fallthru
      _
    %p140 = scmp.lt.s32.totalorder %s9, 2
    // Predicated region
    $region21: #{generator_forward.11} parent=5 // pred_check
      %p141 = pneg %p140
    $region22: #{generator_forward.11} parent=5 // pred_check_branch
      %143 = sbr.rel (%p141) target = $region24
    $region23: #{generator_forward.11} parent=5 // pred_region
      // Predicated region
      $region25: #{generator_forward.11} parent=23 // pred_check
        %p144 = pneg %p43
      $region26: #{generator_forward.11} parent=23 // pred_check_branch
        %146 = sbr.rel (%p144) target = $region28
      $region27: #{generator_forward.11} parent=23 // pred_region
        %s147 = smul.u32 8, %s17
        %p148 = scmp.lt.s32.totalorder %s16, 1
        %s149 = scalar_select %p148, %s16, 1
        %p150 = scmp.lt.s32.totalorder %s147, 7
        %s151 = scalar_select %p150, %s147, 7
        %s152 = smul.addr %s149, 8
        %s153 = sadd.s32 %s151, %s152
        %s154 = smul.addr %s153, 4
        %s155 = scalar_lea.vmem %s0, %s154
        %s156 = smul.u32 8, %s17
      $region28: #{generator_forward.11} parent=23 // pred_fallthru
        _
    $region24: #{generator_forward.11} parent=5 // pred_fallthru
      _
    %p157 = scmp.le.s32.totalorder 1, %s9
    %p158 = scmp.lt.s32.totalorder %s9, 3
    %p159 = pnand %p157, %p158
    %p160 = pneg %p159
    // Predicated region
    $region29: #{generator_forward.11} parent=5 // pred_check
      _
    $region30: #{generator_forward.11} parent=5 // pred_check_branch
      %162 = sbr.rel (%p159) target = $region32
    $region31: #{generator_forward.11} parent=5 // pred_region
      %s163 = ssub.s32 %s9, 1
      %s164 = smul.u32 8, %s19
      %p165 = scmp.lt.s32.totalorder %s18, 1
      %s166 = scalar_select %p165, %s18, 1
      %p167 = scmp.lt.s32.totalorder %s164, 7
      %s168 = scalar_select %p167, %s164, 7
      %s169 = smul.addr %s166, 8
      %s170 = sadd.s32 %s168, %s169
      %s171 = smul.addr %s170, 4
      %s172 = scalar_lea.vmem %s0, %s171
      %p173 = pneg %p49
      %p174 = pneg %p46
      %p175 = pneg %p70
      %p176 = pneg %p67
      %p177 = pneg %p91
      %p178 = pneg %p88
      %p179 = pneg %p119
      %p180 = pneg %p116
      %s181 = smul.u32 8, %s19
      %p182 = scmp.lt.s32.totalorder %s18, 1
      %s183 = scalar_select %p182, %s18, 1
      %p184 = scmp.lt.s32.totalorder %s181, 7
      %s185 = scalar_select %p184, %s181, 7
      %s186 = smul.addr %s183, 8
      %s187 = sadd.s32 %s185, %s186
      %s188 = smul.addr %s187, 4
      %s189 = scalar_lea.vmem %s3, %s188
      %s190 = smul.u32 8, %s19
      %p191 = scmp.lt.s32.totalorder %s18, 1
      %s192 = scalar_select %p191, %s18, 1
      %p193 = scmp.lt.s32.totalorder %s190, 7
      %s194 = scalar_select %p193, %s190, 7
      %s195 = smul.addr %s192, 8
      %s196 = sadd.s32 %s194, %s195
      %s197 = smul.addr %s196, 4
      %s198 = scalar_lea.vmem %s0, %s197
      %s199 = smul.u32 8, %s19
      %s200 = smul.u32 8, %s19
      %p201 = scmp.lt.s32.totalorder %s18, 1
      %s202 = scalar_select %p201, %s18, 1
      %p203 = scmp.lt.s32.totalorder %s200, 7
      %s204 = scalar_select %p203, %s200, 7
      %s205 = smul.addr %s202, 8
      %s206 = sadd.s32 %s204, %s205
      %s207 = smul.addr %s206, 4
      %s208 = scalar_lea.vmem %s3, %s207
      %s209 = smul.u32 8, %s19
      %v211 = vld [vmem:[%s198] sm:$0xf]
      %v212 = vld [vmem:[%s198 + $0x4] sm:$0xf]
      %v213 = vld [vmem:[%s198 + $0x8] sm:$0xf]
      %v214 = vld [vmem:[%s198 + $0xc] sm:$0xf]
      %v215 = vld [vmem:[%s198 + $0x10] sm:$0xf]
      %v216 = vld [vmem:[%s198 + $0x14] sm:$0xf]
      %v217 = vld [vmem:[%s198 + $0x18] sm:$0xf]
      %v218 = vld [vmem:[%s198 + $0x1c] sm:$0xf]
      %v219 = vld [vmem:[%s1] sm:$0xf]
      %v220 = vld [vmem:[%s1 + $0x4] sm:$0xf]
      %v221 = vld [vmem:[%s1 + $0x8] sm:$0xf]
      %v222 = vld [vmem:[%s1 + $0xc] sm:$0xf]
      %v223 = vld [vmem:[%s1 + $0x10] sm:$0xf]
      %v224 = vld [vmem:[%s1 + $0x14] sm:$0xf]
      %v225 = vld [vmem:[%s1 + $0x18] sm:$0xf]
      %v226 = vld [vmem:[%s1 + $0x1c] sm:$0xf]
      %v227 = vld [vmem:[%s1 + $0x20] sm:$0xf]
      %v228 = vld [vmem:[%s1 + $0x24] sm:$0xf]
      %v229 = vld [vmem:[%s1 + $0x28] sm:$0xf]
      %v230 = vld [vmem:[%s1 + $0x2c] sm:$0xf]
      %v231 = vld [vmem:[%s1 + $0x30] sm:$0xf]
      %v232 = vld [vmem:[%s1 + $0x34] sm:$0xf]
      %v233 = vld [vmem:[%s1 + $0x38] sm:$0xf]
      %v234 = vld [vmem:[%s1 + $0x3c] sm:$0xf]
      %v235 = vld [vmem:[%s2] sm:$0x1]
      %v237 = vlaneseq
      %v238 = vshrl.u32 %v237, 7
      %v239 = vsub.s32 0, %v238
      %v240 = vrot.slane %v235, %v239
      %v250 = vunpack.c.l.b16 %v211
      %v251 = vunpack.c.l.b16 %v212
      %v252 = vunpack.c.l.b16 %v213
      %v253 = vunpack.c.l.b16 %v214
      %v254 = vunpack.c.l.b16 %v215
      %v255 = vunpack.c.l.b16 %v216
      %v256 = vunpack.c.l.b16 %v217
      %v257 = vunpack.c.l.b16 %v218
      %v258 = vpack.c.b16 %v251, %v250
      %v259 = vpack.c.b16 %v253, %v252
      %v260 = vpack.c.b16 %v255, %v254
      %v261 = vpack.c.b16 %v257, %v256
      %v282 = vunpack.c.l.b16 %v219
      %v283 = vunpack.c.l.b16 %v220
      %v284 = vunpack.c.l.b16 %v221
      %v285 = vunpack.c.l.b16 %v222
      %v286 = vunpack.c.l.b16 %v223
      %v287 = vunpack.c.l.b16 %v224
      %v288 = vunpack.c.l.b16 %v225
      %v289 = vunpack.c.l.b16 %v226
      %v290 = vunpack.c.l.b16 %v227
      %v291 = vunpack.c.l.b16 %v228
      %v292 = vunpack.c.l.b16 %v229
      %v293 = vunpack.c.l.b16 %v230
      %v294 = vunpack.c.l.b16 %v231
      %v295 = vunpack.c.l.b16 %v232
      %v296 = vunpack.c.l.b16 %v233
      %v297 = vunpack.c.l.b16 %v234
      %v298 = vpack.c.b16 %v283, %v282
      %v299 = vpack.c.b16 %v285, %v284
      %v300 = vpack.c.b16 %v287, %v286
      %v301 = vpack.c.b16 %v289, %v288
      %v302 = vpack.c.b16 %v291, %v290
      %v303 = vpack.c.b16 %v293, %v292
      %v304 = vpack.c.b16 %v295, %v294
      %v305 = vpack.c.b16 %v297, %v296
      %314 = vmatprep.subr.bf16.mxu0 0
      %315 = vmatpush1.bf16.msra.mxu0 %v305
      %316 = vmatprep.subr.bf16.mxu0 0
      %317 = vmatpush1.bf16.msra.mxu0 %v304
      %318 = vmatprep.subr.bf16.mxu0 0
      %319 = vmatpush1.bf16.msra.mxu0 %v303
      %320 = vmatprep.subr.bf16.mxu0 0
      %321 = vmatpush1.bf16.msra.mxu0 %v302
      %322 = vmatprep.subr.bf16.mxu0 0
      %323 = vmatpush1.bf16.msra.mxu0 %v301
      %324 = vmatprep.subr.bf16.mxu0 0
      %325 = vmatpush1.bf16.msra.mxu0 %v300
      %326 = vmatprep.subr.bf16.mxu0 0
      %327 = vmatpush1.bf16.msra.mxu0 %v299
      %328 = vmatprep.subr.bf16.mxu0 0
      %329 = vmatpush1.bf16.msra.mxu0 %v298
      %330 = vmatprep.subr.bf16.mxu0 0
      %331 = vmatpush2.bf16.msra.mxu0 0
      %332 = vmatprep.subr.bf16.mxu0 0
      %333 = vmatpush2.bf16.msra.mxu0 0
      %334 = vmatprep.subr.bf16.mxu0 0
      %335 = vmatpush2.bf16.msra.mxu0 0
      %336 = vmatprep.subr.bf16.mxu0 0
      %337 = vmatpush2.bf16.msra.mxu0 0
      %338 = vmatprep.subr.bf16.mxu0 0
      %339 = vmatpush2.bf16.msra.mxu0 0
      %340 = vmatprep.subr.bf16.mxu0 0
      %341 = vmatpush2.bf16.msra.mxu0 0
      %342 = vmatprep.subr.bf16.mxu0 0
      %343 = vmatpush2.bf16.msra.mxu0 0
      %344 = vmatprep.subr.bf16.mxu0 0
      %345 = vmatpush2.bf16.msra.mxu0 0
      %346 = vmatprep.mubr.bf16.mxu0 0
      %347 = vmatmul.mubr.bf16.gmra.mxu0 %v258
      %v348 = vpop.f32.mrf.mxu0
      %v349 = vadd.f32 %v240, %v348
      %v350 = vpop.f32.mrf.mxu0
      %v351 = vpop.f32.mrf.mxu0
      %v352 = vadd.f32 %v240, %v351
      %v353 = vpop.f32.mrf.mxu0
      %354 = vmatprep.mubr.bf16.mxu0 0
      %355 = vmatmul.mubr.bf16.gmra.mxu0 %v259
      %v356 = vpop.f32.mrf.mxu0
      %v357 = vadd.f32 %v240, %v356
      %v358 = vpop.f32.mrf.mxu0
      %v359 = vpop.f32.mrf.mxu0
      %v360 = vadd.f32 %v240, %v359
      %v361 = vpop.f32.mrf.mxu0
      %362 = vmatprep.mubr.bf16.mxu0 0
      %363 = vmatmul.mubr.bf16.gmra.mxu0 %v260
      %v364 = vpop.f32.mrf.mxu0
      %v365 = vadd.f32 %v240, %v364
      %v366 = vpop.f32.mrf.mxu0
      %v367 = vpop.f32.mrf.mxu0
      %v368 = vadd.f32 %v240, %v367
      %v369 = vpop.f32.mrf.mxu0
      %370 = vmatprep.mubr.bf16.mxu0 0
      %371 = vmatmul.mubr.bf16.gmra.mxu0 %v261
      %v372 = vpop.f32.mrf.mxu0
      %v373 = vadd.f32 %v240, %v372
      %v374 = vpop.f32.mrf.mxu0
      %v375 = vpop.f32.mrf.mxu0
      %v376 = vadd.f32 %v240, %v375
      %v377 = vpop.f32.mrf.mxu0
      %378 = vdwg.mxu0
      %v379 = vadd.f32 %v349, %v352
      %v380 = vadd.f32 %v379, %v357
      %v381 = vadd.f32 %v380, %v360
      %v382 = vadd.f32 %v381, %v365
      %v383 = vadd.f32 %v382, %v368
      %v384 = vadd.f32 %v383, %v373
      %v385 = vadd.f32 %v384, %v376
      %v386 = vrot.slane %v385, 4
      %v387 = vadd.f32 %v385, %v386
      %v388 = vrot.slane %v387, 2
      %v389 = vadd.f32 %v387, %v388
      %v390 = vrot.slane %v389, 1
      %v391 = vadd.f32 %v389, %v390
      %v392 = vmul.f32 %v349, %v349
      %v393 = vmul.f32 %v352, %v352
      %v394 = vmul.f32 %v357, %v357
      %v395 = vmul.f32 %v360, %v360
      %v396 = vmul.f32 %v365, %v365
      %v397 = vmul.f32 %v368, %v368
      %v398 = vmul.f32 %v373, %v373
      %v399 = vmul.f32 %v376, %v376
      %v400 = vadd.f32 %v392, %v393
      %v401 = vadd.f32 %v400, %v394
      %v402 = vadd.f32 %v401, %v395
      %v403 = vadd.f32 %v402, %v396
      %v404 = vadd.f32 %v403, %v397
      %v405 = vadd.f32 %v404, %v398
      %v406 = vadd.f32 %v405, %v399
      %v407 = vrot.slane %v406, 4
      %v408 = vadd.f32 %v406, %v407
      %v409 = vrot.slane %v408, 2
      %v410 = vadd.f32 %v408, %v409
      %v411 = vrot.slane %v410, 1
      %v412 = vadd.f32 %v410, %v411
      %v413 = vmul.f32 %v391, 0.015625
      %v414 = vmul.f32 %v412, 0.015625
      %v415 = vmul.f32 %v413, %v413
      %v416 = vsub.f32 %v414, %v415
      %v417 = vmax.f32 %v416, 0.0
      %v418 = vadd.f32 %v417, 1e-05
      %v419 = vrsqrt.pop %v418
      %v420 = vsub.f32 %v349, %v413
      %v421 = vsub.f32 %v352, %v413
      %v422 = vsub.f32 %v357, %v413
      %v423 = vsub.f32 %v360, %v413
      %v424 = vsub.f32 %v365, %v413
      %v425 = vsub.f32 %v368, %v413
      %v426 = vsub.f32 %v373, %v413
      %v427 = vsub.f32 %v376, %v413
      %v428 = vmul.f32 %v420, %v419
      %v429 = vmul.f32 %v421, %v419
      %v430 = vmul.f32 %v422, %v419
      %v431 = vmul.f32 %v423, %v419
      %v432 = vmul.f32 %v424, %v419
      %v433 = vmul.f32 %v425, %v419
      %v434 = vmul.f32 %v426, %v419
      %v435 = vmul.f32 %v427, %v419
      %v436 = vmax.f32 %v428, 0.0
      %v437 = vmax.f32 %v429, 0.0
      %v438 = vmax.f32 %v430, 0.0
      %v439 = vmax.f32 %v431, 0.0
      %v440 = vmax.f32 %v432, 0.0
      %v441 = vmax.f32 %v433, 0.0
      %v442 = vmax.f32 %v434, 0.0
      %v443 = vmax.f32 %v435, 0.0
      %v444 = vpack.c.bf16 %v437, %v436
      %v445 = vpack.c.bf16 %v439, %v438
      %v446 = vpack.c.bf16 %v441, %v440
      %v447 = vpack.c.bf16 %v443, %v442
      %v452 = vunpack.c.l.b16 %v444
      %v453 = vunpack.c.h.b16 %v444
      %v454 = vunpack.c.l.b16 %v445
      %v455 = vunpack.c.h.b16 %v445
      %v456 = vunpack.c.l.b16 %v446
      %v457 = vunpack.c.h.b16 %v446
      %v458 = vunpack.c.l.b16 %v447
      %v459 = vunpack.c.h.b16 %v447
      %v460 = vpack.c.b16 %v452, %v452
      %v461 = vpack.c.b16 %v453, %v453
      %v462 = vpack.c.b16 %v454, %v454
      %v463 = vpack.c.b16 %v455, %v455
      %v464 = vpack.c.b16 %v456, %v456
      %v465 = vpack.c.b16 %v457, %v457
      %v466 = vpack.c.b16 %v458, %v458
      %v467 = vpack.c.b16 %v459, %v459
      %476 = vst [vmem:[%s208] sm:$0xf] %v460
      %477 = vst [vmem:[%s208 + $0x4] sm:$0xf] %v461
      %478 = vst [vmem:[%s208 + $0x8] sm:$0xf] %v462
      %479 = vst [vmem:[%s208 + $0xc] sm:$0xf] %v463
      %480 = vst [vmem:[%s208 + $0x10] sm:$0xf] %v464
      %481 = vst [vmem:[%s208 + $0x14] sm:$0xf] %v465
      %482 = vst [vmem:[%s208 + $0x18] sm:$0xf] %v466
      %483 = vst [vmem:[%s208 + $0x1c] sm:$0xf] %v467
      %s484 = smul.u32 8, %s19
      %p485 = scmp.lt.s32.totalorder %s18, 1
      %s486 = scalar_select %p485, %s18, 1
      %p487 = scmp.lt.s32.totalorder %s484, 7
      %s488 = scalar_select %p487, %s484, 7
      %s489 = smul.addr %s486, 8
      %s490 = sadd.s32 %s488, %s489
      %s491 = smul.addr %s490, 4
      %s492 = scalar_lea.vmem %s3, %s491
      // Predicated region
      $region33: #{generator_forward.11} parent=31 // pred_check
        %p493 = pneg %p116
      $region34: #{generator_forward.11} parent=31 // pred_check_branch
        %495 = sbr.rel (%p493) target = $region36
      $region35: #{generator_forward.11} parent=31 // pred_region
        %s496 = smul.u32 8, %s19
      $region36: #{generator_forward.11} parent=31 // pred_fallthru
        _
    $region32: #{generator_forward.11} parent=5 // pred_fallthru
      _
    %p497 = scmp.le.s32.totalorder 2, %s9
    // Predicated region
    $region37: #{generator_forward.11} parent=5 // pred_check
      %p498 = pneg %p497
    $region38: #{generator_forward.11} parent=5 // pred_check_branch
      %500 = sbr.rel (%p498) target = $region40
    $region39: #{generator_forward.11} parent=5 // pred_region
      %s501 = ssub.s32 %s9, 2
      // Predicated region
      $region41: #{generator_forward.11} parent=39 // pred_check
        %p502 = pneg %p122
      $region42: #{generator_forward.11} parent=39 // pred_check_branch
        %504 = sbr.rel (%p502) target = $region44
      $region43: #{generator_forward.11} parent=39 // pred_region
        %s505 = smul.u32 8, %s21
        %p506 = scmp.lt.s32.totalorder %s20, 1
        %s507 = scalar_select %p506, %s20, 1
        %p508 = scmp.lt.s32.totalorder %s505, 7
        %s509 = scalar_select %p508, %s505, 7
        %s510 = smul.addr %s507, 8
        %s511 = sadd.s32 %s509, %s510
        %s512 = smul.addr %s511, 4
        %s513 = scalar_lea.vmem %s3, %s512
      $region44: #{generator_forward.11} parent=39 // pred_fallthru
        _
    $region40: #{generator_forward.11} parent=5 // pred_fallthru
      _
  $region6: #{generator_forward.11} parent=0 // loop_footer
    %s13 = sadd.s32 1, %s9
  $region7: #{generator_forward.11} parent=0 // loop_footer_branch
    %8 = sbr.rel target = $region3
  $region8: #{generator_forward.11} parent=0 // loop_exit
    _

// kernel: generator_forward.12
$region0: #{generator_forward.12}
  #allocation0 [shape = 'u32[]', space=smem, size = 0x4, offset = 0x4, fixed_abs, tag = 'smem constant byte address 0x4 - core index']
  #allocation1 [shape = 'u32[144,128]{1,0:T(1,128)}', space=vmem, size = 0x12000, scoped, tag = 'internal scratch']
  %s0 = inlined_call_operand.vmem [shape: bf16[2,16,256], index: 0, kind: input, shape index: {}]
  %s1 = inlined_call_operand.vmem [shape: bf16[256,128], index: 1, kind: input, shape index: {}]
  %s2 = inlined_call_operand.vmem [shape: f32[1,128], index: 2, kind: input, shape index: {}]
  %s3 = inlined_call_operand.vmem [shape: bf16[2,16,128], index: 3, kind: output, shape index: {}]
  %s4 = sld [smem:[#allocation0]]
  $region45: #{generator_forward.12} parent=0
    _
  %s6 = ssub.s32 1, %s4
  %s7 = scalar_select 0, %s6, %s4
  loop: start=0, step=1, limit=4
  $region2: #{generator_forward.12} parent=0 // loop_pre_header
    _
  $region3: #{generator_forward.12} parent=0 // loop_header
    %s9 = sphi 0, %s13
    %p10 = scmp.ge.s32.totalorder %s9, 4
    %s16 = sphi 0, %s28
    %s17 = sphi 0, %s24
    %s18 = sphi 0, %s16
    %s19 = sphi 0, %s17
    %s20 = sphi 0, %s18
    %s21 = sphi 0, %s19
    %s33 = sphi 0, %s35
    %s36 = sphi 0, %s33
    %s37 = sphi 0, %s36
    %s53 = sphi 0, %s37
    %s57 = sphi 0, %s57
    %s59 = sphi 0, %s57
    %s60 = sphi 0, %s59
    %s74 = sphi 0, %s60
    %s78 = sphi 0, %s78
    %s80 = sphi 0, %s78
    %s81 = sphi 0, %s80
    %s95 = sphi 0, %s81
    %s103 = sphi 0, %s105
    %s106 = sphi 0, %s103
    %s107 = sphi 0, %s106
    %s123 = sphi 0, %s107
  $region4: #{generator_forward.12} parent=0 // loop_header_branch
    %12 = sbr.rel (%p10) target = $region8
  $region5: #{generator_forward.12} parent=0 // loop_body
    %s14 = ssub.s32 %s9, 1
    %s15 = ssub.s32 %s9, 2
    %s22 = sadd.s32 1, %s17
    %p23 = scmp.ge.s32.totalorder %s22, 1
    %s24 = scalar_select %p23, 0, %s22
    %s25 = sadd.s32 1, %s16
    %s26 = scalar_select %p23, %s25, %s16
    %p27 = scmp.ge.s32.totalorder %s26, 2
    %s28 = scalar_select %p27, 0, %s26
    %s29 = ssub.s32 %s16, %s28
    %s30 = ssub.s32 %s17, %s24
    %s31 = sor.u32 %s29, %s30
    %p32 = scmp.eq.s32.totalorder %s31, 0
    %s34 = sadd.s32 %s33, 1
    %s35 = scalar_select %p32, %s33, %s34
    %p38 = pneg %p32
    %p39 = scmp.eq.s32.totalorder %s9, 1
    %p40 = por %p38, %p39
    %p41 = scmp.ne.s32.totalorder %s33, %s36
    %p42 = scmp.eq.s32.totalorder %s9, 0
    %p43 = por %p41, %p42
    %p44 = scmp.ne.s32.totalorder %s33, %s36
    %p45 = scmp.eq.s32.totalorder %s14, 1
    %p46 = por %p44, %p45
    %p47 = scmp.ne.s32.totalorder %s36, %s37
    %p48 = scmp.eq.s32.totalorder %s14, 0
    %p49 = por %p47, %p48
    %p50 = scmp.ne.s32.totalorder %s36, %s37
    %p51 = scmp.eq.s32.totalorder %s15, 1
    %p52 = por %p50, %p51
    %p54 = scmp.ne.s32.totalorder %s37, %s53
    %p55 = scmp.eq.s32.totalorder %s15, 0
    %p56 = por %p54, %p55
    %s58 = sadd.s32 %s57, 1
    %p61 = scmp.eq.s32.totalorder %s9, 1
    %p62 = scmp.ne.s32.totalorder %s57, %s59
    %p63 = scmp.eq.s32.totalorder %s9, 0
    %p64 = por %p62, %p63
    %p65 = scmp.ne.s32.totalorder %s57, %s59
    %p66 = scmp.eq.s32.totalorder %s14, 1
    %p67 = por %p65, %p66
    %p68 = scmp.ne.s32.totalorder %s59, %s60
    %p69 = scmp.eq.s32.totalorder %s14, 0
    %p70 = por %p68, %p69
    %p71 = scmp.ne.s32.totalorder %s59, %s60
    %p72 = scmp.eq.s32.totalorder %s15, 1
    %p73 = por %p71, %p72
    %p75 = scmp.ne.s32.totalorder %s60, %s74
    %p76 = scmp.eq.s32.totalorder %s15, 0
    %p77 = por %p75, %p76
    %s79 = sadd.s32 %s78, 1
    %p82 = scmp.eq.s32.totalorder %s9, 1
    %p83 = scmp.ne.s32.totalorder %s78, %s80
    %p84 = scmp.eq.s32.totalorder %s9, 0
    %p85 = por %p83, %p84
    %p86 = scmp.ne.s32.totalorder %s78, %s80
    %p87 = scmp.eq.s32.totalorder %s14, 1
    %p88 = por %p86, %p87
    %p89 = scmp.ne.s32.totalorder %s80, %s81
    %p90 = scmp.eq.s32.totalorder %s14, 0
    %p91 = por %p89, %p90
    %p92 = scmp.ne.s32.totalorder %s80, %s81
    %p93 = scmp.eq.s32.totalorder %s15, 1
    %p94 = por %p92, %p93
    %p96 = scmp.ne.s32.totalorder %s81, %s95
    %p97 = scmp.eq.s32.totalorder %s15, 0
    %p98 = por %p96, %p97
    %s99 = ssub.s32 %s16, %s28
    %s100 = ssub.s32 %s17, %s24
    %s101 = sor.u32 %s99, %s100
    %p102 = scmp.eq.s32.totalorder %s101, 0
    %s104 = sadd.s32 %s103, 1
    %s105 = scalar_select %p102, %s103, %s104
    %p108 = pneg %p102
    %p109 = scmp.eq.s32.totalorder %s9, 1
    %p110 = por %p108, %p109
    %p111 = scmp.ne.s32.totalorder %s103, %s106
    %p112 = scmp.eq.s32.totalorder %s9, 0
    %p113 = por %p111, %p112
    %p114 = scmp.ne.s32.totalorder %s103, %s106
    %p115 = scmp.eq.s32.totalorder %s14, 1
    %p116 = por %p114, %p115
    %p117 = scmp.ne.s32.totalorder %s106, %s107
    %p118 = scmp.eq.s32.totalorder %s14, 0
    %p119 = por %p117, %p118
    %p120 = scmp.ne.s32.totalorder %s106, %s107
    %p121 = scmp.eq.s32.totalorder %s15, 1
    %p122 = por %p120, %p121
    %p124 = scmp.ne.s32.totalorder %s107, %s123
    %p125 = scmp.eq.s32.totalorder %s15, 0
    %p126 = por %p124, %p125
    %p127 = scmp.le.s32.totalorder 1, %s9
    %p128 = scmp.lt.s32.totalorder %s9, 3
    %p129 = pnand %p127, %p128
    %p130 = pneg %p129
    // Predicated region
    $region9: #{generator_forward.12} parent=5 // pred_check
      _
    $region10: #{generator_forward.12} parent=5 // pred_check_branch
      %132 = sbr.rel (%p129) target = $region12
    $region11: #{generator_forward.12} parent=5 // pred_region
      %s133 = ssub.s32 %s9, 1
      // Predicated region
      $region13: #{generator_forward.12} parent=11 // pred_check
        %p134 = pneg %p70
      $region14: #{generator_forward.12} parent=11 // pred_check_branch
        %136 = sbr.rel (%p134) target = $region16
      $region15: #{generator_forward.12} parent=11 // pred_region
        _
      $region16: #{generator_forward.12} parent=11 // pred_fallthru
        _
      // Predicated region
      $region17: #{generator_forward.12} parent=11 // pred_check
        %p137 = pneg %p91
      $region18: #{generator_forward.12} parent=11 // pred_check_branch
        %139 = sbr.rel (%p137) target = $region20
      $region19: #{generator_forward.12} parent=11 // pred_region
        _
      $region20: #{generator_forward.12} parent=11 // pred_fallthru
        _
    $region12: #{generator_forward.12} parent=5 // pred_fallthru
      _
    %p140 = scmp.lt.s32.totalorder %s9, 2
    // Predicated region
    $region21: #{generator_forward.12} parent=5 // pred_check
      %p141 = pneg %p140
    $region22: #{generator_forward.12} parent=5 // pred_check_branch
      %143 = sbr.rel (%p141) target = $region24
    $region23: #{generator_forward.12} parent=5 // pred_region
      // Predicated region
      $region25: #{generator_forward.12} parent=23 // pred_check
        %p144 = pneg %p43
      $region26: #{generator_forward.12} parent=23 // pred_check_branch
        %146 = sbr.rel (%p144) target = $region28
      $region27: #{generator_forward.12} parent=23 // pred_region
        %s147 = smul.u32 2, %s17
        %p148 = scmp.lt.s32.totalorder %s16, 1
        %s149 = scalar_select %p148, %s16, 1
        %p150 = scmp.lt.s32.totalorder %s147, 1
        %s151 = scalar_select %p150, %s147, 1
        %s152 = smul.addr %s151, 2
        %s153 = smul.addr %s149, 4
        %s154 = sadd.s32 %s152, %s153
        %s155 = smul.addr %s154, 4
        %s156 = scalar_lea.vmem %s0, %s155
        %s157 = smul.u32 2, %s17
      $region28: #{generator_forward.12} parent=23 // pred_fallthru
        _
    $region24: #{generator_forward.12} parent=5 // pred_fallthru
      _
    %p158 = scmp.le.s32.totalorder 1, %s9
    %p159 = scmp.lt.s32.totalorder %s9, 3
    %p160 = pnand %p158, %p159
    %p161 = pneg %p160
    // Predicated region
    $region29: #{generator_forward.12} parent=5 // pred_check
      _
    $region30: #{generator_forward.12} parent=5 // pred_check_branch
      %163 = sbr.rel (%p160) target = $region32
    $region31: #{generator_forward.12} parent=5 // pred_region
      %s164 = ssub.s32 %s9, 1
      %s165 = smul.u32 2, %s19
      %p166 = scmp.lt.s32.totalorder %s18, 1
      %s167 = scalar_select %p166, %s18, 1
      %p168 = scmp.lt.s32.totalorder %s165, 1
      %s169 = scalar_select %p168, %s165, 1
      %s170 = smul.addr %s169, 2
      %s171 = smul.addr %s167, 4
      %s172 = sadd.s32 %s170, %s171
      %s173 = smul.addr %s172, 4
      %s174 = scalar_lea.vmem %s0, %s173
      %p175 = pneg %p49
      %p176 = pneg %p46
      %p177 = pneg %p70
      %p178 = pneg %p67
      %p179 = pneg %p91
      %p180 = pneg %p88
      %p181 = pneg %p119
      %p182 = pneg %p116
      %s183 = smul.u32 2, %s19
      %p184 = scmp.lt.s32.totalorder %s18, 1
      %s185 = scalar_select %p184, %s18, 1
      %p186 = scmp.lt.s32.totalorder %s183, 1
      %s187 = scalar_select %p186, %s183, 1
      %s188 = smul.addr %s185, 2
      %s189 = sadd.s32 %s187, %s188
      %s190 = smul.addr %s189, 4
      %s191 = scalar_lea.vmem %s3, %s190
      %s192 = smul.u32 2, %s19
      %p193 = scmp.lt.s32.totalorder %s18, 1
      %s194 = scalar_select %p193, %s18, 1
      %p195 = scmp.lt.s32.totalorder %s192, 1
      %s196 = scalar_select %p195, %s192, 1
      %s197 = smul.addr %s196, 2
      %s198 = smul.addr %s194, 4
      %s199 = sadd.s32 %s197, %s198
      %s200 = smul.addr %s199, 4
      %s201 = scalar_lea.vmem %s0, %s200
      %s202 = smul.u32 2, %s19
      %s203 = smul.u32 2, %s19
      %p204 = scmp.lt.s32.totalorder %s18, 1
      %s205 = scalar_select %p204, %s18, 1
      %p206 = scmp.lt.s32.totalorder %s203, 1
      %s207 = scalar_select %p206, %s203, 1
      %s208 = smul.addr %s205, 2
      %s209 = sadd.s32 %s207, %s208
      %s210 = smul.addr %s209, 4
      %s211 = scalar_lea.vmem %s3, %s210
      %s212 = smul.u32 2, %s19
      %v214 = vld [vmem:[%s201] sm:$0xff]
      %v215 = vld [vmem:[%s201 + $0x8] sm:$0xff]
      %v216 = vld [vmem:[%s1] sm:$0xf]
      %v217 = vld [vmem:[%s1 + $0x4] sm:$0xf]
      %v218 = vld [vmem:[%s1 + $0x8] sm:$0xf]
      %v219 = vld [vmem:[%s1 + $0xc] sm:$0xf]
      %v220 = vld [vmem:[%s1 + $0x10] sm:$0xf]
      %v221 = vld [vmem:[%s1 + $0x14] sm:$0xf]
      %v222 = vld [vmem:[%s1 + $0x18] sm:$0xf]
      %v223 = vld [vmem:[%s1 + $0x1c] sm:$0xf]
      %v224 = vld [vmem:[%s1 + $0x20] sm:$0xf]
      %v225 = vld [vmem:[%s1 + $0x24] sm:$0xf]
      %v226 = vld [vmem:[%s1 + $0x28] sm:$0xf]
      %v227 = vld [vmem:[%s1 + $0x2c] sm:$0xf]
      %v228 = vld [vmem:[%s1 + $0x30] sm:$0xf]
      %v229 = vld [vmem:[%s1 + $0x34] sm:$0xf]
      %v230 = vld [vmem:[%s1 + $0x38] sm:$0xf]
      %v231 = vld [vmem:[%s1 + $0x3c] sm:$0xf]
      %v232 = vld [vmem:[%s1 + $0x40] sm:$0xf]
      %v233 = vld [vmem:[%s1 + $0x44] sm:$0xf]
      %v234 = vld [vmem:[%s1 + $0x48] sm:$0xf]
      %v235 = vld [vmem:[%s1 + $0x4c] sm:$0xf]
      %v236 = vld [vmem:[%s1 + $0x50] sm:$0xf]
      %v237 = vld [vmem:[%s1 + $0x54] sm:$0xf]
      %v238 = vld [vmem:[%s1 + $0x58] sm:$0xf]
      %v239 = vld [vmem:[%s1 + $0x5c] sm:$0xf]
      %v240 = vld [vmem:[%s1 + $0x60] sm:$0xf]
      %v241 = vld [vmem:[%s1 + $0x64] sm:$0xf]
      %v242 = vld [vmem:[%s1 + $0x68] sm:$0xf]
      %v243 = vld [vmem:[%s1 + $0x6c] sm:$0xf]
      %v244 = vld [vmem:[%s1 + $0x70] sm:$0xf]
      %v245 = vld [vmem:[%s1 + $0x74] sm:$0xf]
      %v246 = vld [vmem:[%s1 + $0x78] sm:$0xf]
      %v247 = vld [vmem:[%s1 + $0x7c] sm:$0xf]
      %v248 = vld [vmem:[%s2] sm:$0x1]
      %v250 = vlaneseq
      %v251 = vshrl.u32 %v250, 7
      %v252 = vsub.s32 0, %v251
      %v253 = vrot.slane %v248, %v252
      %v257 = vunpack.c.l.b16 %v214
      %v258 = vunpack.c.h.b16 %v214
      %v259 = vunpack.c.l.b16 %v215
      %v260 = vunpack.c.h.b16 %v215
      %v261 = vpack.c.b16 %v259, %v257
      %v262 = vpack.c.b16 %v260, %v258
      %v297 = vunpack.c.l.b16 %v216
      %v298 = vunpack.c.l.b16 %v217
      %v299 = vunpack.c.l.b16 %v218
      %v300 = vunpack.c.l.b16 %v219
      %v301 = vunpack.c.l.b16 %v220
      %v302 = vunpack.c.l.b16 %v221
      %v303 = vunpack.c.l.b16 %v222
      %v304 = vunpack.c.l.b16 %v223
      %v305 = vunpack.c.l.b16 %v224
      %v306 = vunpack.c.l.b16 %v225
      %v307 = vunpack.c.l.b16 %v226
      %v308 = vunpack.c.l.b16 %v227
      %v309 = vunpack.c.l.b16 %v228
      %v310 = vunpack.c.l.b16 %v229
      %v311 = vunpack.c.l.b16 %v230
      %v312 = vunpack.c.l.b16 %v231
      %v313 = vunpack.c.l.b16 %v232
      %v314 = vunpack.c.l.b16 %v233
      %v315 = vunpack.c.l.b16 %v234
      %v316 = vunpack.c.l.b16 %v235
      %v317 = vunpack.c.l.b16 %v236
      %v318 = vunpack.c.l.b16 %v237
      %v319 = vunpack.c.l.b16 %v238
      %v320 = vunpack.c.l.b16 %v239
      %v321 = vunpack.c.l.b16 %v240
      %v322 = vunpack.c.l.b16 %v241
      %v323 = vunpack.c.l.b16 %v242
      %v324 = vunpack.c.l.b16 %v243
      %v325 = vunpack.c.l.b16 %v244
      %v326 = vunpack.c.l.b16 %v245
      %v327 = vunpack.c.l.b16 %v246
      %v328 = vunpack.c.l.b16 %v247
      %v329 = vpack.c.b16 %v298, %v297
      %v330 = vpack.c.b16 %v300, %v299
      %v331 = vpack.c.b16 %v302, %v301
      %v332 = vpack.c.b16 %v304, %v303
      %v333 = vpack.c.b16 %v306, %v305
      %v334 = vpack.c.b16 %v308, %v307
      %v335 = vpack.c.b16 %v310, %v309
      %v336 = vpack.c.b16 %v312, %v311
      %v337 = vpack.c.b16 %v314, %v313
      %v338 = vpack.c.b16 %v316, %v315
      %v339 = vpack.c.b16 %v318, %v317
      %v340 = vpack.c.b16 %v320, %v319
      %v341 = vpack.c.b16 %v322, %v321
      %v342 = vpack.c.b16 %v324, %v323
      %v343 = vpack.c.b16 %v326, %v325
      %v344 = vpack.c.b16 %v328, %v327
      %361 = vmatprep.subr.bf16.mxu0 0
      %362 = vmatpush1.bf16.msra.mxu0 %v336
      %363 = vmatprep.subr.bf16.mxu0 0
      %364 = vmatpush1.bf16.msra.mxu0 %v335
      %365 = vmatprep.subr.bf16.mxu0 0
      %366 = vmatpush1.bf16.msra.mxu0 %v334
      %367 = vmatprep.subr.bf16.mxu0 0
      %368 = vmatpush1.bf16.msra.mxu0 %v333
      %369 = vmatprep.subr.bf16.mxu0 0
      %370 = vmatpush1.bf16.msra.mxu0 %v332
      %371 = vmatprep.subr.bf16.mxu0 0
      %372 = vmatpush1.bf16.msra.mxu0 %v331
      %373 = vmatprep.subr.bf16.mxu0 0
      %374 = vmatpush1.bf16.msra.mxu0 %v330
      %375 = vmatprep.subr.bf16.mxu0 0
      %376 = vmatpush1.bf16.msra.mxu0 %v329
      %377 = vmatprep.subr.bf16.mxu0 0
      %378 = vmatpush2.bf16.msra.mxu0 %v344
      %379 = vmatprep.subr.bf16.mxu0 0
      %380 = vmatpush2.bf16.msra.mxu0 %v343
      %381 = vmatprep.subr.bf16.mxu0 0
      %382 = vmatpush2.bf16.msra.mxu0 %v342
      %383 = vmatprep.subr.bf16.mxu0 0
      %384 = vmatpush2.bf16.msra.mxu0 %v341
      %385 = vmatprep.subr.bf16.mxu0 0
      %386 = vmatpush2.bf16.msra.mxu0 %v340
      %387 = vmatprep.subr.bf16.mxu0 0
      %388 = vmatpush2.bf16.msra.mxu0 %v339
      %389 = vmatprep.subr.bf16.mxu0 0
      %390 = vmatpush2.bf16.msra.mxu0 %v338
      %391 = vmatprep.subr.bf16.mxu0 0
      %392 = vmatpush2.bf16.msra.mxu0 %v337
      %393 = vmatprep.mubr.bf16.mxu0 %v262
      %394 = vmatmul.mubr.bf16.gmra.mxu0 %v261
      %v395 = vpop.f32.mrf.mxu0
      %v396 = vadd.f32 %v253, %v395
      %v397 = vpop.f32.mrf.mxu0
      %v398 = vpop.f32.mrf.mxu0
      %v399 = vadd.f32 %v253, %v398
      %v400 = vpop.f32.mrf.mxu0
      %401 = vdwg.mxu0
      %v402 = vadd.f32 %v396, %v399
      %v403 = vrot.slane %v402, 4
      %v404 = vadd.f32 %v402, %v403
      %v405 = vrot.slane %v404, 2
      %v406 = vadd.f32 %v404, %v405
      %v407 = vrot.slane %v406, 1
      %v408 = vadd.f32 %v406, %v407
      %v409 = vmul.f32 %v396, %v396
      %v410 = vmul.f32 %v399, %v399
      %v411 = vadd.f32 %v409, %v410
      %v412 = vrot.slane %v411, 4
      %v413 = vadd.f32 %v411, %v412
      %v414 = vrot.slane %v413, 2
      %v415 = vadd.f32 %v413, %v414
      %v416 = vrot.slane %v415, 1
      %v417 = vadd.f32 %v415, %v416
      %v418 = vmul.f32 %v408, 0.0625
      %v419 = vmul.f32 %v417, 0.0625
      %v420 = vmul.f32 %v418, %v418
      %v421 = vsub.f32 %v419, %v420
      %v422 = vmax.f32 %v421, 0.0
      %v423 = vadd.f32 %v422, 1e-05
      %v424 = vrsqrt.pop %v423
      %v425 = vsub.f32 %v396, %v418
      %v426 = vsub.f32 %v399, %v418
      %v427 = vmul.f32 %v425, %v424
      %v428 = vmul.f32 %v426, %v424
      %v429 = vmax.f32 %v427, 0.0
      %v430 = vmax.f32 %v428, 0.0
      %v431 = vpack.c.bf16 %v430, %v429
      %v433 = vunpack.c.l.b16 %v431
      %v434 = vunpack.c.h.b16 %v431
      %v435 = vpack.c.b16 %v433, %v433
      %v436 = vpack.c.b16 %v434, %v434
      %439 = vst [vmem:[%s211] sm:$0xf] %v435
      %440 = vst [vmem:[%s211 + $0x4] sm:$0xf] %v436
      %s441 = smul.u32 2, %s19
      %p442 = scmp.lt.s32.totalorder %s18, 1
      %s443 = scalar_select %p442, %s18, 1
      %p444 = scmp.lt.s32.totalorder %s441, 1
      %s445 = scalar_select %p444, %s441, 1
      %s446 = smul.addr %s443, 2
      %s447 = sadd.s32 %s445, %s446
      %s448 = smul.addr %s447, 4
      %s449 = scalar_lea.vmem %s3, %s448
      // Predicated region
      $region33: #{generator_forward.12} parent=31 // pred_check
        %p450 = pneg %p116
      $region34: #{generator_forward.12} parent=31 // pred_check_branch
        %452 = sbr.rel (%p450) target = $region36
      $region35: #{generator_forward.12} parent=31 // pred_region
        %s453 = smul.u32 2, %s19
      $region36: #{generator_forward.12} parent=31 // pred_fallthru
        _
    $region32: #{generator_forward.12} parent=5 // pred_fallthru
      _
    %p454 = scmp.le.s32.totalorder 2, %s9
    // Predicated region
    $region37: #{generator_forward.12} parent=5 // pred_check
      %p455 = pneg %p454
    $region38: #{generator_forward.12} parent=5 // pred_check_branch
      %457 = sbr.rel (%p455) target = $region40
    $region39: #{generator_forward.12} parent=5 // pred_region
      %s458 = ssub.s32 %s9, 2
      // Predicated region
      $region41: #{generator_forward.12} parent=39 // pred_check
        %p459 = pneg %p122
      $region42: #{generator_forward.12} parent=39 // pred_check_branch
        %461 = sbr.rel (%p459) target = $region44
      $region43: #{generator_forward.12} parent=39 // pred_region
        %s462 = smul.u32 2, %s21
        %p463 = scmp.lt.s32.totalorder %s20, 1
        %s464 = scalar_select %p463, %s20, 1
        %p465 = scmp.lt.s32.totalorder %s462, 1
        %s466 = scalar_select %p465, %s462, 1
        %s467 = smul.addr %s464, 2
        %s468 = sadd.s32 %s466, %s467
        %s469 = smul.addr %s468, 4
        %s470 = scalar_lea.vmem %s3, %s469
      $region44: #{generator_forward.12} parent=39 // pred_fallthru
        _
    $region40: #{generator_forward.12} parent=5 // pred_fallthru
      _
  $region6: #{generator_forward.12} parent=0 // loop_footer
    %s13 = sadd.s32 1, %s9
  $region7: #{generator_forward.12} parent=0 // loop_footer_branch
    %8 = sbr.rel target = $region3
  $region8: #{generator_forward.12} parent=0 // loop_exit
    _

// kernel: generator_forward.13
$region0: #{generator_forward.13}
  #allocation0 [shape = 'u32[]', space=smem, size = 0x4, offset = 0x4, fixed_abs, tag = 'smem constant byte address 0x4 - core index']
  #allocation1 [shape = 'u32[144,128]{1,0:T(1,128)}', space=vmem, size = 0x12000, scoped, tag = 'internal scratch']
  %s0 = inlined_call_operand.vmem [shape: bf16[2,16,384], index: 0, kind: input, shape index: {}]
  %s1 = inlined_call_operand.vmem [shape: bf16[384,128], index: 1, kind: input, shape index: {}]
  %s2 = inlined_call_operand.vmem [shape: f32[1,128], index: 2, kind: input, shape index: {}]
  %s3 = inlined_call_operand.vmem [shape: bf16[2,16,128], index: 3, kind: output, shape index: {}]
  %s4 = sld [smem:[#allocation0]]
  $region45: #{generator_forward.13} parent=0
    _
  %s6 = ssub.s32 1, %s4
  %s7 = scalar_select 0, %s6, %s4
  loop: start=0, step=1, limit=4
  $region2: #{generator_forward.13} parent=0 // loop_pre_header
    _
  $region3: #{generator_forward.13} parent=0 // loop_header
    %s9 = sphi 0, %s13
    %p10 = scmp.ge.s32.totalorder %s9, 4
    %s16 = sphi 0, %s28
    %s17 = sphi 0, %s24
    %s18 = sphi 0, %s16
    %s19 = sphi 0, %s17
    %s20 = sphi 0, %s18
    %s21 = sphi 0, %s19
    %s33 = sphi 0, %s35
    %s36 = sphi 0, %s33
    %s37 = sphi 0, %s36
    %s53 = sphi 0, %s37
    %s57 = sphi 0, %s57
    %s59 = sphi 0, %s57
    %s60 = sphi 0, %s59
    %s74 = sphi 0, %s60
    %s78 = sphi 0, %s78
    %s80 = sphi 0, %s78
    %s81 = sphi 0, %s80
    %s95 = sphi 0, %s81
    %s103 = sphi 0, %s105
    %s106 = sphi 0, %s103
    %s107 = sphi 0, %s106
    %s123 = sphi 0, %s107
  $region4: #{generator_forward.13} parent=0 // loop_header_branch
    %12 = sbr.rel (%p10) target = $region8
  $region5: #{generator_forward.13} parent=0 // loop_body
    %s14 = ssub.s32 %s9, 1
    %s15 = ssub.s32 %s9, 2
    %s22 = sadd.s32 1, %s17
    %p23 = scmp.ge.s32.totalorder %s22, 1
    %s24 = scalar_select %p23, 0, %s22
    %s25 = sadd.s32 1, %s16
    %s26 = scalar_select %p23, %s25, %s16
    %p27 = scmp.ge.s32.totalorder %s26, 2
    %s28 = scalar_select %p27, 0, %s26
    %s29 = ssub.s32 %s16, %s28
    %s30 = ssub.s32 %s17, %s24
    %s31 = sor.u32 %s29, %s30
    %p32 = scmp.eq.s32.totalorder %s31, 0
    %s34 = sadd.s32 %s33, 1
    %s35 = scalar_select %p32, %s33, %s34
    %p38 = pneg %p32
    %p39 = scmp.eq.s32.totalorder %s9, 1
    %p40 = por %p38, %p39
    %p41 = scmp.ne.s32.totalorder %s33, %s36
    %p42 = scmp.eq.s32.totalorder %s9, 0
    %p43 = por %p41, %p42
    %p44 = scmp.ne.s32.totalorder %s33, %s36
    %p45 = scmp.eq.s32.totalorder %s14, 1
    %p46 = por %p44, %p45
    %p47 = scmp.ne.s32.totalorder %s36, %s37
    %p48 = scmp.eq.s32.totalorder %s14, 0
    %p49 = por %p47, %p48
    %p50 = scmp.ne.s32.totalorder %s36, %s37
    %p51 = scmp.eq.s32.totalorder %s15, 1
    %p52 = por %p50, %p51
    %p54 = scmp.ne.s32.totalorder %s37, %s53
    %p55 = scmp.eq.s32.totalorder %s15, 0
    %p56 = por %p54, %p55
    %s58 = sadd.s32 %s57, 1
    %p61 = scmp.eq.s32.totalorder %s9, 1
    %p62 = scmp.ne.s32.totalorder %s57, %s59
    %p63 = scmp.eq.s32.totalorder %s9, 0
    %p64 = por %p62, %p63
    %p65 = scmp.ne.s32.totalorder %s57, %s59
    %p66 = scmp.eq.s32.totalorder %s14, 1
    %p67 = por %p65, %p66
    %p68 = scmp.ne.s32.totalorder %s59, %s60
    %p69 = scmp.eq.s32.totalorder %s14, 0
    %p70 = por %p68, %p69
    %p71 = scmp.ne.s32.totalorder %s59, %s60
    %p72 = scmp.eq.s32.totalorder %s15, 1
    %p73 = por %p71, %p72
    %p75 = scmp.ne.s32.totalorder %s60, %s74
    %p76 = scmp.eq.s32.totalorder %s15, 0
    %p77 = por %p75, %p76
    %s79 = sadd.s32 %s78, 1
    %p82 = scmp.eq.s32.totalorder %s9, 1
    %p83 = scmp.ne.s32.totalorder %s78, %s80
    %p84 = scmp.eq.s32.totalorder %s9, 0
    %p85 = por %p83, %p84
    %p86 = scmp.ne.s32.totalorder %s78, %s80
    %p87 = scmp.eq.s32.totalorder %s14, 1
    %p88 = por %p86, %p87
    %p89 = scmp.ne.s32.totalorder %s80, %s81
    %p90 = scmp.eq.s32.totalorder %s14, 0
    %p91 = por %p89, %p90
    %p92 = scmp.ne.s32.totalorder %s80, %s81
    %p93 = scmp.eq.s32.totalorder %s15, 1
    %p94 = por %p92, %p93
    %p96 = scmp.ne.s32.totalorder %s81, %s95
    %p97 = scmp.eq.s32.totalorder %s15, 0
    %p98 = por %p96, %p97
    %s99 = ssub.s32 %s16, %s28
    %s100 = ssub.s32 %s17, %s24
    %s101 = sor.u32 %s99, %s100
    %p102 = scmp.eq.s32.totalorder %s101, 0
    %s104 = sadd.s32 %s103, 1
    %s105 = scalar_select %p102, %s103, %s104
    %p108 = pneg %p102
    %p109 = scmp.eq.s32.totalorder %s9, 1
    %p110 = por %p108, %p109
    %p111 = scmp.ne.s32.totalorder %s103, %s106
    %p112 = scmp.eq.s32.totalorder %s9, 0
    %p113 = por %p111, %p112
    %p114 = scmp.ne.s32.totalorder %s103, %s106
    %p115 = scmp.eq.s32.totalorder %s14, 1
    %p116 = por %p114, %p115
    %p117 = scmp.ne.s32.totalorder %s106, %s107
    %p118 = scmp.eq.s32.totalorder %s14, 0
    %p119 = por %p117, %p118
    %p120 = scmp.ne.s32.totalorder %s106, %s107
    %p121 = scmp.eq.s32.totalorder %s15, 1
    %p122 = por %p120, %p121
    %p124 = scmp.ne.s32.totalorder %s107, %s123
    %p125 = scmp.eq.s32.totalorder %s15, 0
    %p126 = por %p124, %p125
    %p127 = scmp.le.s32.totalorder 1, %s9
    %p128 = scmp.lt.s32.totalorder %s9, 3
    %p129 = pnand %p127, %p128
    %p130 = pneg %p129
    // Predicated region
    $region9: #{generator_forward.13} parent=5 // pred_check
      _
    $region10: #{generator_forward.13} parent=5 // pred_check_branch
      %132 = sbr.rel (%p129) target = $region12
    $region11: #{generator_forward.13} parent=5 // pred_region
      %s133 = ssub.s32 %s9, 1
      // Predicated region
      $region13: #{generator_forward.13} parent=11 // pred_check
        %p134 = pneg %p70
      $region14: #{generator_forward.13} parent=11 // pred_check_branch
        %136 = sbr.rel (%p134) target = $region16
      $region15: #{generator_forward.13} parent=11 // pred_region
        _
      $region16: #{generator_forward.13} parent=11 // pred_fallthru
        _
      // Predicated region
      $region17: #{generator_forward.13} parent=11 // pred_check
        %p137 = pneg %p91
      $region18: #{generator_forward.13} parent=11 // pred_check_branch
        %139 = sbr.rel (%p137) target = $region20
      $region19: #{generator_forward.13} parent=11 // pred_region
        _
      $region20: #{generator_forward.13} parent=11 // pred_fallthru
        _
    $region12: #{generator_forward.13} parent=5 // pred_fallthru
      _
    %p140 = scmp.lt.s32.totalorder %s9, 2
    // Predicated region
    $region21: #{generator_forward.13} parent=5 // pred_check
      %p141 = pneg %p140
    $region22: #{generator_forward.13} parent=5 // pred_check_branch
      %143 = sbr.rel (%p141) target = $region24
    $region23: #{generator_forward.13} parent=5 // pred_region
      // Predicated region
      $region25: #{generator_forward.13} parent=23 // pred_check
        %p144 = pneg %p43
      $region26: #{generator_forward.13} parent=23 // pred_check_branch
        %146 = sbr.rel (%p144) target = $region28
      $region27: #{generator_forward.13} parent=23 // pred_region
        %s147 = smul.u32 2, %s17
        %p148 = scmp.lt.s32.totalorder %s16, 1
        %s149 = scalar_select %p148, %s16, 1
        %p150 = scmp.lt.s32.totalorder %s147, 1
        %s151 = scalar_select %p150, %s147, 1
        %s152 = smul.addr %s151, 3
        %s153 = smul.addr %s149, 6
        %s154 = sadd.s32 %s152, %s153
        %s155 = smul.addr %s154, 4
        %s156 = scalar_lea.vmem %s0, %s155
        %s157 = smul.u32 2, %s17
      $region28: #{generator_forward.13} parent=23 // pred_fallthru
        _
    $region24: #{generator_forward.13} parent=5 // pred_fallthru
      _
    %p158 = scmp.le.s32.totalorder 1, %s9
    %p159 = scmp.lt.s32.totalorder %s9, 3
    %p160 = pnand %p158, %p159
    %p161 = pneg %p160
    // Predicated region
    $region29: #{generator_forward.13} parent=5 // pred_check
      _
    $region30: #{generator_forward.13} parent=5 // pred_check_branch
      %163 = sbr.rel (%p160) target = $region32
    $region31: #{generator_forward.13} parent=5 // pred_region
      %s164 = ssub.s32 %s9, 1
      %s165 = smul.u32 2, %s19
      %p166 = scmp.lt.s32.totalorder %s18, 1
      %s167 = scalar_select %p166, %s18, 1
      %p168 = scmp.lt.s32.totalorder %s165, 1
      %s169 = scalar_select %p168, %s165, 1
      %s170 = smul.addr %s169, 3
      %s171 = smul.addr %s167, 6
      %s172 = sadd.s32 %s170, %s171
      %s173 = smul.addr %s172, 4
      %s174 = scalar_lea.vmem %s0, %s173
      %p175 = pneg %p49
      %p176 = pneg %p46
      %p177 = pneg %p70
      %p178 = pneg %p67
      %p179 = pneg %p91
      %p180 = pneg %p88
      %p181 = pneg %p119
      %p182 = pneg %p116
      %s183 = smul.u32 2, %s19
      %p184 = scmp.lt.s32.totalorder %s18, 1
      %s185 = scalar_select %p184, %s18, 1
      %p186 = scmp.lt.s32.totalorder %s183, 1
      %s187 = scalar_select %p186, %s183, 1
      %s188 = smul.addr %s185, 2
      %s189 = sadd.s32 %s187, %s188
      %s190 = smul.addr %s189, 4
      %s191 = scalar_lea.vmem %s3, %s190
      %s192 = smul.u32 2, %s19
      %p193 = scmp.lt.s32.totalorder %s18, 1
      %s194 = scalar_select %p193, %s18, 1
      %p195 = scmp.lt.s32.totalorder %s192, 1
      %s196 = scalar_select %p195, %s192, 1
      %s197 = smul.addr %s196, 3
      %s198 = smul.addr %s194, 6
      %s199 = sadd.s32 %s197, %s198
      %s200 = smul.addr %s199, 4
      %s201 = scalar_lea.vmem %s0, %s200
      %s202 = smul.u32 2, %s19
      %s203 = smul.u32 2, %s19
      %p204 = scmp.lt.s32.totalorder %s18, 1
      %s205 = scalar_select %p204, %s18, 1
      %p206 = scmp.lt.s32.totalorder %s203, 1
      %s207 = scalar_select %p206, %s203, 1
      %s208 = smul.addr %s205, 2
      %s209 = sadd.s32 %s207, %s208
      %s210 = smul.addr %s209, 4
      %s211 = scalar_lea.vmem %s3, %s210
      %s212 = smul.u32 2, %s19
      %v214 = vld [vmem:[%s201] sm:$0xff]
      %v215 = vld [vmem:[%s201 + $0x8] sm:$0xf]
      %v216 = vld [vmem:[%s201 + $0xc] sm:$0xff]
      %v217 = vld [vmem:[%s201 + $0x14] sm:$0xf]
      %v218 = vld [vmem:[%s1] sm:$0xf]
      %v219 = vld [vmem:[%s1 + $0x4] sm:$0xf]
      %v220 = vld [vmem:[%s1 + $0x8] sm:$0xf]
      %v221 = vld [vmem:[%s1 + $0xc] sm:$0xf]
      %v222 = vld [vmem:[%s1 + $0x10] sm:$0xf]
      %v223 = vld [vmem:[%s1 + $0x14] sm:$0xf]
      %v224 = vld [vmem:[%s1 + $0x18] sm:$0xf]
      %v225 = vld [vmem:[%s1 + $0x1c] sm:$0xf]
      %v226 = vld [vmem:[%s1 + $0x20] sm:$0xf]
      %v227 = vld [vmem:[%s1 + $0x24] sm:$0xf]
      %v228 = vld [vmem:[%s1 + $0x28] sm:$0xf]
      %v229 = vld [vmem:[%s1 + $0x2c] sm:$0xf]
      %v230 = vld [vmem:[%s1 + $0x30] sm:$0xf]
      %v231 = vld [vmem:[%s1 + $0x34] sm:$0xf]
      %v232 = vld [vmem:[%s1 + $0x38] sm:$0xf]
      %v233 = vld [vmem:[%s1 + $0x3c] sm:$0xf]
      %v234 = vld [vmem:[%s1 + $0x40] sm:$0xf]
      %v235 = vld [vmem:[%s1 + $0x44] sm:$0xf]
      %v236 = vld [vmem:[%s1 + $0x48] sm:$0xf]
      %v237 = vld [vmem:[%s1 + $0x4c] sm:$0xf]
      %v238 = vld [vmem:[%s1 + $0x50] sm:$0xf]
      %v239 = vld [vmem:[%s1 + $0x54] sm:$0xf]
      %v240 = vld [vmem:[%s1 + $0x58] sm:$0xf]
      %v241 = vld [vmem:[%s1 + $0x5c] sm:$0xf]
      %v242 = vld [vmem:[%s1 + $0x60] sm:$0xf]
      %v243 = vld [vmem:[%s1 + $0x64] sm:$0xf]
      %v244 = vld [vmem:[%s1 + $0x68] sm:$0xf]
      %v245 = vld [vmem:[%s1 + $0x6c] sm:$0xf]
      %v246 = vld [vmem:[%s1 + $0x70] sm:$0xf]
      %v247 = vld [vmem:[%s1 + $0x74] sm:$0xf]
      %v248 = vld [vmem:[%s1 + $0x78] sm:$0xf]
      %v249 = vld [vmem:[%s1 + $0x7c] sm:$0xf]
      %v250 = vld [vmem:[%s1 + $0x80] sm:$0xf]
      %v251 = vld [vmem:[%s1 + $0x84] sm:$0xf]
      %v252 = vld [vmem:[%s1 + $0x88] sm:$0xf]
      %v253 = vld [vmem:[%s1 + $0x8c] sm:$0xf]
      %v254 = vld [vmem:[%s1 + $0x90] sm:$0xf]
      %v255 = vld [vmem:[%s1 + $0x94] sm:$0xf]
      %v256 = vld [vmem:[%s1 + $0x98] sm:$0xf]
      %v257 = vld [vmem:[%s1 + $0x9c] sm:$0xf]
      %v258 = vld [vmem:[%s1 + $0xa0] sm:$0xf]
      %v259 = vld [vmem:[%s1 + $0xa4] sm:$0xf]
      %v260 = vld [vmem:[%s1 + $0xa8] sm:$0xf]
      %v261 = vld [vmem:[%s1 + $0xac] sm:$0xf]
      %v262 = vld [vmem:[%s1 + $0xb0] sm:$0xf]
      %v263 = vld [vmem:[%s1 + $0xb4] sm:$0xf]
      %v264 = vld [vmem:[%s1 + $0xb8] sm:$0xf]
      %v265 = vld [vmem:[%s1 + $0xbc] sm:$0xf]
      %v266 = vld [vmem:[%s2] sm:$0x1]
      %v268 = vlaneseq
      %v269 = vshrl.u32 %v268, 7
      %v270 = vsub.s32 0, %v269
      %v271 = vrot.slane %v266, %v270
      %v277 = vunpack.c.l.b16 %v214
      %v278 = vunpack.c.h.b16 %v214
      %v279 = vunpack.c.l.b16 %v215
      %v280 = vunpack.c.l.b16 %v216
      %v281 = vunpack.c.h.b16 %v216
      %v282 = vunpack.c.l.b16 %v217
      %v283 = vpack.c.b16 %v280, %v277
      %v284 = vpack.c.b16 %v281, %v278
      %v285 = vpack.c.b16 %v282, %v279
      %v337 = vunpack.c.l.b16 %v218
      %v338 = vunpack.c.l.b16 %v219
      %v339 = vunpack.c.l.b16 %v220
      %v340 = vunpack.c.l.b16 %v221
      %v341 = vunpack.c.l.b16 %v222
      %v342 = vunpack.c.l.b16 %v223
      %v343 = vunpack.c.l.b16 %v224
      %v344 = vunpack.c.l.b16 %v225
      %v345 = vunpack.c.l.b16 %v226
      %v346 = vunpack.c.l.b16 %v227
      %v347 = vunpack.c.l.b16 %v228
      %v348 = vunpack.c.l.b16 %v229
      %v349 = vunpack.c.l.b16 %v230
      %v350 = vunpack.c.l.b16 %v231
      %v351 = vunpack.c.l.b16 %v232
      %v352 = vunpack.c.l.b16 %v233
      %v353 = vunpack.c.l.b16 %v234
      %v354 = vunpack.c.l.b16 %v235
      %v355 = vunpack.c.l.b16 %v236
      %v356 = vunpack.c.l.b16 %v237
      %v357 = vunpack.c.l.b16 %v238
      %v358 = vunpack.c.l.b16 %v239
      %v359 = vunpack.c.l.b16 %v240
      %v360 = vunpack.c.l.b16 %v241
      %v361 = vunpack.c.l.b16 %v242
      %v362 = vunpack.c.l.b16 %v243
      %v363 = vunpack.c.l.b16 %v244
      %v364 = vunpack.c.l.b16 %v245
      %v365 = vunpack.c.l.b16 %v246
      %v366 = vunpack.c.l.b16 %v247
      %v367 = vunpack.c.l.b16 %v248
      %v368 = vunpack.c.l.b16 %v249
      %v369 = vunpack.c.l.b16 %v250
      %v370 = vunpack.c.l.b16 %v251
      %v371 = vunpack.c.l.b16 %v252
      %v372 = vunpack.c.l.b16 %v253
      %v373 = vunpack.c.l.b16 %v254
      %v374 = vunpack.c.l.b16 %v255
      %v375 = vunpack.c.l.b16 %v256
      %v376 = vunpack.c.l.b16 %v257
      %v377 = vunpack.c.l.b16 %v258
      %v378 = vunpack.c.l.b16 %v259
      %v379 = vunpack.c.l.b16 %v260
      %v380 = vunpack.c.l.b16 %v261
      %v381 = vunpack.c.l.b16 %v262
      %v382 = vunpack.c.l.b16 %v263
      %v383 = vunpack.c.l.b16 %v264
      %v384 = vunpack.c.l.b16 %v265
      %v385 = vpack.c.b16 %v338, %v337
      %v386 = vpack.c.b16 %v340, %v339
      %v387 = vpack.c.b16 %v342, %v341
      %v388 = vpack.c.b16 %v344, %v343
      %v389 = vpack.c.b16 %v346, %v345
      %v390 = vpack.c.b16 %v348, %v347
      %v391 = vpack.c.b16 %v350, %v349
      %v392 = vpack.c.b16 %v352, %v351
      %v393 = vpack.c.b16 %v354, %v353
      %v394 = vpack.c.b16 %v356, %v355
      %v395 = vpack.c.b16 %v358, %v357
      %v396 = vpack.c.b16 %v360, %v359
      %v397 = vpack.c.b16 %v362, %v361
      %v398 = vpack.c.b16 %v364, %v363
      %v399 = vpack.c.b16 %v366, %v365
      %v400 = vpack.c.b16 %v368, %v367
      %v401 = vpack.c.b16 %v370, %v369
      %v402 = vpack.c.b16 %v372, %v371
      %v403 = vpack.c.b16 %v374, %v373
      %v404 = vpack.c.b16 %v376, %v375
      %v405 = vpack.c.b16 %v378, %v377
      %v406 = vpack.c.b16 %v380, %v379
      %v407 = vpack.c.b16 %v382, %v381
      %v408 = vpack.c.b16 %v384, %v383
      %433 = vmatprep.subr.bf16.mxu0 0
      %434 = vmatpush1.bf16.msra.mxu0 %v392
      %435 = vmatprep.subr.bf16.mxu0 0
      %436 = vmatpush1.bf16.msra.mxu0 %v391
      %437 = vmatprep.subr.bf16.mxu0 0
      %438 = vmatpush1.bf16.msra.mxu0 %v390
      %439 = vmatprep.subr.bf16.mxu0 0
      %440 = vmatpush1.bf16.msra.mxu0 %v389
      %441 = vmatprep.subr.bf16.mxu0 0
      %442 = vmatpush1.bf16.msra.mxu0 %v388
      %443 = vmatprep.subr.bf16.mxu0 0
      %444 = vmatpush1.bf16.msra.mxu0 %v387
      %445 = vmatprep.subr.bf16.mxu0 0
      %446 = vmatpush1.bf16.msra.mxu0 %v386
      %447 = vmatprep.subr.bf16.mxu0 0
      %448 = vmatpush1.bf16.msra.mxu0 %v385
      %449 = vmatprep.subr.bf16.mxu0 0
      %450 = vmatpush2.bf16.msra.mxu0 %v400
      %451 = vmatprep.subr.bf16.mxu0 0
      %452 = vmatpush2.bf16.msra.mxu0 %v399
      %453 = vmatprep.subr.bf16.mxu0 0
      %454 = vmatpush2.bf16.msra.mxu0 %v398
      %455 = vmatprep.subr.bf16.mxu0 0
      %456 = vmatpush2.bf16.msra.mxu0 %v397
      %457 = vmatprep.subr.bf16.mxu0 0
      %458 = vmatpush2.bf16.msra.mxu0 %v396
      %459 = vmatprep.subr.bf16.mxu0 0
      %460 = vmatpush2.bf16.msra.mxu0 %v395
      %461 = vmatprep.subr.bf16.mxu0 0
      %462 = vmatpush2.bf16.msra.mxu0 %v394
      %463 = vmatprep.subr.bf16.mxu0 0
      %464 = vmatpush2.bf16.msra.mxu0 %v393
      %465 = vmatprep.mubr.bf16.mxu0 %v284
      %466 = vmatmul.mubr.bf16.gmra.mxu0 %v283
      %v467 = vpop.f32.mrf.mxu0
      %v468 = vadd.f32 %v271, %v467
      %v469 = vpop.f32.mrf.mxu0
      %v470 = vpop.f32.mrf.mxu0
      %v471 = vadd.f32 %v271, %v470
      %v472 = vpop.f32.mrf.mxu0
      %473 = vdwg.mxu0
      %474 = vmatprep.subr.bf16.mxu0 0
      %475 = vmatpush1.bf16.msra.mxu0 %v408
      %476 = vmatprep.subr.bf16.mxu0 0
      %477 = vmatpush1.bf16.msra.mxu0 %v407
      %478 = vmatprep.subr.bf16.mxu0 0
      %479 = vmatpush1.bf16.msra.mxu0 %v406
      %480 = vmatprep.subr.bf16.mxu0 0
      %481 = vmatpush1.bf16.msra.mxu0 %v405
      %482 = vmatprep.subr.bf16.mxu0 0
      %483 = vmatpush1.bf16.msra.mxu0 %v404
      %484 = vmatprep.subr.bf16.mxu0 0
      %485 = vmatpush1.bf16.msra.mxu0 %v403
      %486 = vmatprep.subr.bf16.mxu0 0
      %487 = vmatpush1.bf16.msra.mxu0 %v402
      %488 = vmatprep.subr.bf16.mxu0 0
      %489 = vmatpush1.bf16.msra.mxu0 %v401
      %490 = vmatprep.subr.bf16.mxu0 0
      %491 = vmatpush2.bf16.msra.mxu0 0
      %492 = vmatprep.subr.bf16.mxu0 0
      %493 = vmatpush2.bf16.msra.mxu0 0
      %494 = vmatprep.subr.bf16.mxu0 0
      %495 = vmatpush2.bf16.msra.mxu0 0
      %496 = vmatprep.subr.bf16.mxu0 0
      %497 = vmatpush2.bf16.msra.mxu0 0
      %498 = vmatprep.subr.bf16.mxu0 0
      %499 = vmatpush2.bf16.msra.mxu0 0
      %500 = vmatprep.subr.bf16.mxu0 0
      %501 = vmatpush2.bf16.msra.mxu0 0
      %502 = vmatprep.subr.bf16.mxu0 0
      %503 = vmatpush2.bf16.msra.mxu0 0
      %504 = vmatprep.subr.bf16.mxu0 0
      %505 = vmatpush2.bf16.msra.mxu0 0
      %506 = vmatprep.mubr.bf16.mxu0 0
      %507 = vmatmul.mubr.bf16.gmra.mxu0 %v285
      %v508 = vpop.f32.mrf.mxu0
      %v509 = vadd.f32 %v468, %v508
      %v510 = vpop.f32.mrf.mxu0
      %v511 = vpop.f32.mrf.mxu0
      %v512 = vadd.f32 %v471, %v511
      %v513 = vpop.f32.mrf.mxu0
      %514 = vdwg.mxu0
      %v515 = vadd.f32 %v509, %v512
      %v516 = vrot.slane %v515, 4
      %v517 = vadd.f32 %v515, %v516
      %v518 = vrot.slane %v517, 2
      %v519 = vadd.f32 %v517, %v518
      %v520 = vrot.slane %v519, 1
      %v521 = vadd.f32 %v519, %v520
      %v522 = vmul.f32 %v509, %v509
      %v523 = vmul.f32 %v512, %v512
      %v524 = vadd.f32 %v522, %v523
      %v525 = vrot.slane %v524, 4
      %v526 = vadd.f32 %v524, %v525
      %v527 = vrot.slane %v526, 2
      %v528 = vadd.f32 %v526, %v527
      %v529 = vrot.slane %v528, 1
      %v530 = vadd.f32 %v528, %v529
      %v531 = vmul.f32 %v521, 0.0625
      %v532 = vmul.f32 %v530, 0.0625
      %v533 = vmul.f32 %v531, %v531
      %v534 = vsub.f32 %v532, %v533
      %v535 = vmax.f32 %v534, 0.0
      %v536 = vadd.f32 %v535, 1e-05
      %v537 = vrsqrt.pop %v536
      %v538 = vsub.f32 %v509, %v531
      %v539 = vsub.f32 %v512, %v531
      %v540 = vmul.f32 %v538, %v537
      %v541 = vmul.f32 %v539, %v537
      %v542 = vmax.f32 %v540, 0.0
      %v543 = vmax.f32 %v541, 0.0
      %v544 = vpack.c.bf16 %v543, %v542
      %v546 = vunpack.c.l.b16 %v544
      %v547 = vunpack.c.h.b16 %v544
      %v548 = vpack.c.b16 %v546, %v546
      %v549 = vpack.c.b16 %v547, %v547
      %552 = vst [vmem:[%s211] sm:$0xf] %v548
      %553 = vst [vmem:[%s211 + $0x4] sm:$0xf] %v549
      %s554 = smul.u32 2, %s19
      %p555 = scmp.lt.s32.totalorder %s18, 1
      %s556 = scalar_select %p555, %s18, 1
      %p557 = scmp.lt.s32.totalorder %s554, 1
      %s558 = scalar_select %p557, %s554, 1
      %s559 = smul.addr %s556, 2
      %s560 = sadd.s32 %s558, %s559
      %s561 = smul.addr %s560, 4
      %s562 = scalar_lea.vmem %s3, %s561
      // Predicated region
      $region33: #{generator_forward.13} parent=31 // pred_check
        %p563 = pneg %p116
      $region34: #{generator_forward.13} parent=31 // pred_check_branch
        %565 = sbr.rel (%p563) target = $region36
      $region35: #{generator_forward.13} parent=31 // pred_region
        %s566 = smul.u32 2, %s19
      $region36: #{generator_forward.13} parent=31 // pred_fallthru
        _
    $region32: #{generator_forward.13} parent=5 // pred_fallthru
      _
    %p567 = scmp.le.s32.totalorder 2, %s9
    // Predicated region
    $region37: #{generator_forward.13} parent=5 // pred_check
      %p568 = pneg %p567
    $region38: #{generator_forward.13} parent=5 // pred_check_branch
      %570 = sbr.rel (%p568) target = $region40
    $region39: #{generator_forward.13} parent=5 // pred_region
      %s571 = ssub.s32 %s9, 2
      // Predicated region
      $region41: #{generator_forward.13} parent=39 // pred_check
        %p572 = pneg %p122
      $region42: #{generator_forward.13} parent=39 // pred_check_branch
        %574 = sbr.rel (%p572) target = $region44
      $region43: #{generator_forward.13} parent=39 // pred_region
        %s575 = smul.u32 2, %s21
        %p576 = scmp.lt.s32.totalorder %s20, 1
        %s577 = scalar_select %p576, %s20, 1
        %p578 = scmp.lt.s32.totalorder %s575, 1
        %s579 = scalar_select %p578, %s575, 1
        %s580 = smul.addr %s577, 2
        %s581 = sadd.s32 %s579, %s580
        %s582 = smul.addr %s581, 4
        %s583 = scalar_lea.vmem %s3, %s582
      $region44: #{generator_forward.13} parent=39 // pred_fallthru
        _
    $region40: #{generator_forward.13} parent=5 // pred_fallthru
      _
  $region6: #{generator_forward.13} parent=0 // loop_footer
    %s13 = sadd.s32 1, %s9
  $region7: #{generator_forward.13} parent=0 // loop_footer_branch
    %8 = sbr.rel target = $region3
  $region8: #{generator_forward.13} parent=0 // loop_exit
    _

// kernel: generator_forward.17
$region0: #{generator_forward.17}
  #allocation0 [shape = 'u32[]', space=smem, size = 0x4, offset = 0x4, fixed_abs, tag = 'smem constant byte address 0x4 - core index']
  #allocation1 [shape = 'u32[144,128]{1,0:T(1,128)}', space=vmem, size = 0x12000, scoped, tag = 'internal scratch']
  %s0 = inlined_call_operand.vmem [shape: bf16[2,16,128], index: 0, kind: input, shape index: {}]
  %s1 = inlined_call_operand.vmem [shape: bf16[128,512], index: 1, kind: input, shape index: {}]
  %s2 = inlined_call_operand.vmem [shape: f32[1,512], index: 2, kind: input, shape index: {}]
  %s3 = inlined_call_operand.vmem [shape: bf16[2,16,512], index: 3, kind: output, shape index: {}]
  %s4 = sld [smem:[#allocation0]]
  $region45: #{generator_forward.17} parent=0
    _
  %s6 = ssub.s32 1, %s4
  %s7 = scalar_select 0, %s6, %s4
  loop: start=0, step=1, limit=4
  $region2: #{generator_forward.17} parent=0 // loop_pre_header
    _
  $region3: #{generator_forward.17} parent=0 // loop_header
    %s9 = sphi 0, %s13
    %p10 = scmp.ge.s32.totalorder %s9, 4
    %s16 = sphi 0, %s28
    %s17 = sphi 0, %s24
    %s18 = sphi 0, %s16
    %s19 = sphi 0, %s17
    %s20 = sphi 0, %s18
    %s21 = sphi 0, %s19
    %s33 = sphi 0, %s35
    %s36 = sphi 0, %s33
    %s37 = sphi 0, %s36
    %s53 = sphi 0, %s37
    %s57 = sphi 0, %s57
    %s59 = sphi 0, %s57
    %s60 = sphi 0, %s59
    %s74 = sphi 0, %s60
    %s78 = sphi 0, %s78
    %s80 = sphi 0, %s78
    %s81 = sphi 0, %s80
    %s95 = sphi 0, %s81
    %s103 = sphi 0, %s105
    %s106 = sphi 0, %s103
    %s107 = sphi 0, %s106
    %s123 = sphi 0, %s107
  $region4: #{generator_forward.17} parent=0 // loop_header_branch
    %12 = sbr.rel (%p10) target = $region8
  $region5: #{generator_forward.17} parent=0 // loop_body
    %s14 = ssub.s32 %s9, 1
    %s15 = ssub.s32 %s9, 2
    %s22 = sadd.s32 1, %s17
    %p23 = scmp.ge.s32.totalorder %s22, 1
    %s24 = scalar_select %p23, 0, %s22
    %s25 = sadd.s32 1, %s16
    %s26 = scalar_select %p23, %s25, %s16
    %p27 = scmp.ge.s32.totalorder %s26, 2
    %s28 = scalar_select %p27, 0, %s26
    %s29 = ssub.s32 %s16, %s28
    %s30 = ssub.s32 %s17, %s24
    %s31 = sor.u32 %s29, %s30
    %p32 = scmp.eq.s32.totalorder %s31, 0
    %s34 = sadd.s32 %s33, 1
    %s35 = scalar_select %p32, %s33, %s34
    %p38 = pneg %p32
    %p39 = scmp.eq.s32.totalorder %s9, 1
    %p40 = por %p38, %p39
    %p41 = scmp.ne.s32.totalorder %s33, %s36
    %p42 = scmp.eq.s32.totalorder %s9, 0
    %p43 = por %p41, %p42
    %p44 = scmp.ne.s32.totalorder %s33, %s36
    %p45 = scmp.eq.s32.totalorder %s14, 1
    %p46 = por %p44, %p45
    %p47 = scmp.ne.s32.totalorder %s36, %s37
    %p48 = scmp.eq.s32.totalorder %s14, 0
    %p49 = por %p47, %p48
    %p50 = scmp.ne.s32.totalorder %s36, %s37
    %p51 = scmp.eq.s32.totalorder %s15, 1
    %p52 = por %p50, %p51
    %p54 = scmp.ne.s32.totalorder %s37, %s53
    %p55 = scmp.eq.s32.totalorder %s15, 0
    %p56 = por %p54, %p55
    %s58 = sadd.s32 %s57, 1
    %p61 = scmp.eq.s32.totalorder %s9, 1
    %p62 = scmp.ne.s32.totalorder %s57, %s59
    %p63 = scmp.eq.s32.totalorder %s9, 0
    %p64 = por %p62, %p63
    %p65 = scmp.ne.s32.totalorder %s57, %s59
    %p66 = scmp.eq.s32.totalorder %s14, 1
    %p67 = por %p65, %p66
    %p68 = scmp.ne.s32.totalorder %s59, %s60
    %p69 = scmp.eq.s32.totalorder %s14, 0
    %p70 = por %p68, %p69
    %p71 = scmp.ne.s32.totalorder %s59, %s60
    %p72 = scmp.eq.s32.totalorder %s15, 1
    %p73 = por %p71, %p72
    %p75 = scmp.ne.s32.totalorder %s60, %s74
    %p76 = scmp.eq.s32.totalorder %s15, 0
    %p77 = por %p75, %p76
    %s79 = sadd.s32 %s78, 1
    %p82 = scmp.eq.s32.totalorder %s9, 1
    %p83 = scmp.ne.s32.totalorder %s78, %s80
    %p84 = scmp.eq.s32.totalorder %s9, 0
    %p85 = por %p83, %p84
    %p86 = scmp.ne.s32.totalorder %s78, %s80
    %p87 = scmp.eq.s32.totalorder %s14, 1
    %p88 = por %p86, %p87
    %p89 = scmp.ne.s32.totalorder %s80, %s81
    %p90 = scmp.eq.s32.totalorder %s14, 0
    %p91 = por %p89, %p90
    %p92 = scmp.ne.s32.totalorder %s80, %s81
    %p93 = scmp.eq.s32.totalorder %s15, 1
    %p94 = por %p92, %p93
    %p96 = scmp.ne.s32.totalorder %s81, %s95
    %p97 = scmp.eq.s32.totalorder %s15, 0
    %p98 = por %p96, %p97
    %s99 = ssub.s32 %s16, %s28
    %s100 = ssub.s32 %s17, %s24
    %s101 = sor.u32 %s99, %s100
    %p102 = scmp.eq.s32.totalorder %s101, 0
    %s104 = sadd.s32 %s103, 1
    %s105 = scalar_select %p102, %s103, %s104
    %p108 = pneg %p102
    %p109 = scmp.eq.s32.totalorder %s9, 1
    %p110 = por %p108, %p109
    %p111 = scmp.ne.s32.totalorder %s103, %s106
    %p112 = scmp.eq.s32.totalorder %s9, 0
    %p113 = por %p111, %p112
    %p114 = scmp.ne.s32.totalorder %s103, %s106
    %p115 = scmp.eq.s32.totalorder %s14, 1
    %p116 = por %p114, %p115
    %p117 = scmp.ne.s32.totalorder %s106, %s107
    %p118 = scmp.eq.s32.totalorder %s14, 0
    %p119 = por %p117, %p118
    %p120 = scmp.ne.s32.totalorder %s106, %s107
    %p121 = scmp.eq.s32.totalorder %s15, 1
    %p122 = por %p120, %p121
    %p124 = scmp.ne.s32.totalorder %s107, %s123
    %p125 = scmp.eq.s32.totalorder %s15, 0
    %p126 = por %p124, %p125
    %p127 = scmp.le.s32.totalorder 1, %s9
    %p128 = scmp.lt.s32.totalorder %s9, 3
    %p129 = pnand %p127, %p128
    %p130 = pneg %p129
    // Predicated region
    $region9: #{generator_forward.17} parent=5 // pred_check
      _
    $region10: #{generator_forward.17} parent=5 // pred_check_branch
      %132 = sbr.rel (%p129) target = $region12
    $region11: #{generator_forward.17} parent=5 // pred_region
      %s133 = ssub.s32 %s9, 1
      // Predicated region
      $region13: #{generator_forward.17} parent=11 // pred_check
        %p134 = pneg %p70
      $region14: #{generator_forward.17} parent=11 // pred_check_branch
        %136 = sbr.rel (%p134) target = $region16
      $region15: #{generator_forward.17} parent=11 // pred_region
        _
      $region16: #{generator_forward.17} parent=11 // pred_fallthru
        _
      // Predicated region
      $region17: #{generator_forward.17} parent=11 // pred_check
        %p137 = pneg %p91
      $region18: #{generator_forward.17} parent=11 // pred_check_branch
        %139 = sbr.rel (%p137) target = $region20
      $region19: #{generator_forward.17} parent=11 // pred_region
        _
      $region20: #{generator_forward.17} parent=11 // pred_fallthru
        _
    $region12: #{generator_forward.17} parent=5 // pred_fallthru
      _
    %p140 = scmp.lt.s32.totalorder %s9, 2
    // Predicated region
    $region21: #{generator_forward.17} parent=5 // pred_check
      %p141 = pneg %p140
    $region22: #{generator_forward.17} parent=5 // pred_check_branch
      %143 = sbr.rel (%p141) target = $region24
    $region23: #{generator_forward.17} parent=5 // pred_region
      // Predicated region
      $region25: #{generator_forward.17} parent=23 // pred_check
        %p144 = pneg %p43
      $region26: #{generator_forward.17} parent=23 // pred_check_branch
        %146 = sbr.rel (%p144) target = $region28
      $region27: #{generator_forward.17} parent=23 // pred_region
        %s147 = smul.u32 2, %s17
        %p148 = scmp.lt.s32.totalorder %s16, 1
        %s149 = scalar_select %p148, %s16, 1
        %p150 = scmp.lt.s32.totalorder %s147, 1
        %s151 = scalar_select %p150, %s147, 1
        %s152 = smul.addr %s149, 2
        %s153 = sadd.s32 %s151, %s152
        %s154 = smul.addr %s153, 4
        %s155 = scalar_lea.vmem %s0, %s154
        %s156 = smul.u32 2, %s17
      $region28: #{generator_forward.17} parent=23 // pred_fallthru
        _
    $region24: #{generator_forward.17} parent=5 // pred_fallthru
      _
    %p157 = scmp.le.s32.totalorder 1, %s9
    %p158 = scmp.lt.s32.totalorder %s9, 3
    %p159 = pnand %p157, %p158
    %p160 = pneg %p159
    // Predicated region
    $region29: #{generator_forward.17} parent=5 // pred_check
      _
    $region30: #{generator_forward.17} parent=5 // pred_check_branch
      %162 = sbr.rel (%p159) target = $region32
    $region31: #{generator_forward.17} parent=5 // pred_region
      %s163 = ssub.s32 %s9, 1
      %s164 = smul.u32 2, %s19
      %p165 = scmp.lt.s32.totalorder %s18, 1
      %s166 = scalar_select %p165, %s18, 1
      %p167 = scmp.lt.s32.totalorder %s164, 1
      %s168 = scalar_select %p167, %s164, 1
      %s169 = smul.addr %s166, 2
      %s170 = sadd.s32 %s168, %s169
      %s171 = smul.addr %s170, 4
      %s172 = scalar_lea.vmem %s0, %s171
      %p173 = pneg %p49
      %p174 = pneg %p46
      %p175 = pneg %p70
      %p176 = pneg %p67
      %p177 = pneg %p91
      %p178 = pneg %p88
      %p179 = pneg %p119
      %p180 = pneg %p116
      %s181 = smul.u32 2, %s19
      %p182 = scmp.lt.s32.totalorder %s18, 1
      %s183 = scalar_select %p182, %s18, 1
      %p184 = scmp.lt.s32.totalorder %s181, 1
      %s185 = scalar_select %p184, %s181, 1
      %s186 = smul.addr %s185, 4
      %s187 = smul.addr %s183, 8
      %s188 = sadd.s32 %s186, %s187
      %s189 = smul.addr %s188, 4
      %s190 = scalar_lea.vmem %s3, %s189
      %s191 = smul.u32 2, %s19
      %p192 = scmp.lt.s32.totalorder %s18, 1
      %s193 = scalar_select %p192, %s18, 1
      %p194 = scmp.lt.s32.totalorder %s191, 1
      %s195 = scalar_select %p194, %s191, 1
      %s196 = smul.addr %s193, 2
      %s197 = sadd.s32 %s195, %s196
      %s198 = smul.addr %s197, 4
      %s199 = scalar_lea.vmem %s0, %s198
      %s200 = smul.u32 2, %s19
      %s201 = smul.u32 2, %s19
      %p202 = scmp.lt.s32.totalorder %s18, 1
      %s203 = scalar_select %p202, %s18, 1
      %p204 = scmp.lt.s32.totalorder %s201, 1
      %s205 = scalar_select %p204, %s201, 1
      %s206 = smul.addr %s205, 4
      %s207 = smul.addr %s203, 8
      %s208 = sadd.s32 %s206, %s207
      %s209 = smul.addr %s208, 4
      %s210 = scalar_lea.vmem %s3, %s209
      %s211 = smul.u32 2, %s19
      %v213 = vld [vmem:[%s199] sm:$0xf]
      %v214 = vld [vmem:[%s199 + $0x4] sm:$0xf]
      %v215 = vld [vmem:[%s1] sm:$0xff]
      %v216 = vld [vmem:[%s1 + $0x8] sm:$0xff]
      %v217 = vld [vmem:[%s1 + $0x10] sm:$0xff]
      %v218 = vld [vmem:[%s1 + $0x18] sm:$0xff]
      %v219 = vld [vmem:[%s1 + $0x20] sm:$0xff]
      %v220 = vld [vmem:[%s1 + $0x28] sm:$0xff]
      %v221 = vld [vmem:[%s1 + $0x30] sm:$0xff]
      %v222 = vld [vmem:[%s1 + $0x38] sm:$0xff]
      %v223 = vld [vmem:[%s1 + $0x40] sm:$0xff]
      %v224 = vld [vmem:[%s1 + $0x48] sm:$0xff]
      %v225 = vld [vmem:[%s1 + $0x50] sm:$0xff]
      %v226 = vld [vmem:[%s1 + $0x58] sm:$0xff]
      %v227 = vld [vmem:[%s1 + $0x60] sm:$0xff]
      %v228 = vld [vmem:[%s1 + $0x68] sm:$0xff]
      %v229 = vld [vmem:[%s1 + $0x70] sm:$0xff]
      %v230 = vld [vmem:[%s1 + $0x78] sm:$0xff]
      %v231 = vld [vmem:[%s1 + $0x80] sm:$0xff]
      %v232 = vld [vmem:[%s1 + $0x88] sm:$0xff]
      %v233 = vld [vmem:[%s1 + $0x90] sm:$0xff]
      %v234 = vld [vmem:[%s1 + $0x98] sm:$0xff]
      %v235 = vld [vmem:[%s1 + $0xa0] sm:$0xff]
      %v236 = vld [vmem:[%s1 + $0xa8] sm:$0xff]
      %v237 = vld [vmem:[%s1 + $0xb0] sm:$0xff]
      %v238 = vld [vmem:[%s1 + $0xb8] sm:$0xff]
      %v239 = vld [vmem:[%s1 + $0xc0] sm:$0xff]
      %v240 = vld [vmem:[%s1 + $0xc8] sm:$0xff]
      %v241 = vld [vmem:[%s1 + $0xd0] sm:$0xff]
      %v242 = vld [vmem:[%s1 + $0xd8] sm:$0xff]
      %v243 = vld [vmem:[%s1 + $0xe0] sm:$0xff]
      %v244 = vld [vmem:[%s1 + $0xe8] sm:$0xff]
      %v245 = vld [vmem:[%s1 + $0xf0] sm:$0xff]
      %v246 = vld [vmem:[%s1 + $0xf8] sm:$0xff]
      %v247 = vld [vmem:[%s2] sm:$0xf]
      %v249 = vlaneseq
      %v250 = vshrl.u32 %v249, 7
      %v251 = vsub.s32 0, %v250
      %v252 = vrot.slane %v247, %v251
      %v253 = vlaneseq
      %v254 = vshrl.u32 %v253, 7
      %v255 = vsub.s32 1, %v254
      %v256 = vrot.slane %v247, %v255
      %v257 = vlaneseq
      %v258 = vshrl.u32 %v257, 7
      %v259 = vsub.s32 2, %v258
      %v260 = vrot.slane %v247, %v259
      %v261 = vlaneseq
      %v262 = vshrl.u32 %v261, 7
      %v263 = vsub.s32 3, %v262
      %v264 = vrot.slane %v247, %v263
      %v271 = vunpack.c.l.b16 %v213
      %v272 = vunpack.c.l.b16 %v214
      %v273 = vpack.c.b16 %v272, %v271
      %v307 = vunpack.c.l.b16 %v215
      %v308 = vunpack.c.h.b16 %v215
      %v309 = vunpack.c.l.b16 %v216
      %v310 = vunpack.c.h.b16 %v216
      %v311 = vunpack.c.l.b16 %v217
      %v312 = vunpack.c.h.b16 %v217
      %v313 = vunpack.c.l.b16 %v218
      %v314 = vunpack.c.h.b16 %v218
      %v315 = vunpack.c.l.b16 %v219
      %v316 = vunpack.c.h.b16 %v219
      %v317 = vunpack.c.l.b16 %v220
      %v318 = vunpack.c.h.b16 %v220
      %v319 = vunpack.c.l.b16 %v221
      %v320 = vunpack.c.h.b16 %v221
      %v321 = vunpack.c.l.b16 %v222
      %v322 = vunpack.c.h.b16 %v222
      %v323 = vunpack.c.l.b16 %v223
      %v324 = vunpack.c.h.b16 %v223
      %v325 = vunpack.c.l.b16 %v224
      %v326 = vunpack.c.h.b16 %v224
      %v327 = vunpack.c.l.b16 %v225
      %v328 = vunpack.c.h.b16 %v225
      %v329 = vunpack.c.l.b16 %v226
      %v330 = vunpack.c.h.b16 %v226
      %v331 = vunpack.c.l.b16 %v227
      %v332 = vunpack.c.h.b16 %v227
      %v333 = vunpack.c.l.b16 %v228
      %v334 = vunpack.c.h.b16 %v228
      %v335 = vunpack.c.l.b16 %v229
      %v336 = vunpack.c.h.b16 %v229
      %v337 = vunpack.c.l.b16 %v230
      %v338 = vunpack.c.h.b16 %v230
      %v339 = vunpack.c.l.b16 %v231
      %v340 = vunpack.c.h.b16 %v231
      %v341 = vunpack.c.l.b16 %v232
      %v342 = vunpack.c.h.b16 %v232
      %v343 = vunpack.c.l.b16 %v233
      %v344 = vunpack.c.h.b16 %v233
      %v345 = vunpack.c.l.b16 %v234
      %v346 = vunpack.c.h.b16 %v234
      %v347 = vunpack.c.l.b16 %v235
      %v348 = vunpack.c.h.b16 %v235
      %v349 = vunpack.c.l.b16 %v236
      %v350 = vunpack.c.h.b16 %v236
      %v351 = vunpack.c.l.b16 %v237
      %v352 = vunpack.c.h.b16 %v237
      %v353 = vunpack.c.l.b16 %v238
      %v354 = vunpack.c.h.b16 %v238
      %v355 = vunpack.c.l.b16 %v239
      %v356 = vunpack.c.h.b16 %v239
      %v357 = vunpack.c.l.b16 %v240
      %v358 = vunpack.c.h.b16 %v240
      %v359 = vunpack.c.l.b16 %v241
      %v360 = vunpack.c.h.b16 %v241
      %v361 = vunpack.c.l.b16 %v242
      %v362 = vunpack.c.h.b16 %v242
      %v363 = vunpack.c.l.b16 %v243
      %v364 = vunpack.c.h.b16 %v243
      %v365 = vunpack.c.l.b16 %v244
      %v366 = vunpack.c.h.b16 %v244
      %v367 = vunpack.c.l.b16 %v245
      %v368 = vunpack.c.h.b16 %v245
      %v369 = vunpack.c.l.b16 %v246
      %v370 = vunpack.c.h.b16 %v246
      %v371 = vpack.c.b16 %v311, %v307
      %v372 = vpack.c.b16 %v312, %v308
      %v373 = vpack.c.b16 %v313, %v309
      %v374 = vpack.c.b16 %v314, %v310
      %v375 = vpack.c.b16 %v319, %v315
      %v376 = vpack.c.b16 %v320, %v316
      %v377 = vpack.c.b16 %v321, %v317
      %v378 = vpack.c.b16 %v322, %v318
      %v379 = vpack.c.b16 %v327, %v323
      %v380 = vpack.c.b16 %v328, %v324
      %v381 = vpack.c.b16 %v329, %v325
      %v382 = vpack.c.b16 %v330, %v326
      %v383 = vpack.c.b16 %v335, %v331
      %v384 = vpack.c.b16 %v336, %v332
      %v385 = vpack.c.b16 %v337, %v333
      %v386 = vpack.c.b16 %v338, %v334
      %v387 = vpack.c.b16 %v343, %v339
      %v388 = vpack.c.b16 %v344, %v340
      %v389 = vpack.c.b16 %v345, %v341
      %v390 = vpack.c.b16 %v346, %v342
      %v391 = vpack.c.b16 %v351, %v347
      %v392 = vpack.c.b16 %v352, %v348
      %v393 = vpack.c.b16 %v353, %v349
      %v394 = vpack.c.b16 %v354, %v350
      %v395 = vpack.c.b16 %v359, %v355
      %v396 = vpack.c.b16 %v360, %v356
      %v397 = vpack.c.b16 %v361, %v357
      %v398 = vpack.c.b16 %v362, %v358
      %v399 = vpack.c.b16 %v367, %v363
      %v400 = vpack.c.b16 %v368, %v364
      %v401 = vpack.c.b16 %v369, %v365
      %v402 = vpack.c.b16 %v370, %v366
      %435 = vmatprep.subr.bf16.mxu0 %v400
      %436 = vmatpush1.bf16.msra.mxu0 %v399
      %437 = vmatprep.subr.bf16.mxu0 %v396
      %438 = vmatpush1.bf16.msra.mxu0 %v395
      %439 = vmatprep.subr.bf16.mxu0 %v392
      %440 = vmatpush1.bf16.msra.mxu0 %v391
      %441 = vmatprep.subr.bf16.mxu0 %v388
      %442 = vmatpush1.bf16.msra.mxu0 %v387
      %443 = vmatprep.subr.bf16.mxu0 %v384
      %444 = vmatpush1.bf16.msra.mxu0 %v383
      %445 = vmatprep.subr.bf16.mxu0 %v380
      %446 = vmatpush1.bf16.msra.mxu0 %v379
      %447 = vmatprep.subr.bf16.mxu0 %v376
      %448 = vmatpush1.bf16.msra.mxu0 %v375
      %449 = vmatprep.subr.bf16.mxu0 %v372
      %450 = vmatpush1.bf16.msra.mxu0 %v371
      %451 = vmatprep.subr.bf16.mxu0 0
      %452 = vmatpush2.bf16.msra.mxu0 0
      %453 = vmatprep.subr.bf16.mxu0 0
      %454 = vmatpush2.bf16.msra.mxu0 0
      %455 = vmatprep.subr.bf16.mxu0 0
      %456 = vmatpush2.bf16.msra.mxu0 0
      %457 = vmatprep.subr.bf16.mxu0 0
      %458 = vmatpush2.bf16.msra.mxu0 0
      %459 = vmatprep.subr.bf16.mxu0 0
      %460 = vmatpush2.bf16.msra.mxu0 0
      %461 = vmatprep.subr.bf16.mxu0 0
      %462 = vmatpush2.bf16.msra.mxu0 0
      %463 = vmatprep.subr.bf16.mxu0 0
      %464 = vmatpush2.bf16.msra.mxu0 0
      %465 = vmatprep.subr.bf16.mxu0 0
      %466 = vmatpush2.bf16.msra.mxu0 0
      %467 = vmatprep.mubr.bf16.mxu0 0
      %468 = vmatmul.mubr.bf16.gmra.mxu0 %v273
      %v469 = vpop.f32.mrf.mxu0
      %v470 = vadd.f32 %v252, %v469
      %v471 = vpop.f32.mrf.mxu0
      %v472 = vadd.f32 %v256, %v471
      %v473 = vpop.f32.mrf.mxu0
      %v474 = vadd.f32 %v252, %v473
      %v475 = vpop.f32.mrf.mxu0
      %v476 = vadd.f32 %v256, %v475
      %477 = vdwg.mxu0
      %478 = vmatprep.subr.bf16.mxu0 %v402
      %479 = vmatpush1.bf16.msra.mxu0 %v401
      %480 = vmatprep.subr.bf16.mxu0 %v398
      %481 = vmatpush1.bf16.msra.mxu0 %v397
      %482 = vmatprep.subr.bf16.mxu0 %v394
      %483 = vmatpush1.bf16.msra.mxu0 %v393
      %484 = vmatprep.subr.bf16.mxu0 %v390
      %485 = vmatpush1.bf16.msra.mxu0 %v389
      %486 = vmatprep.subr.bf16.mxu0 %v386
      %487 = vmatpush1.bf16.msra.mxu0 %v385
      %488 = vmatprep.subr.bf16.mxu0 %v382
      %489 = vmatpush1.bf16.msra.mxu0 %v381
      %490 = vmatprep.subr.bf16.mxu0 %v378
      %491 = vmatpush1.bf16.msra.mxu0 %v377
      %492 = vmatprep.subr.bf16.mxu0 %v374
      %493 = vmatpush1.bf16.msra.mxu0 %v373
      %494 = vmatprep.subr.bf16.mxu0 0
      %495 = vmatpush2.bf16.msra.mxu0 0
      %496 = vmatprep.subr.bf16.mxu0 0
      %497 = vmatpush2.bf16.msra.mxu0 0
      %498 = vmatprep.subr.bf16.mxu0 0
      %499 = vmatpush2.bf16.msra.mxu0 0
      %500 = vmatprep.subr.bf16.mxu0 0
      %501 = vmatpush2.bf16.msra.mxu0 0
      %502 = vmatprep.subr.bf16.mxu0 0
      %503 = vmatpush2.bf16.msra.mxu0 0
      %504 = vmatprep.subr.bf16.mxu0 0
      %505 = vmatpush2.bf16.msra.mxu0 0
      %506 = vmatprep.subr.bf16.mxu0 0
      %507 = vmatpush2.bf16.msra.mxu0 0
      %508 = vmatprep.subr.bf16.mxu0 0
      %509 = vmatpush2.bf16.msra.mxu0 0
      %510 = vmatprep.mubr.bf16.mxu0 0
      %511 = vmatmul.mubr.bf16.gmra.mxu0 %v273
      %v512 = vpop.f32.mrf.mxu0
      %v513 = vadd.f32 %v260, %v512
      %v514 = vpop.f32.mrf.mxu0
      %v515 = vadd.f32 %v264, %v514
      %v516 = vpop.f32.mrf.mxu0
      %v517 = vadd.f32 %v260, %v516
      %v518 = vpop.f32.mrf.mxu0
      %v519 = vadd.f32 %v264, %v518
      %520 = vdwg.mxu0
      %v521 = vadd.f32 %v470, %v474
      %v522 = vrot.slane %v521, 4
      %v523 = vadd.f32 %v521, %v522
      %v524 = vrot.slane %v523, 2
      %v525 = vadd.f32 %v523, %v524
      %v526 = vrot.slane %v525, 1
      %v527 = vadd.f32 %v525, %v526
      %v528 = vadd.f32 %v472, %v476
      %v529 = vrot.slane %v528, 4
      %v530 = vadd.f32 %v528, %v529
      %v531 = vrot.slane %v530, 2
      %v532 = vadd.f32 %v530, %v531
      %v533 = vrot.slane %v532, 1
      %v534 = vadd.f32 %v532, %v533
      %v535 = vadd.f32 %v513, %v517
      %v536 = vrot.slane %v535, 4
      %v537 = vadd.f32 %v535, %v536
      %v538 = vrot.slane %v537, 2
      %v539 = vadd.f32 %v537, %v538
      %v540 = vrot.slane %v539, 1
      %v541 = vadd.f32 %v539, %v540
      %v542 = vadd.f32 %v515, %v519
      %v543 = vrot.slane %v542, 4
      %v544 = vadd.f32 %v542, %v543
      %v545 = vrot.slane %v544, 2
      %v546 = vadd.f32 %v544, %v545
      %v547 = vrot.slane %v546, 1
      %v548 = vadd.f32 %v546, %v547
      %v549 = vmul.f32 %v470, %v470
      %v550 = vmul.f32 %v472, %v472
      %v551 = vmul.f32 %v513, %v513
      %v552 = vmul.f32 %v515, %v515
      %v553 = vmul.f32 %v474, %v474
      %v554 = vmul.f32 %v476, %v476
      %v555 = vmul.f32 %v517, %v517
      %v556 = vmul.f32 %v519, %v519
      %v557 = vadd.f32 %v549, %v553
      %v558 = vrot.slane %v557, 4
      %v559 = vadd.f32 %v557, %v558
      %v560 = vrot.slane %v559, 2
      %v561 = vadd.f32 %v559, %v560
      %v562 = vrot.slane %v561, 1
      %v563 = vadd.f32 %v561, %v562
      %v564 = vadd.f32 %v550, %v554
      %v565 = vrot.slane %v564, 4
      %v566 = vadd.f32 %v564, %v565
      %v567 = vrot.slane %v566, 2
      %v568 = vadd.f32 %v566, %v567
      %v569 = vrot.slane %v568, 1
      %v570 = vadd.f32 %v568, %v569
      %v571 = vadd.f32 %v551, %v555
      %v572 = vrot.slane %v571, 4
      %v573 = vadd.f32 %v571, %v572
      %v574 = vrot.slane %v573, 2
      %v575 = vadd.f32 %v573, %v574
      %v576 = vrot.slane %v575, 1
      %v577 = vadd.f32 %v575, %v576
      %v578 = vadd.f32 %v552, %v556
      %v579 = vrot.slane %v578, 4
      %v580 = vadd.f32 %v578, %v579
      %v581 = vrot.slane %v580, 2
      %v582 = vadd.f32 %v580, %v581
      %v583 = vrot.slane %v582, 1
      %v584 = vadd.f32 %v582, %v583
      %v585 = vadd.f32 %v527, %v534
      %v586 = vadd.f32 %v563, %v570
      %v587 = vadd.f32 %v585, %v541
      %v588 = vadd.f32 %v586, %v577
      %v589 = vadd.f32 %v587, %v548
      %v590 = vadd.f32 %v588, %v584
      %v591 = vmul.f32 %v589, 0.015625
      %v592 = vmul.f32 %v590, 0.015625
      %v593 = vmul.f32 %v591, %v591
      %v594 = vsub.f32 %v592, %v593
      %v595 = vmax.f32 %v594, 0.0
      %v596 = vadd.f32 %v595, 1e-05
      %v597 = vrsqrt.pop %v596
      %v598 = vlaneseq
      %v599 = vshrl.u32 %v598, 7
      %v600 = vsub.s32 0, %v599
      %v601 = vrot.slane %v591, %v600
      %v602 = vsub.f32 %v470, %v601
      %v603 = vsub.f32 %v472, %v601
      %v604 = vsub.f32 %v513, %v601
      %v605 = vsub.f32 %v515, %v601
      %v606 = vsub.f32 %v474, %v601
      %v607 = vsub.f32 %v476, %v601
      %v608 = vsub.f32 %v517, %v601
      %v609 = vsub.f32 %v519, %v601
      %v610 = vlaneseq
      %v611 = vshrl.u32 %v610, 7
      %v612 = vsub.s32 0, %v611
      %v613 = vrot.slane %v597, %v612
      %v614 = vmul.f32 %v602, %v613
      %v615 = vmul.f32 %v603, %v613
      %v616 = vmul.f32 %v604, %v613
      %v617 = vmul.f32 %v605, %v613
      %v618 = vmul.f32 %v606, %v613
      %v619 = vmul.f32 %v607, %v613
      %v620 = vmul.f32 %v608, %v613
      %v621 = vmul.f32 %v609, %v613
      %v622 = vmax.f32 %v614, 0.0
      %v623 = vmax.f32 %v615, 0.0
      %v624 = vmax.f32 %v616, 0.0
      %v625 = vmax.f32 %v617, 0.0
      %v626 = vmax.f32 %v618, 0.0
      %v627 = vmax.f32 %v619, 0.0
      %v628 = vmax.f32 %v620, 0.0
      %v629 = vmax.f32 %v621, 0.0
      %v630 = vpack.c.bf16 %v626, %v622
      %v631 = vpack.c.bf16 %v627, %v623
      %v632 = vpack.c.bf16 %v628, %v624
      %v633 = vpack.c.bf16 %v629, %v625
      %v638 = vunpack.c.l.b16 %v630
      %v639 = vunpack.c.l.b16 %v631
      %v640 = vunpack.c.l.b16 %v632
      %v641 = vunpack.c.l.b16 %v633
      %v642 = vunpack.c.h.b16 %v630
      %v643 = vunpack.c.h.b16 %v631
      %v644 = vunpack.c.h.b16 %v632
      %v645 = vunpack.c.h.b16 %v633
      %v646 = vpack.c.b16 %v639, %v638
      %v647 = vpack.c.b16 %v641, %v640
      %v648 = vpack.c.b16 %v643, %v642
      %v649 = vpack.c.b16 %v645, %v644
      %654 = vst [vmem:[%s210] sm:$0xff] %v646
      %655 = vst [vmem:[%s210 + $0x8] sm:$0xff] %v647
      %656 = vst [vmem:[%s210 + $0x10] sm:$0xff] %v648
      %657 = vst [vmem:[%s210 + $0x18] sm:$0xff] %v649
      %s658 = smul.u32 2, %s19
      %p659 = scmp.lt.s32.totalorder %s18, 1
      %s660 = scalar_select %p659, %s18, 1
      %p661 = scmp.lt.s32.totalorder %s658, 1
      %s662 = scalar_select %p661, %s658, 1
      %s663 = smul.addr %s662, 4
      %s664 = smul.addr %s660, 8
      %s665 = sadd.s32 %s663, %s664
      %s666 = smul.addr %s665, 4
      %s667 = scalar_lea.vmem %s3, %s666
      // Predicated region
      $region33: #{generator_forward.17} parent=31 // pred_check
        %p668 = pneg %p116
      $region34: #{generator_forward.17} parent=31 // pred_check_branch
        %670 = sbr.rel (%p668) target = $region36
      $region35: #{generator_forward.17} parent=31 // pred_region
        %s671 = smul.u32 2, %s19
      $region36: #{generator_forward.17} parent=31 // pred_fallthru
        _
    $region32: #{generator_forward.17} parent=5 // pred_fallthru
      _
    %p672 = scmp.le.s32.totalorder 2, %s9
    // Predicated region
    $region37: #{generator_forward.17} parent=5 // pred_check
      %p673 = pneg %p672
    $region38: #{generator_forward.17} parent=5 // pred_check_branch
      %675 = sbr.rel (%p673) target = $region40
    $region39: #{generator_forward.17} parent=5 // pred_region
      %s676 = ssub.s32 %s9, 2
      // Predicated region
      $region41: #{generator_forward.17} parent=39 // pred_check
        %p677 = pneg %p122
      $region42: #{generator_forward.17} parent=39 // pred_check_branch
        %679 = sbr.rel (%p677) target = $region44
      $region43: #{generator_forward.17} parent=39 // pred_region
        %s680 = smul.u32 2, %s21
        %p681 = scmp.lt.s32.totalorder %s20, 1
        %s682 = scalar_select %p681, %s20, 1
        %p683 = scmp.lt.s32.totalorder %s680, 1
        %s684 = scalar_select %p683, %s680, 1
        %s685 = smul.addr %s684, 4
        %s686 = smul.addr %s682, 8
        %s687 = sadd.s32 %s685, %s686
        %s688 = smul.addr %s687, 4
        %s689 = scalar_lea.vmem %s3, %s688
      $region44: #{generator_forward.17} parent=39 // pred_fallthru
        _
    $region40: #{generator_forward.17} parent=5 // pred_fallthru
      _
  $region6: #{generator_forward.17} parent=0 // loop_footer
    %s13 = sadd.s32 1, %s9
  $region7: #{generator_forward.17} parent=0 // loop_footer_branch
    %8 = sbr.rel target = $region3
  $region8: #{generator_forward.17} parent=0 // loop_exit
    _

// kernel: generator_forward.14
$region0: #{generator_forward.14}
  #allocation0 [shape = 'u32[]', space=smem, size = 0x4, offset = 0x4, fixed_abs, tag = 'smem constant byte address 0x4 - core index']
  #allocation1 [shape = 'u32[144,128]{1,0:T(1,128)}', space=vmem, size = 0x12000, scoped, tag = 'internal scratch']
  %s0 = inlined_call_operand.vmem [shape: bf16[2,16,384], index: 0, kind: input, shape index: {}]
  %s1 = inlined_call_operand.vmem [shape: bf16[384,128], index: 1, kind: input, shape index: {}]
  %s2 = inlined_call_operand.vmem [shape: f32[1,128], index: 2, kind: input, shape index: {}]
  %s3 = inlined_call_operand.vmem [shape: bf16[2,16,128], index: 3, kind: input, shape index: {}]
  %s4 = inlined_call_operand.vmem [shape: bf16[2,16,128], index: 4, kind: output, shape index: {}]
  %s5 = sld [smem:[#allocation0]]
  $region49: #{generator_forward.14} parent=0
    _
  %s7 = ssub.s32 1, %s5
  %s8 = scalar_select 0, %s7, %s5
  loop: start=0, step=1, limit=4
  $region2: #{generator_forward.14} parent=0 // loop_pre_header
    _
  $region3: #{generator_forward.14} parent=0 // loop_header
    %s10 = sphi 0, %s14
    %p11 = scmp.ge.s32.totalorder %s10, 4
    %s17 = sphi 0, %s29
    %s18 = sphi 0, %s25
    %s19 = sphi 0, %s17
    %s20 = sphi 0, %s18
    %s21 = sphi 0, %s19
    %s22 = sphi 0, %s20
    %s34 = sphi 0, %s36
    %s37 = sphi 0, %s34
    %s38 = sphi 0, %s37
    %s54 = sphi 0, %s38
    %s58 = sphi 0, %s58
    %s60 = sphi 0, %s58
    %s61 = sphi 0, %s60
    %s75 = sphi 0, %s61
    %s79 = sphi 0, %s79
    %s81 = sphi 0, %s79
    %s82 = sphi 0, %s81
    %s96 = sphi 0, %s82
    %s104 = sphi 0, %s106
    %s107 = sphi 0, %s104
    %s108 = sphi 0, %s107
    %s124 = sphi 0, %s108
    %s132 = sphi 0, %s134
    %s135 = sphi 0, %s132
    %s136 = sphi 0, %s135
    %s152 = sphi 0, %s136
  $region4: #{generator_forward.14} parent=0 // loop_header_branch
    %13 = sbr.rel (%p11) target = $region8
  $region5: #{generator_forward.14} parent=0 // loop_body
    %s15 = ssub.s32 %s10, 1
    %s16 = ssub.s32 %s10, 2
    %s23 = sadd.s32 1, %s18
    %p24 = scmp.ge.s32.totalorder %s23, 1
    %s25 = scalar_select %p24, 0, %s23
    %s26 = sadd.s32 1, %s17
    %s27 = scalar_select %p24, %s26, %s17
    %p28 = scmp.ge.s32.totalorder %s27, 2
    %s29 = scalar_select %p28, 0, %s27
    %s30 = ssub.s32 %s17, %s29
    %s31 = ssub.s32 %s18, %s25
    %s32 = sor.u32 %s30, %s31
    %p33 = scmp.eq.s32.totalorder %s32, 0
    %s35 = sadd.s32 %s34, 1
    %s36 = scalar_select %p33, %s34, %s35
    %p39 = pneg %p33
    %p40 = scmp.eq.s32.totalorder %s10, 1
    %p41 = por %p39, %p40
    %p42 = scmp.ne.s32.totalorder %s34, %s37
    %p43 = scmp.eq.s32.totalorder %s10, 0
    %p44 = por %p42, %p43
    %p45 = scmp.ne.s32.totalorder %s34, %s37
    %p46 = scmp.eq.s32.totalorder %s15, 1
    %p47 = por %p45, %p46
    %p48 = scmp.ne.s32.totalorder %s37, %s38
    %p49 = scmp.eq.s32.totalorder %s15, 0
    %p50 = por %p48, %p49
    %p51 = scmp.ne.s32.totalorder %s37, %s38
    %p52 = scmp.eq.s32.totalorder %s16, 1
    %p53 = por %p51, %p52
    %p55 = scmp.ne.s32.totalorder %s38, %s54
    %p56 = scmp.eq.s32.totalorder %s16, 0
    %p57 = por %p55, %p56
    %s59 = sadd.s32 %s58, 1
    %p62 = scmp.eq.s32.totalorder %s10, 1
    %p63 = scmp.ne.s32.totalorder %s58, %s60
    %p64 = scmp.eq.s32.totalorder %s10, 0
    %p65 = por %p63, %p64
    %p66 = scmp.ne.s32.totalorder %s58, %s60
    %p67 = scmp.eq.s32.totalorder %s15, 1
    %p68 = por %p66, %p67
    %p69 = scmp.ne.s32.totalorder %s60, %s61
    %p70 = scmp.eq.s32.totalorder %s15, 0
    %p71 = por %p69, %p70
    %p72 = scmp.ne.s32.totalorder %s60, %s61
    %p73 = scmp.eq.s32.totalorder %s16, 1
    %p74 = por %p72, %p73
    %p76 = scmp.ne.s32.totalorder %s61, %s75
    %p77 = scmp.eq.s32.totalorder %s16, 0
    %p78 = por %p76, %p77
    %s80 = sadd.s32 %s79, 1
    %p83 = scmp.eq.s32.totalorder %s10, 1
    %p84 = scmp.ne.s32.totalorder %s79, %s81
    %p85 = scmp.eq.s32.totalorder %s10, 0
    %p86 = por %p84, %p85
    %p87 = scmp.ne.s32.totalorder %s79, %s81
    %p88 = scmp.eq.s32.totalorder %s15, 1
    %p89 = por %p87, %p88
    %p90 = scmp.ne.s32.totalorder %s81, %s82
    %p91 = scmp.eq.s32.totalorder %s15, 0
    %p92 = por %p90, %p91
    %p93 = scmp.ne.s32.totalorder %s81, %s82
    %p94 = scmp.eq.s32.totalorder %s16, 1
    %p95 = por %p93, %p94
    %p97 = scmp.ne.s32.totalorder %s82, %s96
    %p98 = scmp.eq.s32.totalorder %s16, 0
    %p99 = por %p97, %p98
    %s100 = ssub.s32 %s17, %s29
    %s101 = ssub.s32 %s18, %s25
    %s102 = sor.u32 %s100, %s101
    %p103 = scmp.eq.s32.totalorder %s102, 0
    %s105 = sadd.s32 %s104, 1
    %s106 = scalar_select %p103, %s104, %s105
    %p109 = pneg %p103
    %p110 = scmp.eq.s32.totalorder %s10, 1
    %p111 = por %p109, %p110
    %p112 = scmp.ne.s32.totalorder %s104, %s107
    %p113 = scmp.eq.s32.totalorder %s10, 0
    %p114 = por %p112, %p113
    %p115 = scmp.ne.s32.totalorder %s104, %s107
    %p116 = scmp.eq.s32.totalorder %s15, 1
    %p117 = por %p115, %p116
    %p118 = scmp.ne.s32.totalorder %s107, %s108
    %p119 = scmp.eq.s32.totalorder %s15, 0
    %p120 = por %p118, %p119
    %p121 = scmp.ne.s32.totalorder %s107, %s108
    %p122 = scmp.eq.s32.totalorder %s16, 1
    %p123 = por %p121, %p122
    %p125 = scmp.ne.s32.totalorder %s108, %s124
    %p126 = scmp.eq.s32.totalorder %s16, 0
    %p127 = por %p125, %p126
    %s128 = ssub.s32 %s17, %s29
    %s129 = ssub.s32 %s18, %s25
    %s130 = sor.u32 %s128, %s129
    %p131 = scmp.eq.s32.totalorder %s130, 0
    %s133 = sadd.s32 %s132, 1
    %s134 = scalar_select %p131, %s132, %s133
    %p137 = pneg %p131
    %p138 = scmp.eq.s32.totalorder %s10, 1
    %p139 = por %p137, %p138
    %p140 = scmp.ne.s32.totalorder %s132, %s135
    %p141 = scmp.eq.s32.totalorder %s10, 0
    %p142 = por %p140, %p141
    %p143 = scmp.ne.s32.totalorder %s132, %s135
    %p144 = scmp.eq.s32.totalorder %s15, 1
    %p145 = por %p143, %p144
    %p146 = scmp.ne.s32.totalorder %s135, %s136
    %p147 = scmp.eq.s32.totalorder %s15, 0
    %p148 = por %p146, %p147
    %p149 = scmp.ne.s32.totalorder %s135, %s136
    %p150 = scmp.eq.s32.totalorder %s16, 1
    %p151 = por %p149, %p150
    %p153 = scmp.ne.s32.totalorder %s136, %s152
    %p154 = scmp.eq.s32.totalorder %s16, 0
    %p155 = por %p153, %p154
    %p156 = scmp.le.s32.totalorder 1, %s10
    %p157 = scmp.lt.s32.totalorder %s10, 3
    %p158 = pnand %p156, %p157
    %p159 = pneg %p158
    // Predicated region
    $region9: #{generator_forward.14} parent=5 // pred_check
      _
    $region10: #{generator_forward.14} parent=5 // pred_check_branch
      %161 = sbr.rel (%p158) target = $region12
    $region11: #{generator_forward.14} parent=5 // pred_region
      %s162 = ssub.s32 %s10, 1
      // Predicated region
      $region13: #{generator_forward.14} parent=11 // pred_check
        %p163 = pneg %p71
      $region14: #{generator_forward.14} parent=11 // pred_check_branch
        %165 = sbr.rel (%p163) target = $region16
      $region15: #{generator_forward.14} parent=11 // pred_region
        _
      $region16: #{generator_forward.14} parent=11 // pred_fallthru
        _
      // Predicated region
      $region17: #{generator_forward.14} parent=11 // pred_check
        %p166 = pneg %p92
      $region18: #{generator_forward.14} parent=11 // pred_check_branch
        %168 = sbr.rel (%p166) target = $region20
      $region19: #{generator_forward.14} parent=11 // pred_region
        _
      $region20: #{generator_forward.14} parent=11 // pred_fallthru
        _
    $region12: #{generator_forward.14} parent=5 // pred_fallthru
      _
    %p169 = scmp.lt.s32.totalorder %s10, 2
    // Predicated region
    $region21: #{generator_forward.14} parent=5 // pred_check
      %p170 = pneg %p169
    $region22: #{generator_forward.14} parent=5 // pred_check_branch
      %172 = sbr.rel (%p170) target = $region24
    $region23: #{generator_forward.14} parent=5 // pred_region
      // Predicated region
      $region25: #{generator_forward.14} parent=23 // pred_check
        %p173 = pneg %p44
      $region26: #{generator_forward.14} parent=23 // pred_check_branch
        %175 = sbr.rel (%p173) target = $region28
      $region27: #{generator_forward.14} parent=23 // pred_region
        %s176 = smul.u32 2, %s18
        %p177 = scmp.lt.s32.totalorder %s17, 1
        %s178 = scalar_select %p177, %s17, 1
        %p179 = scmp.lt.s32.totalorder %s176, 1
        %s180 = scalar_select %p179, %s176, 1
        %s181 = smul.addr %s180, 3
        %s182 = smul.addr %s178, 6
        %s183 = sadd.s32 %s181, %s182
        %s184 = smul.addr %s183, 4
        %s185 = scalar_lea.vmem %s0, %s184
        %s186 = smul.u32 2, %s18
      $region28: #{generator_forward.14} parent=23 // pred_fallthru
        _
      // Predicated region
      $region29: #{generator_forward.14} parent=23 // pred_check
        %p187 = pneg %p114
      $region30: #{generator_forward.14} parent=23 // pred_check_branch
        %189 = sbr.rel (%p187) target = $region32
      $region31: #{generator_forward.14} parent=23 // pred_region
        %s190 = smul.u32 2, %s18
        %p191 = scmp.lt.s32.totalorder %s17, 1
        %s192 = scalar_select %p191, %s17, 1
        %p193 = scmp.lt.s32.totalorder %s190, 1
        %s194 = scalar_select %p193, %s190, 1
        %s195 = smul.addr %s192, 2
        %s196 = sadd.s32 %s194, %s195
        %s197 = smul.addr %s196, 4
        %s198 = scalar_lea.vmem %s3, %s197
        %s199 = smul.u32 2, %s18
      $region32: #{generator_forward.14} parent=23 // pred_fallthru
        _
    $region24: #{generator_forward.14} parent=5 // pred_fallthru
      _
    %p200 = scmp.le.s32.totalorder 1, %s10
    %p201 = scmp.lt.s32.totalorder %s10, 3
    %p202 = pnand %p200, %p201
    %p203 = pneg %p202
    // Predicated region
    $region33: #{generator_forward.14} parent=5 // pred_check
      _
    $region34: #{generator_forward.14} parent=5 // pred_check_branch
      %205 = sbr.rel (%p202) target = $region36
    $region35: #{generator_forward.14} parent=5 // pred_region
      %s206 = ssub.s32 %s10, 1
      %s207 = smul.u32 2, %s20
      %p208 = scmp.lt.s32.totalorder %s19, 1
      %s209 = scalar_select %p208, %s19, 1
      %p210 = scmp.lt.s32.totalorder %s207, 1
      %s211 = scalar_select %p210, %s207, 1
      %s212 = smul.addr %s211, 3
      %s213 = smul.addr %s209, 6
      %s214 = sadd.s32 %s212, %s213
      %s215 = smul.addr %s214, 4
      %s216 = scalar_lea.vmem %s0, %s215
      %p217 = pneg %p50
      %p218 = pneg %p47
      %p219 = pneg %p71
      %p220 = pneg %p68
      %p221 = pneg %p92
      %p222 = pneg %p89
      %s223 = smul.u32 2, %s20
      %p224 = scmp.lt.s32.totalorder %s19, 1
      %s225 = scalar_select %p224, %s19, 1
      %p226 = scmp.lt.s32.totalorder %s223, 1
      %s227 = scalar_select %p226, %s223, 1
      %s228 = smul.addr %s225, 2
      %s229 = sadd.s32 %s227, %s228
      %s230 = smul.addr %s229, 4
      %s231 = scalar_lea.vmem %s3, %s230
      %p232 = pneg %p120
      %p233 = pneg %p117
      %p234 = pneg %p148
      %p235 = pneg %p145
      %s236 = smul.u32 2, %s20
      %p237 = scmp.lt.s32.totalorder %s19, 1
      %s238 = scalar_select %p237, %s19, 1
      %p239 = scmp.lt.s32.totalorder %s236, 1
      %s240 = scalar_select %p239, %s236, 1
      %s241 = smul.addr %s238, 2
      %s242 = sadd.s32 %s240, %s241
      %s243 = smul.addr %s242, 4
      %s244 = scalar_lea.vmem %s4, %s243
      %s245 = smul.u32 2, %s20
      %p246 = scmp.lt.s32.totalorder %s19, 1
      %s247 = scalar_select %p246, %s19, 1
      %p248 = scmp.lt.s32.totalorder %s245, 1
      %s249 = scalar_select %p248, %s245, 1
      %s250 = smul.addr %s249, 3
      %s251 = smul.addr %s247, 6
      %s252 = sadd.s32 %s250, %s251
      %s253 = smul.addr %s252, 4
      %s254 = scalar_lea.vmem %s0, %s253
      %s255 = smul.u32 2, %s20
      %s256 = smul.u32 2, %s20
      %p257 = scmp.lt.s32.totalorder %s19, 1
      %s258 = scalar_select %p257, %s19, 1
      %p259 = scmp.lt.s32.totalorder %s256, 1
      %s260 = scalar_select %p259, %s256, 1
      %s261 = smul.addr %s258, 2
      %s262 = sadd.s32 %s260, %s261
      %s263 = smul.addr %s262, 4
      %s264 = scalar_lea.vmem %s3, %s263
      %s265 = smul.u32 2, %s20
      %s266 = smul.u32 2, %s20
      %p267 = scmp.lt.s32.totalorder %s19, 1
      %s268 = scalar_select %p267, %s19, 1
      %p269 = scmp.lt.s32.totalorder %s266, 1
      %s270 = scalar_select %p269, %s266, 1
      %s271 = smul.addr %s268, 2
      %s272 = sadd.s32 %s270, %s271
      %s273 = smul.addr %s272, 4
      %s274 = scalar_lea.vmem %s4, %s273
      %s275 = smul.u32 2, %s20
      %v277 = vld [vmem:[%s254] sm:$0xff]
      %v278 = vld [vmem:[%s254 + $0x8] sm:$0xf]
      %v279 = vld [vmem:[%s254 + $0xc] sm:$0xff]
      %v280 = vld [vmem:[%s254 + $0x14] sm:$0xf]
      %v281 = vld [vmem:[%s1] sm:$0xf]
      %v282 = vld [vmem:[%s1 + $0x4] sm:$0xf]
      %v283 = vld [vmem:[%s1 + $0x8] sm:$0xf]
      %v284 = vld [vmem:[%s1 + $0xc] sm:$0xf]
      %v285 = vld [vmem:[%s1 + $0x10] sm:$0xf]
      %v286 = vld [vmem:[%s1 + $0x14] sm:$0xf]
      %v287 = vld [vmem:[%s1 + $0x18] sm:$0xf]
      %v288 = vld [vmem:[%s1 + $0x1c] sm:$0xf]
      %v289 = vld [vmem:[%s1 + $0x20] sm:$0xf]
      %v290 = vld [vmem:[%s1 + $0x24] sm:$0xf]
      %v291 = vld [vmem:[%s1 + $0x28] sm:$0xf]
      %v292 = vld [vmem:[%s1 + $0x2c] sm:$0xf]
      %v293 = vld [vmem:[%s1 + $0x30] sm:$0xf]
      %v294 = vld [vmem:[%s1 + $0x34] sm:$0xf]
      %v295 = vld [vmem:[%s1 + $0x38] sm:$0xf]
      %v296 = vld [vmem:[%s1 + $0x3c] sm:$0xf]
      %v297 = vld [vmem:[%s1 + $0x40] sm:$0xf]
      %v298 = vld [vmem:[%s1 + $0x44] sm:$0xf]
      %v299 = vld [vmem:[%s1 + $0x48] sm:$0xf]
      %v300 = vld [vmem:[%s1 + $0x4c] sm:$0xf]
      %v301 = vld [vmem:[%s1 + $0x50] sm:$0xf]
      %v302 = vld [vmem:[%s1 + $0x54] sm:$0xf]
      %v303 = vld [vmem:[%s1 + $0x58] sm:$0xf]
      %v304 = vld [vmem:[%s1 + $0x5c] sm:$0xf]
      %v305 = vld [vmem:[%s1 + $0x60] sm:$0xf]
      %v306 = vld [vmem:[%s1 + $0x64] sm:$0xf]
      %v307 = vld [vmem:[%s1 + $0x68] sm:$0xf]
      %v308 = vld [vmem:[%s1 + $0x6c] sm:$0xf]
      %v309 = vld [vmem:[%s1 + $0x70] sm:$0xf]
      %v310 = vld [vmem:[%s1 + $0x74] sm:$0xf]
      %v311 = vld [vmem:[%s1 + $0x78] sm:$0xf]
      %v312 = vld [vmem:[%s1 + $0x7c] sm:$0xf]
      %v313 = vld [vmem:[%s1 + $0x80] sm:$0xf]
      %v314 = vld [vmem:[%s1 + $0x84] sm:$0xf]
      %v315 = vld [vmem:[%s1 + $0x88] sm:$0xf]
      %v316 = vld [vmem:[%s1 + $0x8c] sm:$0xf]
      %v317 = vld [vmem:[%s1 + $0x90] sm:$0xf]
      %v318 = vld [vmem:[%s1 + $0x94] sm:$0xf]
      %v319 = vld [vmem:[%s1 + $0x98] sm:$0xf]
      %v320 = vld [vmem:[%s1 + $0x9c] sm:$0xf]
      %v321 = vld [vmem:[%s1 + $0xa0] sm:$0xf]
      %v322 = vld [vmem:[%s1 + $0xa4] sm:$0xf]
      %v323 = vld [vmem:[%s1 + $0xa8] sm:$0xf]
      %v324 = vld [vmem:[%s1 + $0xac] sm:$0xf]
      %v325 = vld [vmem:[%s1 + $0xb0] sm:$0xf]
      %v326 = vld [vmem:[%s1 + $0xb4] sm:$0xf]
      %v327 = vld [vmem:[%s1 + $0xb8] sm:$0xf]
      %v328 = vld [vmem:[%s1 + $0xbc] sm:$0xf]
      %v329 = vld [vmem:[%s2] sm:$0x1]
      %v331 = vlaneseq
      %v332 = vshrl.u32 %v331, 7
      %v333 = vsub.s32 0, %v332
      %v334 = vrot.slane %v329, %v333
      %v340 = vunpack.c.l.b16 %v277
      %v341 = vunpack.c.h.b16 %v277
      %v342 = vunpack.c.l.b16 %v278
      %v343 = vunpack.c.l.b16 %v279
      %v344 = vunpack.c.h.b16 %v279
      %v345 = vunpack.c.l.b16 %v280
      %v346 = vpack.c.b16 %v343, %v340
      %v347 = vpack.c.b16 %v344, %v341
      %v348 = vpack.c.b16 %v345, %v342
      %v400 = vunpack.c.l.b16 %v281
      %v401 = vunpack.c.l.b16 %v282
      %v402 = vunpack.c.l.b16 %v283
      %v403 = vunpack.c.l.b16 %v284
      %v404 = vunpack.c.l.b16 %v285
      %v405 = vunpack.c.l.b16 %v286
      %v406 = vunpack.c.l.b16 %v287
      %v407 = vunpack.c.l.b16 %v288
      %v408 = vunpack.c.l.b16 %v289
      %v409 = vunpack.c.l.b16 %v290
      %v410 = vunpack.c.l.b16 %v291
      %v411 = vunpack.c.l.b16 %v292
      %v412 = vunpack.c.l.b16 %v293
      %v413 = vunpack.c.l.b16 %v294
      %v414 = vunpack.c.l.b16 %v295
      %v415 = vunpack.c.l.b16 %v296
      %v416 = vunpack.c.l.b16 %v297
      %v417 = vunpack.c.l.b16 %v298
      %v418 = vunpack.c.l.b16 %v299
      %v419 = vunpack.c.l.b16 %v300
      %v420 = vunpack.c.l.b16 %v301
      %v421 = vunpack.c.l.b16 %v302
      %v422 = vunpack.c.l.b16 %v303
      %v423 = vunpack.c.l.b16 %v304
      %v424 = vunpack.c.l.b16 %v305
      %v425 = vunpack.c.l.b16 %v306
      %v426 = vunpack.c.l.b16 %v307
      %v427 = vunpack.c.l.b16 %v308
      %v428 = vunpack.c.l.b16 %v309
      %v429 = vunpack.c.l.b16 %v310
      %v430 = vunpack.c.l.b16 %v311
      %v431 = vunpack.c.l.b16 %v312
      %v432 = vunpack.c.l.b16 %v313
      %v433 = vunpack.c.l.b16 %v314
      %v434 = vunpack.c.l.b16 %v315
      %v435 = vunpack.c.l.b16 %v316
      %v436 = vunpack.c.l.b16 %v317
      %v437 = vunpack.c.l.b16 %v318
      %v438 = vunpack.c.l.b16 %v319
      %v439 = vunpack.c.l.b16 %v320
      %v440 = vunpack.c.l.b16 %v321
      %v441 = vunpack.c.l.b16 %v322
      %v442 = vunpack.c.l.b16 %v323
      %v443 = vunpack.c.l.b16 %v324
      %v444 = vunpack.c.l.b16 %v325
      %v445 = vunpack.c.l.b16 %v326
      %v446 = vunpack.c.l.b16 %v327
      %v447 = vunpack.c.l.b16 %v328
      %v448 = vpack.c.b16 %v401, %v400
      %v449 = vpack.c.b16 %v403, %v402
      %v450 = vpack.c.b16 %v405, %v404
      %v451 = vpack.c.b16 %v407, %v406
      %v452 = vpack.c.b16 %v409, %v408
      %v453 = vpack.c.b16 %v411, %v410
      %v454 = vpack.c.b16 %v413, %v412
      %v455 = vpack.c.b16 %v415, %v414
      %v456 = vpack.c.b16 %v417, %v416
      %v457 = vpack.c.b16 %v419, %v418
      %v458 = vpack.c.b16 %v421, %v420
      %v459 = vpack.c.b16 %v423, %v422
      %v460 = vpack.c.b16 %v425, %v424
      %v461 = vpack.c.b16 %v427, %v426
      %v462 = vpack.c.b16 %v429, %v428
      %v463 = vpack.c.b16 %v431, %v430
      %v464 = vpack.c.b16 %v433, %v432
      %v465 = vpack.c.b16 %v435, %v434
      %v466 = vpack.c.b16 %v437, %v436
      %v467 = vpack.c.b16 %v439, %v438
      %v468 = vpack.c.b16 %v441, %v440
      %v469 = vpack.c.b16 %v443, %v442
      %v470 = vpack.c.b16 %v445, %v444
      %v471 = vpack.c.b16 %v447, %v446
      %496 = vmatprep.subr.bf16.mxu0 0
      %497 = vmatpush1.bf16.msra.mxu0 %v455
      %498 = vmatprep.subr.bf16.mxu0 0
      %499 = vmatpush1.bf16.msra.mxu0 %v454
      %500 = vmatprep.subr.bf16.mxu0 0
      %501 = vmatpush1.bf16.msra.mxu0 %v453
      %502 = vmatprep.subr.bf16.mxu0 0
      %503 = vmatpush1.bf16.msra.mxu0 %v452
      %504 = vmatprep.subr.bf16.mxu0 0
      %505 = vmatpush1.bf16.msra.mxu0 %v451
      %506 = vmatprep.subr.bf16.mxu0 0
      %507 = vmatpush1.bf16.msra.mxu0 %v450
      %508 = vmatprep.subr.bf16.mxu0 0
      %509 = vmatpush1.bf16.msra.mxu0 %v449
      %510 = vmatprep.subr.bf16.mxu0 0
      %511 = vmatpush1.bf16.msra.mxu0 %v448
      %512 = vmatprep.subr.bf16.mxu0 0
      %513 = vmatpush2.bf16.msra.mxu0 %v463
      %514 = vmatprep.subr.bf16.mxu0 0
      %515 = vmatpush2.bf16.msra.mxu0 %v462
      %516 = vmatprep.subr.bf16.mxu0 0
      %517 = vmatpush2.bf16.msra.mxu0 %v461
      %518 = vmatprep.subr.bf16.mxu0 0
      %519 = vmatpush2.bf16.msra.mxu0 %v460
      %520 = vmatprep.subr.bf16.mxu0 0
      %521 = vmatpush2.bf16.msra.mxu0 %v459
      %522 = vmatprep.subr.bf16.mxu0 0
      %523 = vmatpush2.bf16.msra.mxu0 %v458
      %524 = vmatprep.subr.bf16.mxu0 0
      %525 = vmatpush2.bf16.msra.mxu0 %v457
      %526 = vmatprep.subr.bf16.mxu0 0
      %527 = vmatpush2.bf16.msra.mxu0 %v456
      %528 = vmatprep.mubr.bf16.mxu0 %v347
      %529 = vmatmul.mubr.bf16.gmra.mxu0 %v346
      %v530 = vpop.f32.mrf.mxu0
      %v531 = vadd.f32 %v334, %v530
      %v532 = vpop.f32.mrf.mxu0
      %v533 = vpop.f32.mrf.mxu0
      %v534 = vadd.f32 %v334, %v533
      %v535 = vpop.f32.mrf.mxu0
      %536 = vdwg.mxu0
      %537 = vmatprep.subr.bf16.mxu0 0
      %538 = vmatpush1.bf16.msra.mxu0 %v471
      %539 = vmatprep.subr.bf16.mxu0 0
      %540 = vmatpush1.bf16.msra.mxu0 %v470
      %541 = vmatprep.subr.bf16.mxu0 0
      %542 = vmatpush1.bf16.msra.mxu0 %v469
      %543 = vmatprep.subr.bf16.mxu0 0
      %544 = vmatpush1.bf16.msra.mxu0 %v468
      %545 = vmatprep.subr.bf16.mxu0 0
      %546 = vmatpush1.bf16.msra.mxu0 %v467
      %547 = vmatprep.subr.bf16.mxu0 0
      %548 = vmatpush1.bf16.msra.mxu0 %v466
      %549 = vmatprep.subr.bf16.mxu0 0
      %550 = vmatpush1.bf16.msra.mxu0 %v465
      %551 = vmatprep.subr.bf16.mxu0 0
      %552 = vmatpush1.bf16.msra.mxu0 %v464
      %553 = vmatprep.subr.bf16.mxu0 0
      %554 = vmatpush2.bf16.msra.mxu0 0
      %555 = vmatprep.subr.bf16.mxu0 0
      %556 = vmatpush2.bf16.msra.mxu0 0
      %557 = vmatprep.subr.bf16.mxu0 0
      %558 = vmatpush2.bf16.msra.mxu0 0
      %559 = vmatprep.subr.bf16.mxu0 0
      %560 = vmatpush2.bf16.msra.mxu0 0
      %561 = vmatprep.subr.bf16.mxu0 0
      %562 = vmatpush2.bf16.msra.mxu0 0
      %563 = vmatprep.subr.bf16.mxu0 0
      %564 = vmatpush2.bf16.msra.mxu0 0
      %565 = vmatprep.subr.bf16.mxu0 0
      %566 = vmatpush2.bf16.msra.mxu0 0
      %567 = vmatprep.subr.bf16.mxu0 0
      %568 = vmatpush2.bf16.msra.mxu0 0
      %569 = vmatprep.mubr.bf16.mxu0 0
      %570 = vmatmul.mubr.bf16.gmra.mxu0 %v348
      %v571 = vpop.f32.mrf.mxu0
      %v572 = vadd.f32 %v531, %v571
      %v573 = vpop.f32.mrf.mxu0
      %v574 = vpop.f32.mrf.mxu0
      %v575 = vadd.f32 %v534, %v574
      %v576 = vpop.f32.mrf.mxu0
      %577 = vdwg.mxu0
      %v578 = vadd.f32 %v572, %v575
      %v579 = vrot.slane %v578, 4
      %v580 = vadd.f32 %v578, %v579
      %v581 = vrot.slane %v580, 2
      %v582 = vadd.f32 %v580, %v581
      %v583 = vrot.slane %v582, 1
      %v584 = vadd.f32 %v582, %v583
      %v585 = vmul.f32 %v572, %v572
      %v586 = vmul.f32 %v575, %v575
      %v587 = vadd.f32 %v585, %v586
      %v588 = vrot.slane %v587, 4
      %v589 = vadd.f32 %v587, %v588
      %v590 = vrot.slane %v589, 2
      %v591 = vadd.f32 %v589, %v590
      %v592 = vrot.slane %v591, 1
      %v593 = vadd.f32 %v591, %v592
      %v594 = vmul.f32 %v584, 0.0625
      %v595 = vmul.f32 %v593, 0.0625
      %v596 = vmul.f32 %v594, %v594
      %v597 = vsub.f32 %v595, %v596
      %v598 = vmax.f32 %v597, 0.0
      %v599 = vadd.f32 %v598, 1e-05
      %v600 = vrsqrt.pop %v599
      %v601 = vsub.f32 %v572, %v594
      %v602 = vsub.f32 %v575, %v594
      %v603 = vmul.f32 %v601, %v600
      %v604 = vmul.f32 %v602, %v600
      %v605 = vld [vmem:[%s264] sm:$0xf]
      %v606 = vld [vmem:[%s264 + $0x4] sm:$0xf]
      %v607 = vunpack.c.l.bf16 %v605
      %v608 = vunpack.c.l.bf16 %v606
      %v609 = vadd.f32 %v603, %v607
      %v610 = vadd.f32 %v604, %v608
      %v611 = vpack.c.bf16 %v610, %v609
      %v613 = vunpack.c.l.b16 %v611
      %v614 = vunpack.c.h.b16 %v611
      %v615 = vpack.c.b16 %v613, %v613
      %v616 = vpack.c.b16 %v614, %v614
      %619 = vst [vmem:[%s274] sm:$0xf] %v615
      %620 = vst [vmem:[%s274 + $0x4] sm:$0xf] %v616
      %s621 = smul.u32 2, %s20
      %p622 = scmp.lt.s32.totalorder %s19, 1
      %s623 = scalar_select %p622, %s19, 1
      %p624 = scmp.lt.s32.totalorder %s621, 1
      %s625 = scalar_select %p624, %s621, 1
      %s626 = smul.addr %s623, 2
      %s627 = sadd.s32 %s625, %s626
      %s628 = smul.addr %s627, 4
      %s629 = scalar_lea.vmem %s4, %s628
      // Predicated region
      $region37: #{generator_forward.14} parent=35 // pred_check
        %p630 = pneg %p145
      $region38: #{generator_forward.14} parent=35 // pred_check_branch
        %632 = sbr.rel (%p630) target = $region40
      $region39: #{generator_forward.14} parent=35 // pred_region
        %s633 = smul.u32 2, %s20
      $region40: #{generator_forward.14} parent=35 // pred_fallthru
        _
    $region36: #{generator_forward.14} parent=5 // pred_fallthru
      _
    %p634 = scmp.le.s32.totalorder 2, %s10
    // Predicated region
    $region41: #{generator_forward.14} parent=5 // pred_check
      %p635 = pneg %p634
    $region42: #{generator_forward.14} parent=5 // pred_check_branch
      %637 = sbr.rel (%p635) target = $region44
    $region43: #{generator_forward.14} parent=5 // pred_region
      %s638 = ssub.s32 %s10, 2
      // Predicated region
      $region45: #{generator_forward.14} parent=43 // pred_check
        %p639 = pneg %p151
      $region46: #{generator_forward.14} parent=43 // pred_check_branch
        %641 = sbr.rel (%p639) target = $region48
      $region47: #{generator_forward.14} parent=43 // pred_region
        %s642 = smul.u32 2, %s22
        %p643 = scmp.lt.s32.totalorder %s21, 1
        %s644 = scalar_select %p643, %s21, 1
        %p645 = scmp.lt.s32.totalorder %s642, 1
        %s646 = scalar_select %p645, %s642, 1
        %s647 = smul.addr %s644, 2
        %s648 = sadd.s32 %s646, %s647
        %s649 = smul.addr %s648, 4
        %s650 = scalar_lea.vmem %s4, %s649
      $region48: #{generator_forward.14} parent=43 // pred_fallthru
        _
    $region44: #{generator_forward.14} parent=5 // pred_fallthru
      _
  $region6: #{generator_forward.14} parent=0 // loop_footer
    %s14 = sadd.s32 1, %s10
  $region7: #{generator_forward.14} parent=0 // loop_footer_branch
    %9 = sbr.rel target = $region3
  $region8: #{generator_forward.14} parent=0 // loop_exit
    _

// kernel: generator_forward.18
$region0: #{generator_forward.18}
  #allocation0 [shape = 'u32[]', space=smem, size = 0x4, offset = 0x4, fixed_abs, tag = 'smem constant byte address 0x4 - core index']
  #allocation1 [shape = 'u32[144,128]{1,0:T(1,128)}', space=vmem, size = 0x12000, scoped, tag = 'internal scratch']
  %s0 = inlined_call_operand.vmem [shape: bf16[2,64,128], index: 0, kind: input, shape index: {}]
  %s1 = inlined_call_operand.vmem [shape: bf16[128,512], index: 1, kind: input, shape index: {}]
  %s2 = inlined_call_operand.vmem [shape: f32[1,512], index: 2, kind: input, shape index: {}]
  %s3 = inlined_call_operand.vmem [shape: bf16[2,64,512], index: 3, kind: output, shape index: {}]
  %s4 = sld [smem:[#allocation0]]
  $region45: #{generator_forward.18} parent=0
    _
  %s6 = ssub.s32 1, %s4
  %s7 = scalar_select 0, %s6, %s4
  loop: start=0, step=1, limit=4
  $region2: #{generator_forward.18} parent=0 // loop_pre_header
    _
  $region3: #{generator_forward.18} parent=0 // loop_header
    %s9 = sphi 0, %s13
    %p10 = scmp.ge.s32.totalorder %s9, 4
    %s16 = sphi 0, %s28
    %s17 = sphi 0, %s24
    %s18 = sphi 0, %s16
    %s19 = sphi 0, %s17
    %s20 = sphi 0, %s18
    %s21 = sphi 0, %s19
    %s33 = sphi 0, %s35
    %s36 = sphi 0, %s33
    %s37 = sphi 0, %s36
    %s53 = sphi 0, %s37
    %s57 = sphi 0, %s57
    %s59 = sphi 0, %s57
    %s60 = sphi 0, %s59
    %s74 = sphi 0, %s60
    %s78 = sphi 0, %s78
    %s80 = sphi 0, %s78
    %s81 = sphi 0, %s80
    %s95 = sphi 0, %s81
    %s103 = sphi 0, %s105
    %s106 = sphi 0, %s103
    %s107 = sphi 0, %s106
    %s123 = sphi 0, %s107
  $region4: #{generator_forward.18} parent=0 // loop_header_branch
    %12 = sbr.rel (%p10) target = $region8
  $region5: #{generator_forward.18} parent=0 // loop_body
    %s14 = ssub.s32 %s9, 1
    %s15 = ssub.s32 %s9, 2
    %s22 = sadd.s32 1, %s17
    %p23 = scmp.ge.s32.totalorder %s22, 1
    %s24 = scalar_select %p23, 0, %s22
    %s25 = sadd.s32 1, %s16
    %s26 = scalar_select %p23, %s25, %s16
    %p27 = scmp.ge.s32.totalorder %s26, 2
    %s28 = scalar_select %p27, 0, %s26
    %s29 = ssub.s32 %s16, %s28
    %s30 = ssub.s32 %s17, %s24
    %s31 = sor.u32 %s29, %s30
    %p32 = scmp.eq.s32.totalorder %s31, 0
    %s34 = sadd.s32 %s33, 1
    %s35 = scalar_select %p32, %s33, %s34
    %p38 = pneg %p32
    %p39 = scmp.eq.s32.totalorder %s9, 1
    %p40 = por %p38, %p39
    %p41 = scmp.ne.s32.totalorder %s33, %s36
    %p42 = scmp.eq.s32.totalorder %s9, 0
    %p43 = por %p41, %p42
    %p44 = scmp.ne.s32.totalorder %s33, %s36
    %p45 = scmp.eq.s32.totalorder %s14, 1
    %p46 = por %p44, %p45
    %p47 = scmp.ne.s32.totalorder %s36, %s37
    %p48 = scmp.eq.s32.totalorder %s14, 0
    %p49 = por %p47, %p48
    %p50 = scmp.ne.s32.totalorder %s36, %s37
    %p51 = scmp.eq.s32.totalorder %s15, 1
    %p52 = por %p50, %p51
    %p54 = scmp.ne.s32.totalorder %s37, %s53
    %p55 = scmp.eq.s32.totalorder %s15, 0
    %p56 = por %p54, %p55
    %s58 = sadd.s32 %s57, 1
    %p61 = scmp.eq.s32.totalorder %s9, 1
    %p62 = scmp.ne.s32.totalorder %s57, %s59
    %p63 = scmp.eq.s32.totalorder %s9, 0
    %p64 = por %p62, %p63
    %p65 = scmp.ne.s32.totalorder %s57, %s59
    %p66 = scmp.eq.s32.totalorder %s14, 1
    %p67 = por %p65, %p66
    %p68 = scmp.ne.s32.totalorder %s59, %s60
    %p69 = scmp.eq.s32.totalorder %s14, 0
    %p70 = por %p68, %p69
    %p71 = scmp.ne.s32.totalorder %s59, %s60
    %p72 = scmp.eq.s32.totalorder %s15, 1
    %p73 = por %p71, %p72
    %p75 = scmp.ne.s32.totalorder %s60, %s74
    %p76 = scmp.eq.s32.totalorder %s15, 0
    %p77 = por %p75, %p76
    %s79 = sadd.s32 %s78, 1
    %p82 = scmp.eq.s32.totalorder %s9, 1
    %p83 = scmp.ne.s32.totalorder %s78, %s80
    %p84 = scmp.eq.s32.totalorder %s9, 0
    %p85 = por %p83, %p84
    %p86 = scmp.ne.s32.totalorder %s78, %s80
    %p87 = scmp.eq.s32.totalorder %s14, 1
    %p88 = por %p86, %p87
    %p89 = scmp.ne.s32.totalorder %s80, %s81
    %p90 = scmp.eq.s32.totalorder %s14, 0
    %p91 = por %p89, %p90
    %p92 = scmp.ne.s32.totalorder %s80, %s81
    %p93 = scmp.eq.s32.totalorder %s15, 1
    %p94 = por %p92, %p93
    %p96 = scmp.ne.s32.totalorder %s81, %s95
    %p97 = scmp.eq.s32.totalorder %s15, 0
    %p98 = por %p96, %p97
    %s99 = ssub.s32 %s16, %s28
    %s100 = ssub.s32 %s17, %s24
    %s101 = sor.u32 %s99, %s100
    %p102 = scmp.eq.s32.totalorder %s101, 0
    %s104 = sadd.s32 %s103, 1
    %s105 = scalar_select %p102, %s103, %s104
    %p108 = pneg %p102
    %p109 = scmp.eq.s32.totalorder %s9, 1
    %p110 = por %p108, %p109
    %p111 = scmp.ne.s32.totalorder %s103, %s106
    %p112 = scmp.eq.s32.totalorder %s9, 0
    %p113 = por %p111, %p112
    %p114 = scmp.ne.s32.totalorder %s103, %s106
    %p115 = scmp.eq.s32.totalorder %s14, 1
    %p116 = por %p114, %p115
    %p117 = scmp.ne.s32.totalorder %s106, %s107
    %p118 = scmp.eq.s32.totalorder %s14, 0
    %p119 = por %p117, %p118
    %p120 = scmp.ne.s32.totalorder %s106, %s107
    %p121 = scmp.eq.s32.totalorder %s15, 1
    %p122 = por %p120, %p121
    %p124 = scmp.ne.s32.totalorder %s107, %s123
    %p125 = scmp.eq.s32.totalorder %s15, 0
    %p126 = por %p124, %p125
    %p127 = scmp.le.s32.totalorder 1, %s9
    %p128 = scmp.lt.s32.totalorder %s9, 3
    %p129 = pnand %p127, %p128
    %p130 = pneg %p129
    // Predicated region
    $region9: #{generator_forward.18} parent=5 // pred_check
      _
    $region10: #{generator_forward.18} parent=5 // pred_check_branch
      %132 = sbr.rel (%p129) target = $region12
    $region11: #{generator_forward.18} parent=5 // pred_region
      %s133 = ssub.s32 %s9, 1
      // Predicated region
      $region13: #{generator_forward.18} parent=11 // pred_check
        %p134 = pneg %p70
      $region14: #{generator_forward.18} parent=11 // pred_check_branch
        %136 = sbr.rel (%p134) target = $region16
      $region15: #{generator_forward.18} parent=11 // pred_region
        _
      $region16: #{generator_forward.18} parent=11 // pred_fallthru
        _
      // Predicated region
      $region17: #{generator_forward.18} parent=11 // pred_check
        %p137 = pneg %p91
      $region18: #{generator_forward.18} parent=11 // pred_check_branch
        %139 = sbr.rel (%p137) target = $region20
      $region19: #{generator_forward.18} parent=11 // pred_region
        _
      $region20: #{generator_forward.18} parent=11 // pred_fallthru
        _
    $region12: #{generator_forward.18} parent=5 // pred_fallthru
      _
    %p140 = scmp.lt.s32.totalorder %s9, 2
    // Predicated region
    $region21: #{generator_forward.18} parent=5 // pred_check
      %p141 = pneg %p140
    $region22: #{generator_forward.18} parent=5 // pred_check_branch
      %143 = sbr.rel (%p141) target = $region24
    $region23: #{generator_forward.18} parent=5 // pred_region
      // Predicated region
      $region25: #{generator_forward.18} parent=23 // pred_check
        %p144 = pneg %p43
      $region26: #{generator_forward.18} parent=23 // pred_check_branch
        %146 = sbr.rel (%p144) target = $region28
      $region27: #{generator_forward.18} parent=23 // pred_region
        %s147 = smul.u32 8, %s17
        %p148 = scmp.lt.s32.totalorder %s16, 1
        %s149 = scalar_select %p148, %s16, 1
        %p150 = scmp.lt.s32.totalorder %s147, 7
        %s151 = scalar_select %p150, %s147, 7
        %s152 = smul.addr %s149, 8
        %s153 = sadd.s32 %s151, %s152
        %s154 = smul.addr %s153, 4
        %s155 = scalar_lea.vmem %s0, %s154
        %s156 = smul.u32 8, %s17
      $region28: #{generator_forward.18} parent=23 // pred_fallthru
        _
    $region24: #{generator_forward.18} parent=5 // pred_fallthru
      _
    %p157 = scmp.le.s32.totalorder 1, %s9
    %p158 = scmp.lt.s32.totalorder %s9, 3
    %p159 = pnand %p157, %p158
    %p160 = pneg %p159
    // Predicated region
    $region29: #{generator_forward.18} parent=5 // pred_check
      _
    $region30: #{generator_forward.18} parent=5 // pred_check_branch
      %162 = sbr.rel (%p159) target = $region32
    $region31: #{generator_forward.18} parent=5 // pred_region
      %s163 = ssub.s32 %s9, 1
      %s164 = smul.u32 8, %s19
      %p165 = scmp.lt.s32.totalorder %s18, 1
      %s166 = scalar_select %p165, %s18, 1
      %p167 = scmp.lt.s32.totalorder %s164, 7
      %s168 = scalar_select %p167, %s164, 7
      %s169 = smul.addr %s166, 8
      %s170 = sadd.s32 %s168, %s169
      %s171 = smul.addr %s170, 4
      %s172 = scalar_lea.vmem %s0, %s171
      %p173 = pneg %p49
      %p174 = pneg %p46
      %p175 = pneg %p70
      %p176 = pneg %p67
      %p177 = pneg %p91
      %p178 = pneg %p88
      %p179 = pneg %p119
      %p180 = pneg %p116
      %s181 = smul.u32 8, %s19
      %p182 = scmp.lt.s32.totalorder %s18, 1
      %s183 = scalar_select %p182, %s18, 1
      %p184 = scmp.lt.s32.totalorder %s181, 7
      %s185 = scalar_select %p184, %s181, 7
      %s186 = smul.addr %s185, 4
      %s187 = smul.addr %s183, 32
      %s188 = sadd.s32 %s186, %s187
      %s189 = smul.addr %s188, 4
      %s190 = scalar_lea.vmem %s3, %s189
      %s191 = smul.u32 8, %s19
      %p192 = scmp.lt.s32.totalorder %s18, 1
      %s193 = scalar_select %p192, %s18, 1
      %p194 = scmp.lt.s32.totalorder %s191, 7
      %s195 = scalar_select %p194, %s191, 7
      %s196 = smul.addr %s193, 8
      %s197 = sadd.s32 %s195, %s196
      %s198 = smul.addr %s197, 4
      %s199 = scalar_lea.vmem %s0, %s198
      %s200 = smul.u32 8, %s19
      %s201 = smul.u32 8, %s19
      %p202 = scmp.lt.s32.totalorder %s18, 1
      %s203 = scalar_select %p202, %s18, 1
      %p204 = scmp.lt.s32.totalorder %s201, 7
      %s205 = scalar_select %p204, %s201, 7
      %s206 = smul.addr %s205, 4
      %s207 = smul.addr %s203, 32
      %s208 = sadd.s32 %s206, %s207
      %s209 = smul.addr %s208, 4
      %s210 = scalar_lea.vmem %s3, %s209
      %s211 = smul.u32 8, %s19
      %v213 = vld [vmem:[%s199] sm:$0xf]
      %v214 = vld [vmem:[%s199 + $0x4] sm:$0xf]
      %v215 = vld [vmem:[%s199 + $0x8] sm:$0xf]
      %v216 = vld [vmem:[%s199 + $0xc] sm:$0xf]
      %v217 = vld [vmem:[%s199 + $0x10] sm:$0xf]
      %v218 = vld [vmem:[%s199 + $0x14] sm:$0xf]
      %v219 = vld [vmem:[%s199 + $0x18] sm:$0xf]
      %v220 = vld [vmem:[%s199 + $0x1c] sm:$0xf]
      %v221 = vld [vmem:[%s1] sm:$0xff]
      %v222 = vld [vmem:[%s1 + $0x8] sm:$0xff]
      %v223 = vld [vmem:[%s1 + $0x10] sm:$0xff]
      %v224 = vld [vmem:[%s1 + $0x18] sm:$0xff]
      %v225 = vld [vmem:[%s1 + $0x20] sm:$0xff]
      %v226 = vld [vmem:[%s1 + $0x28] sm:$0xff]
      %v227 = vld [vmem:[%s1 + $0x30] sm:$0xff]
      %v228 = vld [vmem:[%s1 + $0x38] sm:$0xff]
      %v229 = vld [vmem:[%s1 + $0x40] sm:$0xff]
      %v230 = vld [vmem:[%s1 + $0x48] sm:$0xff]
      %v231 = vld [vmem:[%s1 + $0x50] sm:$0xff]
      %v232 = vld [vmem:[%s1 + $0x58] sm:$0xff]
      %v233 = vld [vmem:[%s1 + $0x60] sm:$0xff]
      %v234 = vld [vmem:[%s1 + $0x68] sm:$0xff]
      %v235 = vld [vmem:[%s1 + $0x70] sm:$0xff]
      %v236 = vld [vmem:[%s1 + $0x78] sm:$0xff]
      %v237 = vld [vmem:[%s1 + $0x80] sm:$0xff]
      %v238 = vld [vmem:[%s1 + $0x88] sm:$0xff]
      %v239 = vld [vmem:[%s1 + $0x90] sm:$0xff]
      %v240 = vld [vmem:[%s1 + $0x98] sm:$0xff]
      %v241 = vld [vmem:[%s1 + $0xa0] sm:$0xff]
      %v242 = vld [vmem:[%s1 + $0xa8] sm:$0xff]
      %v243 = vld [vmem:[%s1 + $0xb0] sm:$0xff]
      %v244 = vld [vmem:[%s1 + $0xb8] sm:$0xff]
      %v245 = vld [vmem:[%s1 + $0xc0] sm:$0xff]
      %v246 = vld [vmem:[%s1 + $0xc8] sm:$0xff]
      %v247 = vld [vmem:[%s1 + $0xd0] sm:$0xff]
      %v248 = vld [vmem:[%s1 + $0xd8] sm:$0xff]
      %v249 = vld [vmem:[%s1 + $0xe0] sm:$0xff]
      %v250 = vld [vmem:[%s1 + $0xe8] sm:$0xff]
      %v251 = vld [vmem:[%s1 + $0xf0] sm:$0xff]
      %v252 = vld [vmem:[%s1 + $0xf8] sm:$0xff]
      %v253 = vld [vmem:[%s2] sm:$0xf]
      %v255 = vlaneseq
      %v256 = vshrl.u32 %v255, 7
      %v257 = vsub.s32 0, %v256
      %v258 = vrot.slane %v253, %v257
      %v259 = vlaneseq
      %v260 = vshrl.u32 %v259, 7
      %v261 = vsub.s32 1, %v260
      %v262 = vrot.slane %v253, %v261
      %v263 = vlaneseq
      %v264 = vshrl.u32 %v263, 7
      %v265 = vsub.s32 2, %v264
      %v266 = vrot.slane %v253, %v265
      %v267 = vlaneseq
      %v268 = vshrl.u32 %v267, 7
      %v269 = vsub.s32 3, %v268
      %v270 = vrot.slane %v253, %v269
      %v283 = vunpack.c.l.b16 %v213
      %v284 = vunpack.c.l.b16 %v214
      %v285 = vunpack.c.l.b16 %v215
      %v286 = vunpack.c.l.b16 %v216
      %v287 = vunpack.c.l.b16 %v217
      %v288 = vunpack.c.l.b16 %v218
      %v289 = vunpack.c.l.b16 %v219
      %v290 = vunpack.c.l.b16 %v220
      %v291 = vpack.c.b16 %v284, %v283
      %v292 = vpack.c.b16 %v286, %v285
      %v293 = vpack.c.b16 %v288, %v287
      %v294 = vpack.c.b16 %v290, %v289
      %v331 = vunpack.c.l.b16 %v221
      %v332 = vunpack.c.h.b16 %v221
      %v333 = vunpack.c.l.b16 %v222
      %v334 = vunpack.c.h.b16 %v222
      %v335 = vunpack.c.l.b16 %v223
      %v336 = vunpack.c.h.b16 %v223
      %v337 = vunpack.c.l.b16 %v224
      %v338 = vunpack.c.h.b16 %v224
      %v339 = vunpack.c.l.b16 %v225
      %v340 = vunpack.c.h.b16 %v225
      %v341 = vunpack.c.l.b16 %v226
      %v342 = vunpack.c.h.b16 %v226
      %v343 = vunpack.c.l.b16 %v227
      %v344 = vunpack.c.h.b16 %v227
      %v345 = vunpack.c.l.b16 %v228
      %v346 = vunpack.c.h.b16 %v228
      %v347 = vunpack.c.l.b16 %v229
      %v348 = vunpack.c.h.b16 %v229
      %v349 = vunpack.c.l.b16 %v230
      %v350 = vunpack.c.h.b16 %v230
      %v351 = vunpack.c.l.b16 %v231
      %v352 = vunpack.c.h.b16 %v231
      %v353 = vunpack.c.l.b16 %v232
      %v354 = vunpack.c.h.b16 %v232
      %v355 = vunpack.c.l.b16 %v233
      %v356 = vunpack.c.h.b16 %v233
      %v357 = vunpack.c.l.b16 %v234
      %v358 = vunpack.c.h.b16 %v234
      %v359 = vunpack.c.l.b16 %v235
      %v360 = vunpack.c.h.b16 %v235
      %v361 = vunpack.c.l.b16 %v236
      %v362 = vunpack.c.h.b16 %v236
      %v363 = vunpack.c.l.b16 %v237
      %v364 = vunpack.c.h.b16 %v237
      %v365 = vunpack.c.l.b16 %v238
      %v366 = vunpack.c.h.b16 %v238
      %v367 = vunpack.c.l.b16 %v239
      %v368 = vunpack.c.h.b16 %v239
      %v369 = vunpack.c.l.b16 %v240
      %v370 = vunpack.c.h.b16 %v240
      %v371 = vunpack.c.l.b16 %v241
      %v372 = vunpack.c.h.b16 %v241
      %v373 = vunpack.c.l.b16 %v242
      %v374 = vunpack.c.h.b16 %v242
      %v375 = vunpack.c.l.b16 %v243
      %v376 = vunpack.c.h.b16 %v243
      %v377 = vunpack.c.l.b16 %v244
      %v378 = vunpack.c.h.b16 %v244
      %v379 = vunpack.c.l.b16 %v245
      %v380 = vunpack.c.h.b16 %v245
      %v381 = vunpack.c.l.b16 %v246
      %v382 = vunpack.c.h.b16 %v246
      %v383 = vunpack.c.l.b16 %v247
      %v384 = vunpack.c.h.b16 %v247
      %v385 = vunpack.c.l.b16 %v248
      %v386 = vunpack.c.h.b16 %v248
      %v387 = vunpack.c.l.b16 %v249
      %v388 = vunpack.c.h.b16 %v249
      %v389 = vunpack.c.l.b16 %v250
      %v390 = vunpack.c.h.b16 %v250
      %v391 = vunpack.c.l.b16 %v251
      %v392 = vunpack.c.h.b16 %v251
      %v393 = vunpack.c.l.b16 %v252
      %v394 = vunpack.c.h.b16 %v252
      %v395 = vpack.c.b16 %v335, %v331
      %v396 = vpack.c.b16 %v336, %v332
      %v397 = vpack.c.b16 %v337, %v333
      %v398 = vpack.c.b16 %v338, %v334
      %v399 = vpack.c.b16 %v343, %v339
      %v400 = vpack.c.b16 %v344, %v340
      %v401 = vpack.c.b16 %v345, %v341
      %v402 = vpack.c.b16 %v346, %v342
      %v403 = vpack.c.b16 %v351, %v347
      %v404 = vpack.c.b16 %v352, %v348
      %v405 = vpack.c.b16 %v353, %v349
      %v406 = vpack.c.b16 %v354, %v350
      %v407 = vpack.c.b16 %v359, %v355
      %v408 = vpack.c.b16 %v360, %v356
      %v409 = vpack.c.b16 %v361, %v357
      %v410 = vpack.c.b16 %v362, %v358
      %v411 = vpack.c.b16 %v367, %v363
      %v412 = vpack.c.b16 %v368, %v364
      %v413 = vpack.c.b16 %v369, %v365
      %v414 = vpack.c.b16 %v370, %v366
      %v415 = vpack.c.b16 %v375, %v371
      %v416 = vpack.c.b16 %v376, %v372
      %v417 = vpack.c.b16 %v377, %v373
      %v418 = vpack.c.b16 %v378, %v374
      %v419 = vpack.c.b16 %v383, %v379
      %v420 = vpack.c.b16 %v384, %v380
      %v421 = vpack.c.b16 %v385, %v381
      %v422 = vpack.c.b16 %v386, %v382
      %v423 = vpack.c.b16 %v391, %v387
      %v424 = vpack.c.b16 %v392, %v388
      %v425 = vpack.c.b16 %v393, %v389
      %v426 = vpack.c.b16 %v394, %v390
      %459 = vmatprep.subr.bf16.mxu0 %v424
      %460 = vmatpush1.bf16.msra.mxu0 %v423
      %461 = vmatprep.subr.bf16.mxu0 %v420
      %462 = vmatpush1.bf16.msra.mxu0 %v419
      %463 = vmatprep.subr.bf16.mxu0 %v416
      %464 = vmatpush1.bf16.msra.mxu0 %v415
      %465 = vmatprep.subr.bf16.mxu0 %v412
      %466 = vmatpush1.bf16.msra.mxu0 %v411
      %467 = vmatprep.subr.bf16.mxu0 %v408
      %468 = vmatpush1.bf16.msra.mxu0 %v407
      %469 = vmatprep.subr.bf16.mxu0 %v404
      %470 = vmatpush1.bf16.msra.mxu0 %v403
      %471 = vmatprep.subr.bf16.mxu0 %v400
      %472 = vmatpush1.bf16.msra.mxu0 %v399
      %473 = vmatprep.subr.bf16.mxu0 %v396
      %474 = vmatpush1.bf16.msra.mxu0 %v395
      %475 = vmatprep.subr.bf16.mxu0 0
      %476 = vmatpush2.bf16.msra.mxu0 0
      %477 = vmatprep.subr.bf16.mxu0 0
      %478 = vmatpush2.bf16.msra.mxu0 0
      %479 = vmatprep.subr.bf16.mxu0 0
      %480 = vmatpush2.bf16.msra.mxu0 0
      %481 = vmatprep.subr.bf16.mxu0 0
      %482 = vmatpush2.bf16.msra.mxu0 0
      %483 = vmatprep.subr.bf16.mxu0 0
      %484 = vmatpush2.bf16.msra.mxu0 0
      %485 = vmatprep.subr.bf16.mxu0 0
      %486 = vmatpush2.bf16.msra.mxu0 0
      %487 = vmatprep.subr.bf16.mxu0 0
      %488 = vmatpush2.bf16.msra.mxu0 0
      %489 = vmatprep.subr.bf16.mxu0 0
      %490 = vmatpush2.bf16.msra.mxu0 0
      %491 = vmatprep.mubr.bf16.mxu0 0
      %492 = vmatmul.mubr.bf16.gmra.mxu0 %v291
      %v493 = vpop.f32.mrf.mxu0
      %v494 = vadd.f32 %v258, %v493
      %v495 = vpop.f32.mrf.mxu0
      %v496 = vadd.f32 %v262, %v495
      %v497 = vpop.f32.mrf.mxu0
      %v498 = vadd.f32 %v258, %v497
      %v499 = vpop.f32.mrf.mxu0
      %v500 = vadd.f32 %v262, %v499
      %501 = vmatprep.mubr.bf16.mxu0 0
      %502 = vmatmul.mubr.bf16.gmra.mxu0 %v292
      %v503 = vpop.f32.mrf.mxu0
      %v504 = vadd.f32 %v258, %v503
      %v505 = vpop.f32.mrf.mxu0
      %v506 = vadd.f32 %v262, %v505
      %v507 = vpop.f32.mrf.mxu0
      %v508 = vadd.f32 %v258, %v507
      %v509 = vpop.f32.mrf.mxu0
      %v510 = vadd.f32 %v262, %v509
      %511 = vmatprep.mubr.bf16.mxu0 0
      %512 = vmatmul.mubr.bf16.gmra.mxu0 %v293
      %v513 = vpop.f32.mrf.mxu0
      %v514 = vadd.f32 %v258, %v513
      %v515 = vpop.f32.mrf.mxu0
      %v516 = vadd.f32 %v262, %v515
      %v517 = vpop.f32.mrf.mxu0
      %v518 = vadd.f32 %v258, %v517
      %v519 = vpop.f32.mrf.mxu0
      %v520 = vadd.f32 %v262, %v519
      %521 = vmatprep.mubr.bf16.mxu0 0
      %522 = vmatmul.mubr.bf16.gmra.mxu0 %v294
      %v523 = vpop.f32.mrf.mxu0
      %v524 = vadd.f32 %v258, %v523
      %v525 = vpop.f32.mrf.mxu0
      %v526 = vadd.f32 %v262, %v525
      %v527 = vpop.f32.mrf.mxu0
      %v528 = vadd.f32 %v258, %v527
      %v529 = vpop.f32.mrf.mxu0
      %v530 = vadd.f32 %v262, %v529
      %531 = vdwg.mxu0
      %532 = vmatprep.subr.bf16.mxu0 %v426
      %533 = vmatpush1.bf16.msra.mxu0 %v425
      %534 = vmatprep.subr.bf16.mxu0 %v422
      %535 = vmatpush1.bf16.msra.mxu0 %v421
      %536 = vmatprep.subr.bf16.mxu0 %v418
      %537 = vmatpush1.bf16.msra.mxu0 %v417
      %538 = vmatprep.subr.bf16.mxu0 %v414
      %539 = vmatpush1.bf16.msra.mxu0 %v413
      %540 = vmatprep.subr.bf16.mxu0 %v410
      %541 = vmatpush1.bf16.msra.mxu0 %v409
      %542 = vmatprep.subr.bf16.mxu0 %v406
      %543 = vmatpush1.bf16.msra.mxu0 %v405
      %544 = vmatprep.subr.bf16.mxu0 %v402
      %545 = vmatpush1.bf16.msra.mxu0 %v401
      %546 = vmatprep.subr.bf16.mxu0 %v398
      %547 = vmatpush1.bf16.msra.mxu0 %v397
      %548 = vmatprep.subr.bf16.mxu0 0
      %549 = vmatpush2.bf16.msra.mxu0 0
      %550 = vmatprep.subr.bf16.mxu0 0
      %551 = vmatpush2.bf16.msra.mxu0 0
      %552 = vmatprep.subr.bf16.mxu0 0
      %553 = vmatpush2.bf16.msra.mxu0 0
      %554 = vmatprep.subr.bf16.mxu0 0
      %555 = vmatpush2.bf16.msra.mxu0 0
      %556 = vmatprep.subr.bf16.mxu0 0
      %557 = vmatpush2.bf16.msra.mxu0 0
      %558 = vmatprep.subr.bf16.mxu0 0
      %559 = vmatpush2.bf16.msra.mxu0 0
      %560 = vmatprep.subr.bf16.mxu0 0
      %561 = vmatpush2.bf16.msra.mxu0 0
      %562 = vmatprep.subr.bf16.mxu0 0
      %563 = vmatpush2.bf16.msra.mxu0 0
      %564 = vmatprep.mubr.bf16.mxu0 0
      %565 = vmatmul.mubr.bf16.gmra.mxu0 %v291
      %v566 = vpop.f32.mrf.mxu0
      %v567 = vadd.f32 %v266, %v566
      %v568 = vpop.f32.mrf.mxu0
      %v569 = vadd.f32 %v270, %v568
      %v570 = vpop.f32.mrf.mxu0
      %v571 = vadd.f32 %v266, %v570
      %v572 = vpop.f32.mrf.mxu0
      %v573 = vadd.f32 %v270, %v572
      %574 = vmatprep.mubr.bf16.mxu0 0
      %575 = vmatmul.mubr.bf16.gmra.mxu0 %v292
      %v576 = vpop.f32.mrf.mxu0
      %v577 = vadd.f32 %v266, %v576
      %v578 = vpop.f32.mrf.mxu0
      %v579 = vadd.f32 %v270, %v578
      %v580 = vpop.f32.mrf.mxu0
      %v581 = vadd.f32 %v266, %v580
      %v582 = vpop.f32.mrf.mxu0
      %v583 = vadd.f32 %v270, %v582
      %584 = vmatprep.mubr.bf16.mxu0 0
      %585 = vmatmul.mubr.bf16.gmra.mxu0 %v293
      %v586 = vpop.f32.mrf.mxu0
      %v587 = vadd.f32 %v266, %v586
      %v588 = vpop.f32.mrf.mxu0
      %v589 = vadd.f32 %v270, %v588
      %v590 = vpop.f32.mrf.mxu0
      %v591 = vadd.f32 %v266, %v590
      %v592 = vpop.f32.mrf.mxu0
      %v593 = vadd.f32 %v270, %v592
      %594 = vmatprep.mubr.bf16.mxu0 0
      %595 = vmatmul.mubr.bf16.gmra.mxu0 %v294
      %v596 = vpop.f32.mrf.mxu0
      %v597 = vadd.f32 %v266, %v596
      %v598 = vpop.f32.mrf.mxu0
      %v599 = vadd.f32 %v270, %v598
      %v600 = vpop.f32.mrf.mxu0
      %v601 = vadd.f32 %v266, %v600
      %v602 = vpop.f32.mrf.mxu0
      %v603 = vadd.f32 %v270, %v602
      %604 = vdwg.mxu0
      %v605 = vadd.f32 %v494, %v498
      %v606 = vadd.f32 %v605, %v504
      %v607 = vadd.f32 %v606, %v508
      %v608 = vadd.f32 %v607, %v514
      %v609 = vadd.f32 %v608, %v518
      %v610 = vadd.f32 %v609, %v524
      %v611 = vadd.f32 %v610, %v528
      %v612 = vrot.slane %v611, 4
      %v613 = vadd.f32 %v611, %v612
      %v614 = vrot.slane %v613, 2
      %v615 = vadd.f32 %v613, %v614
      %v616 = vrot.slane %v615, 1
      %v617 = vadd.f32 %v615, %v616
      %v618 = vadd.f32 %v496, %v500
      %v619 = vadd.f32 %v618, %v506
      %v620 = vadd.f32 %v619, %v510
      %v621 = vadd.f32 %v620, %v516
      %v622 = vadd.f32 %v621, %v520
      %v623 = vadd.f32 %v622, %v526
      %v624 = vadd.f32 %v623, %v530
      %v625 = vrot.slane %v624, 4
      %v626 = vadd.f32 %v624, %v625
      %v627 = vrot.slane %v626, 2
      %v628 = vadd.f32 %v626, %v627
      %v629 = vrot.slane %v628, 1
      %v630 = vadd.f32 %v628, %v629
      %v631 = vadd.f32 %v567, %v571
      %v632 = vadd.f32 %v631, %v577
      %v633 = vadd.f32 %v632, %v581
      %v634 = vadd.f32 %v633, %v587
      %v635 = vadd.f32 %v634, %v591
      %v636 = vadd.f32 %v635, %v597
      %v637 = vadd.f32 %v636, %v601
      %v638 = vrot.slane %v637, 4
      %v639 = vadd.f32 %v637, %v638
      %v640 = vrot.slane %v639, 2
      %v641 = vadd.f32 %v639, %v640
      %v642 = vrot.slane %v641, 1
      %v643 = vadd.f32 %v641, %v642
      %v644 = vadd.f32 %v569, %v573
      %v645 = vadd.f32 %v644, %v579
      %v646 = vadd.f32 %v645, %v583
      %v647 = vadd.f32 %v646, %v589
      %v648 = vadd.f32 %v647, %v593
      %v649 = vadd.f32 %v648, %v599
      %v650 = vadd.f32 %v649, %v603
      %v651 = vrot.slane %v650, 4
      %v652 = vadd.f32 %v650, %v651
      %v653 = vrot.slane %v652, 2
      %v654 = vadd.f32 %v652, %v653
      %v655 = vrot.slane %v654, 1
      %v656 = vadd.f32 %v654, %v655
      %v657 = vmul.f32 %v494, %v494
      %v658 = vmul.f32 %v496, %v496
      %v659 = vmul.f32 %v567, %v567
      %v660 = vmul.f32 %v569, %v569
      %v661 = vmul.f32 %v498, %v498
      %v662 = vmul.f32 %v500, %v500
      %v663 = vmul.f32 %v571, %v571
      %v664 = vmul.f32 %v573, %v573
      %v665 = vmul.f32 %v504, %v504
      %v666 = vmul.f32 %v506, %v506
      %v667 = vmul.f32 %v577, %v577
      %v668 = vmul.f32 %v579, %v579
      %v669 = vmul.f32 %v508, %v508
      %v670 = vmul.f32 %v510, %v510
      %v671 = vmul.f32 %v581, %v581
      %v672 = vmul.f32 %v583, %v583
      %v673 = vmul.f32 %v514, %v514
      %v674 = vmul.f32 %v516, %v516
      %v675 = vmul.f32 %v587, %v587
      %v676 = vmul.f32 %v589, %v589
      %v677 = vmul.f32 %v518, %v518
      %v678 = vmul.f32 %v520, %v520
      %v679 = vmul.f32 %v591, %v591
      %v680 = vmul.f32 %v593, %v593
      %v681 = vmul.f32 %v524, %v524
      %v682 = vmul.f32 %v526, %v526
      %v683 = vmul.f32 %v597, %v597
      %v684 = vmul.f32 %v599, %v599
      %v685 = vmul.f32 %v528, %v528
      %v686 = vmul.f32 %v530, %v530
      %v687 = vmul.f32 %v601, %v601
      %v688 = vmul.f32 %v603, %v603
      %v689 = vadd.f32 %v657, %v661
      %v690 = vadd.f32 %v689, %v665
      %v691 = vadd.f32 %v690, %v669
      %v692 = vadd.f32 %v691, %v673
      %v693 = vadd.f32 %v692, %v677
      %v694 = vadd.f32 %v693, %v681
      %v695 = vadd.f32 %v694, %v685
      %v696 = vrot.slane %v695, 4
      %v697 = vadd.f32 %v695, %v696
      %v698 = vrot.slane %v697, 2
      %v699 = vadd.f32 %v697, %v698
      %v700 = vrot.slane %v699, 1
      %v701 = vadd.f32 %v699, %v700
      %v702 = vadd.f32 %v658, %v662
      %v703 = vadd.f32 %v702, %v666
      %v704 = vadd.f32 %v703, %v670
      %v705 = vadd.f32 %v704, %v674
      %v706 = vadd.f32 %v705, %v678
      %v707 = vadd.f32 %v706, %v682
      %v708 = vadd.f32 %v707, %v686
      %v709 = vrot.slane %v708, 4
      %v710 = vadd.f32 %v708, %v709
      %v711 = vrot.slane %v710, 2
      %v712 = vadd.f32 %v710, %v711
      %v713 = vrot.slane %v712, 1
      %v714 = vadd.f32 %v712, %v713
      %v715 = vadd.f32 %v659, %v663
      %v716 = vadd.f32 %v715, %v667
      %v717 = vadd.f32 %v716, %v671
      %v718 = vadd.f32 %v717, %v675
      %v719 = vadd.f32 %v718, %v679
      %v720 = vadd.f32 %v719, %v683
      %v721 = vadd.f32 %v720, %v687
      %v722 = vrot.slane %v721, 4
      %v723 = vadd.f32 %v721, %v722
      %v724 = vrot.slane %v723, 2
      %v725 = vadd.f32 %v723, %v724
      %v726 = vrot.slane %v725, 1
      %v727 = vadd.f32 %v725, %v726
      %v728 = vadd.f32 %v660, %v664
      %v729 = vadd.f32 %v728, %v668
      %v730 = vadd.f32 %v729, %v672
      %v731 = vadd.f32 %v730, %v676
      %v732 = vadd.f32 %v731, %v680
      %v733 = vadd.f32 %v732, %v684
      %v734 = vadd.f32 %v733, %v688
      %v735 = vrot.slane %v734, 4
      %v736 = vadd.f32 %v734, %v735
      %v737 = vrot.slane %v736, 2
      %v738 = vadd.f32 %v736, %v737
      %v739 = vrot.slane %v738, 1
      %v740 = vadd.f32 %v738, %v739
      %v741 = vadd.f32 %v617, %v630
      %v742 = vadd.f32 %v701, %v714
      %v743 = vadd.f32 %v741, %v643
      %v744 = vadd.f32 %v742, %v727
      %v745 = vadd.f32 %v743, %v656
      %v746 = vadd.f32 %v744, %v740
      %v747 = vmul.f32 %v745, 0.00390625
      %v748 = vmul.f32 %v746, 0.00390625
      %v749 = vmul.f32 %v747, %v747
      %v750 = vsub.f32 %v748, %v749
      %v751 = vmax.f32 %v750, 0.0
      %v752 = vadd.f32 %v751, 1e-05
      %v753 = vrsqrt.pop %v752
      %v754 = vlaneseq
      %v755 = vshrl.u32 %v754, 7
      %v756 = vsub.s32 0, %v755
      %v757 = vrot.slane %v747, %v756
      %v758 = vsub.f32 %v494, %v757
      %v759 = vsub.f32 %v496, %v757
      %v760 = vsub.f32 %v567, %v757
      %v761 = vsub.f32 %v569, %v757
      %v762 = vsub.f32 %v498, %v757
      %v763 = vsub.f32 %v500, %v757
      %v764 = vsub.f32 %v571, %v757
      %v765 = vsub.f32 %v573, %v757
      %v766 = vsub.f32 %v504, %v757
      %v767 = vsub.f32 %v506, %v757
      %v768 = vsub.f32 %v577, %v757
      %v769 = vsub.f32 %v579, %v757
      %v770 = vsub.f32 %v508, %v757
      %v771 = vsub.f32 %v510, %v757
      %v772 = vsub.f32 %v581, %v757
      %v773 = vsub.f32 %v583, %v757
      %v774 = vsub.f32 %v514, %v757
      %v775 = vsub.f32 %v516, %v757
      %v776 = vsub.f32 %v587, %v757
      %v777 = vsub.f32 %v589, %v757
      %v778 = vsub.f32 %v518, %v757
      %v779 = vsub.f32 %v520, %v757
      %v780 = vsub.f32 %v591, %v757
      %v781 = vsub.f32 %v593, %v757
      %v782 = vsub.f32 %v524, %v757
      %v783 = vsub.f32 %v526, %v757
      %v784 = vsub.f32 %v597, %v757
      %v785 = vsub.f32 %v599, %v757
      %v786 = vsub.f32 %v528, %v757
      %v787 = vsub.f32 %v530, %v757
      %v788 = vsub.f32 %v601, %v757
      %v789 = vsub.f32 %v603, %v757
      %v790 = vlaneseq
      %v791 = vshrl.u32 %v790, 7
      %v792 = vsub.s32 0, %v791
      %v793 = vrot.slane %v753, %v792
      %v794 = vmul.f32 %v758, %v793
      %v795 = vmul.f32 %v759, %v793
      %v796 = vmul.f32 %v760, %v793
      %v797 = vmul.f32 %v761, %v793
      %v798 = vmul.f32 %v762, %v793
      %v799 = vmul.f32 %v763, %v793
      %v800 = vmul.f32 %v764, %v793
      %v801 = vmul.f32 %v765, %v793
      %v802 = vmul.f32 %v766, %v793
      %v803 = vmul.f32 %v767, %v793
      %v804 = vmul.f32 %v768, %v793
      %v805 = vmul.f32 %v769, %v793
      %v806 = vmul.f32 %v770, %v793
      %v807 = vmul.f32 %v771, %v793
      %v808 = vmul.f32 %v772, %v793
      %v809 = vmul.f32 %v773, %v793
      %v810 = vmul.f32 %v774, %v793
      %v811 = vmul.f32 %v775, %v793
      %v812 = vmul.f32 %v776, %v793
      %v813 = vmul.f32 %v777, %v793
      %v814 = vmul.f32 %v778, %v793
      %v815 = vmul.f32 %v779, %v793
      %v816 = vmul.f32 %v780, %v793
      %v817 = vmul.f32 %v781, %v793
      %v818 = vmul.f32 %v782, %v793
      %v819 = vmul.f32 %v783, %v793
      %v820 = vmul.f32 %v784, %v793
      %v821 = vmul.f32 %v785, %v793
      %v822 = vmul.f32 %v786, %v793
      %v823 = vmul.f32 %v787, %v793
      %v824 = vmul.f32 %v788, %v793
      %v825 = vmul.f32 %v789, %v793
      %v826 = vmax.f32 %v794, 0.0
      %v827 = vmax.f32 %v795, 0.0
      %v828 = vmax.f32 %v796, 0.0
      %v829 = vmax.f32 %v797, 0.0
      %v830 = vmax.f32 %v798, 0.0
      %v831 = vmax.f32 %v799, 0.0
      %v832 = vmax.f32 %v800, 0.0
      %v833 = vmax.f32 %v801, 0.0
      %v834 = vmax.f32 %v802, 0.0
      %v835 = vmax.f32 %v803, 0.0
      %v836 = vmax.f32 %v804, 0.0
      %v837 = vmax.f32 %v805, 0.0
      %v838 = vmax.f32 %v806, 0.0
      %v839 = vmax.f32 %v807, 0.0
      %v840 = vmax.f32 %v808, 0.0
      %v841 = vmax.f32 %v809, 0.0
      %v842 = vmax.f32 %v810, 0.0
      %v843 = vmax.f32 %v811, 0.0
      %v844 = vmax.f32 %v812, 0.0
      %v845 = vmax.f32 %v813, 0.0
      %v846 = vmax.f32 %v814, 0.0
      %v847 = vmax.f32 %v815, 0.0
      %v848 = vmax.f32 %v816, 0.0
      %v849 = vmax.f32 %v817, 0.0
      %v850 = vmax.f32 %v818, 0.0
      %v851 = vmax.f32 %v819, 0.0
      %v852 = vmax.f32 %v820, 0.0
      %v853 = vmax.f32 %v821, 0.0
      %v854 = vmax.f32 %v822, 0.0
      %v855 = vmax.f32 %v823, 0.0
      %v856 = vmax.f32 %v824, 0.0
      %v857 = vmax.f32 %v825, 0.0
      %v858 = vpack.c.bf16 %v830, %v826
      %v859 = vpack.c.bf16 %v831, %v827
      %v860 = vpack.c.bf16 %v832, %v828
      %v861 = vpack.c.bf16 %v833, %v829
      %v862 = vpack.c.bf16 %v838, %v834
      %v863 = vpack.c.bf16 %v839, %v835
      %v864 = vpack.c.bf16 %v840, %v836
      %v865 = vpack.c.bf16 %v841, %v837
      %v866 = vpack.c.bf16 %v846, %v842
      %v867 = vpack.c.bf16 %v847, %v843
      %v868 = vpack.c.bf16 %v848, %v844
      %v869 = vpack.c.bf16 %v849, %v845
      %v870 = vpack.c.bf16 %v854, %v850
      %v871 = vpack.c.bf16 %v855, %v851
      %v872 = vpack.c.bf16 %v856, %v852
      %v873 = vpack.c.bf16 %v857, %v853
      %v890 = vunpack.c.l.b16 %v858
      %v891 = vunpack.c.l.b16 %v859
      %v892 = vunpack.c.l.b16 %v860
      %v893 = vunpack.c.l.b16 %v861
      %v894 = vunpack.c.h.b16 %v858
      %v895 = vunpack.c.h.b16 %v859
      %v896 = vunpack.c.h.b16 %v860
      %v897 = vunpack.c.h.b16 %v861
      %v898 = vunpack.c.l.b16 %v862
      %v899 = vunpack.c.l.b16 %v863
      %v900 = vunpack.c.l.b16 %v864
      %v901 = vunpack.c.l.b16 %v865
      %v902 = vunpack.c.h.b16 %v862
      %v903 = vunpack.c.h.b16 %v863
      %v904 = vunpack.c.h.b16 %v864
      %v905 = vunpack.c.h.b16 %v865
      %v906 = vunpack.c.l.b16 %v866
      %v907 = vunpack.c.l.b16 %v867
      %v908 = vunpack.c.l.b16 %v868
      %v909 = vunpack.c.l.b16 %v869
      %v910 = vunpack.c.h.b16 %v866
      %v911 = vunpack.c.h.b16 %v867
      %v912 = vunpack.c.h.b16 %v868
      %v913 = vunpack.c.h.b16 %v869
      %v914 = vunpack.c.l.b16 %v870
      %v915 = vunpack.c.l.b16 %v871
      %v916 = vunpack.c.l.b16 %v872
      %v917 = vunpack.c.l.b16 %v873
      %v918 = vunpack.c.h.b16 %v870
      %v919 = vunpack.c.h.b16 %v871
      %v920 = vunpack.c.h.b16 %v872
      %v921 = vunpack.c.h.b16 %v873
      %v922 = vpack.c.b16 %v891, %v890
      %v923 = vpack.c.b16 %v893, %v892
      %v924 = vpack.c.b16 %v895, %v894
      %v925 = vpack.c.b16 %v897, %v896
      %v926 = vpack.c.b16 %v899, %v898
      %v927 = vpack.c.b16 %v901, %v900
      %v928 = vpack.c.b16 %v903, %v902
      %v929 = vpack.c.b16 %v905, %v904
      %v930 = vpack.c.b16 %v907, %v906
      %v931 = vpack.c.b16 %v909, %v908
      %v932 = vpack.c.b16 %v911, %v910
      %v933 = vpack.c.b16 %v913, %v912
      %v934 = vpack.c.b16 %v915, %v914
      %v935 = vpack.c.b16 %v917, %v916
      %v936 = vpack.c.b16 %v919, %v918
      %v937 = vpack.c.b16 %v921, %v920
      %954 = vst [vmem:[%s210] sm:$0xff] %v922
      %955 = vst [vmem:[%s210 + $0x8] sm:$0xff] %v923
      %956 = vst [vmem:[%s210 + $0x10] sm:$0xff] %v924
      %957 = vst [vmem:[%s210 + $0x18] sm:$0xff] %v925
      %958 = vst [vmem:[%s210 + $0x20] sm:$0xff] %v926
      %959 = vst [vmem:[%s210 + $0x28] sm:$0xff] %v927
      %960 = vst [vmem:[%s210 + $0x30] sm:$0xff] %v928
      %961 = vst [vmem:[%s210 + $0x38] sm:$0xff] %v929
      %962 = vst [vmem:[%s210 + $0x40] sm:$0xff] %v930
      %963 = vst [vmem:[%s210 + $0x48] sm:$0xff] %v931
      %964 = vst [vmem:[%s210 + $0x50] sm:$0xff] %v932
      %965 = vst [vmem:[%s210 + $0x58] sm:$0xff] %v933
      %966 = vst [vmem:[%s210 + $0x60] sm:$0xff] %v934
      %967 = vst [vmem:[%s210 + $0x68] sm:$0xff] %v935
      %968 = vst [vmem:[%s210 + $0x70] sm:$0xff] %v936
      %969 = vst [vmem:[%s210 + $0x78] sm:$0xff] %v937
      %s970 = smul.u32 8, %s19
      %p971 = scmp.lt.s32.totalorder %s18, 1
      %s972 = scalar_select %p971, %s18, 1
      %p973 = scmp.lt.s32.totalorder %s970, 7
      %s974 = scalar_select %p973, %s970, 7
      %s975 = smul.addr %s974, 4
      %s976 = smul.addr %s972, 32
      %s977 = sadd.s32 %s975, %s976
      %s978 = smul.addr %s977, 4
      %s979 = scalar_lea.vmem %s3, %s978
      // Predicated region
      $region33: #{generator_forward.18} parent=31 // pred_check
        %p980 = pneg %p116
      $region34: #{generator_forward.18} parent=31 // pred_check_branch
        %982 = sbr.rel (%p980) target = $region36
      $region35: #{generator_forward.18} parent=31 // pred_region
        %s983 = smul.u32 8, %s19
      $region36: #{generator_forward.18} parent=31 // pred_fallthru
        _
    $region32: #{generator_forward.18} parent=5 // pred_fallthru
      _
    %p984 = scmp.le.s32.totalorder 2, %s9
    // Predicated region
    $region37: #{generator_forward.18} parent=5 // pred_check
      %p985 = pneg %p984
    $region38: #{generator_forward.18} parent=5 // pred_check_branch
      %987 = sbr.rel (%p985) target = $region40
    $region39: #{generator_forward.18} parent=5 // pred_region
      %s988 = ssub.s32 %s9, 2
      // Predicated region
      $region41: #{generator_forward.18} parent=39 // pred_check
        %p989 = pneg %p122
      $region42: #{generator_forward.18} parent=39 // pred_check_branch
        %991 = sbr.rel (%p989) target = $region44
      $region43: #{generator_forward.18} parent=39 // pred_region
        %s992 = smul.u32 8, %s21
        %p993 = scmp.lt.s32.totalorder %s20, 1
        %s994 = scalar_select %p993, %s20, 1
        %p995 = scmp.lt.s32.totalorder %s992, 7
        %s996 = scalar_select %p995, %s992, 7
        %s997 = smul.addr %s996, 4
        %s998 = smul.addr %s994, 32
        %s999 = sadd.s32 %s997, %s998
        %s1000 = smul.addr %s999, 4
        %s1001 = scalar_lea.vmem %s3, %s1000
      $region44: #{generator_forward.18} parent=39 // pred_fallthru
        _
    $region40: #{generator_forward.18} parent=5 // pred_fallthru
      _
  $region6: #{generator_forward.18} parent=0 // loop_footer
    %s13 = sadd.s32 1, %s9
  $region7: #{generator_forward.18} parent=0 // loop_footer_branch
    %8 = sbr.rel target = $region3
  $region8: #{generator_forward.18} parent=0 // loop_exit
    _

// kernel: generator_forward.19
$region0: #{generator_forward.19}
  #allocation0 [shape = 'u32[]', space=smem, size = 0x4, offset = 0x4, fixed_abs, tag = 'smem constant byte address 0x4 - core index']
  #allocation1 [shape = 'u32[144,128]{1,0:T(1,128)}', space=vmem, size = 0x12000, scoped, tag = 'internal scratch']
  %s0 = inlined_call_operand.vmem [shape: bf16[2,256,512], index: 0, kind: input, shape index: {}]
  %s1 = inlined_call_operand.vmem [shape: bf16[512,128], index: 1, kind: input, shape index: {}]
  %s2 = inlined_call_operand.vmem [shape: f32[1,128], index: 2, kind: input, shape index: {}]
  %s3 = inlined_call_operand.vmem [shape: f32[2,256,128], index: 3, kind: output, shape index: {}]
  %s4 = sld [smem:[#allocation0]]
  $region45: #{generator_forward.19} parent=0
    _
  %s6 = ssub.s32 1, %s4
  %s7 = scalar_select 0, %s6, %s4
  loop: start=0, step=1, limit=10
  $region2: #{generator_forward.19} parent=0 // loop_pre_header
    _
  $region3: #{generator_forward.19} parent=0 // loop_header
    %s9 = sphi 0, %s13
    %p10 = scmp.ge.s32.totalorder %s9, 10
    %s16 = sphi 0, %s28
    %s17 = sphi 0, %s24
    %s18 = sphi 0, %s16
    %s19 = sphi 0, %s17
    %s20 = sphi 0, %s18
    %s21 = sphi 0, %s19
    %s33 = sphi 0, %s35
    %s36 = sphi 0, %s33
    %s37 = sphi 0, %s36
    %s53 = sphi 0, %s37
    %s57 = sphi 0, %s57
    %s59 = sphi 0, %s57
    %s60 = sphi 0, %s59
    %s74 = sphi 0, %s60
    %s78 = sphi 0, %s78
    %s80 = sphi 0, %s78
    %s81 = sphi 0, %s80
    %s95 = sphi 0, %s81
    %s103 = sphi 0, %s105
    %s106 = sphi 0, %s103
    %s107 = sphi 0, %s106
    %s123 = sphi 0, %s107
  $region4: #{generator_forward.19} parent=0 // loop_header_branch
    %12 = sbr.rel (%p10) target = $region8
  $region5: #{generator_forward.19} parent=0 // loop_body
    %s14 = ssub.s32 %s9, 1
    %s15 = ssub.s32 %s9, 2
    %s22 = sadd.s32 1, %s17
    %p23 = scmp.ge.s32.totalorder %s22, 4
    %s24 = scalar_select %p23, 0, %s22
    %s25 = sadd.s32 1, %s16
    %s26 = scalar_select %p23, %s25, %s16
    %p27 = scmp.ge.s32.totalorder %s26, 2
    %s28 = scalar_select %p27, 0, %s26
    %s29 = ssub.s32 %s16, %s28
    %s30 = ssub.s32 %s17, %s24
    %s31 = sor.u32 %s29, %s30
    %p32 = scmp.eq.s32.totalorder %s31, 0
    %s34 = sadd.s32 %s33, 1
    %s35 = scalar_select %p32, %s33, %s34
    %p38 = pneg %p32
    %p39 = scmp.eq.s32.totalorder %s9, 7
    %p40 = por %p38, %p39
    %p41 = scmp.ne.s32.totalorder %s33, %s36
    %p42 = scmp.eq.s32.totalorder %s9, 0
    %p43 = por %p41, %p42
    %p44 = scmp.ne.s32.totalorder %s33, %s36
    %p45 = scmp.eq.s32.totalorder %s14, 7
    %p46 = por %p44, %p45
    %p47 = scmp.ne.s32.totalorder %s36, %s37
    %p48 = scmp.eq.s32.totalorder %s14, 0
    %p49 = por %p47, %p48
    %p50 = scmp.ne.s32.totalorder %s36, %s37
    %p51 = scmp.eq.s32.totalorder %s15, 7
    %p52 = por %p50, %p51
    %p54 = scmp.ne.s32.totalorder %s37, %s53
    %p55 = scmp.eq.s32.totalorder %s15, 0
    %p56 = por %p54, %p55
    %s58 = sadd.s32 %s57, 1
    %p61 = scmp.eq.s32.totalorder %s9, 7
    %p62 = scmp.ne.s32.totalorder %s57, %s59
    %p63 = scmp.eq.s32.totalorder %s9, 0
    %p64 = por %p62, %p63
    %p65 = scmp.ne.s32.totalorder %s57, %s59
    %p66 = scmp.eq.s32.totalorder %s14, 7
    %p67 = por %p65, %p66
    %p68 = scmp.ne.s32.totalorder %s59, %s60
    %p69 = scmp.eq.s32.totalorder %s14, 0
    %p70 = por %p68, %p69
    %p71 = scmp.ne.s32.totalorder %s59, %s60
    %p72 = scmp.eq.s32.totalorder %s15, 7
    %p73 = por %p71, %p72
    %p75 = scmp.ne.s32.totalorder %s60, %s74
    %p76 = scmp.eq.s32.totalorder %s15, 0
    %p77 = por %p75, %p76
    %s79 = sadd.s32 %s78, 1
    %p82 = scmp.eq.s32.totalorder %s9, 7
    %p83 = scmp.ne.s32.totalorder %s78, %s80
    %p84 = scmp.eq.s32.totalorder %s9, 0
    %p85 = por %p83, %p84
    %p86 = scmp.ne.s32.totalorder %s78, %s80
    %p87 = scmp.eq.s32.totalorder %s14, 7
    %p88 = por %p86, %p87
    %p89 = scmp.ne.s32.totalorder %s80, %s81
    %p90 = scmp.eq.s32.totalorder %s14, 0
    %p91 = por %p89, %p90
    %p92 = scmp.ne.s32.totalorder %s80, %s81
    %p93 = scmp.eq.s32.totalorder %s15, 7
    %p94 = por %p92, %p93
    %p96 = scmp.ne.s32.totalorder %s81, %s95
    %p97 = scmp.eq.s32.totalorder %s15, 0
    %p98 = por %p96, %p97
    %s99 = ssub.s32 %s16, %s28
    %s100 = ssub.s32 %s17, %s24
    %s101 = sor.u32 %s99, %s100
    %p102 = scmp.eq.s32.totalorder %s101, 0
    %s104 = sadd.s32 %s103, 1
    %s105 = scalar_select %p102, %s103, %s104
    %p108 = pneg %p102
    %p109 = scmp.eq.s32.totalorder %s9, 7
    %p110 = por %p108, %p109
    %p111 = scmp.ne.s32.totalorder %s103, %s106
    %p112 = scmp.eq.s32.totalorder %s9, 0
    %p113 = por %p111, %p112
    %p114 = scmp.ne.s32.totalorder %s103, %s106
    %p115 = scmp.eq.s32.totalorder %s14, 7
    %p116 = por %p114, %p115
    %p117 = scmp.ne.s32.totalorder %s106, %s107
    %p118 = scmp.eq.s32.totalorder %s14, 0
    %p119 = por %p117, %p118
    %p120 = scmp.ne.s32.totalorder %s106, %s107
    %p121 = scmp.eq.s32.totalorder %s15, 7
    %p122 = por %p120, %p121
    %p124 = scmp.ne.s32.totalorder %s107, %s123
    %p125 = scmp.eq.s32.totalorder %s15, 0
    %p126 = por %p124, %p125
    %p127 = scmp.le.s32.totalorder 1, %s9
    %p128 = scmp.lt.s32.totalorder %s9, 9
    %p129 = pnand %p127, %p128
    %p130 = pneg %p129
    // Predicated region
    $region9: #{generator_forward.19} parent=5 // pred_check
      _
    $region10: #{generator_forward.19} parent=5 // pred_check_branch
      %132 = sbr.rel (%p129) target = $region12
    $region11: #{generator_forward.19} parent=5 // pred_region
      %s133 = ssub.s32 %s9, 1
      // Predicated region
      $region13: #{generator_forward.19} parent=11 // pred_check
        %p134 = pneg %p70
      $region14: #{generator_forward.19} parent=11 // pred_check_branch
        %136 = sbr.rel (%p134) target = $region16
      $region15: #{generator_forward.19} parent=11 // pred_region
        _
      $region16: #{generator_forward.19} parent=11 // pred_fallthru
        _
      // Predicated region
      $region17: #{generator_forward.19} parent=11 // pred_check
        %p137 = pneg %p91
      $region18: #{generator_forward.19} parent=11 // pred_check_branch
        %139 = sbr.rel (%p137) target = $region20
      $region19: #{generator_forward.19} parent=11 // pred_region
        _
      $region20: #{generator_forward.19} parent=11 // pred_fallthru
        _
    $region12: #{generator_forward.19} parent=5 // pred_fallthru
      _
    %p140 = scmp.lt.s32.totalorder %s9, 8
    // Predicated region
    $region21: #{generator_forward.19} parent=5 // pred_check
      %p141 = pneg %p140
    $region22: #{generator_forward.19} parent=5 // pred_check_branch
      %143 = sbr.rel (%p141) target = $region24
    $region23: #{generator_forward.19} parent=5 // pred_region
      // Predicated region
      $region25: #{generator_forward.19} parent=23 // pred_check
        %p144 = pneg %p43
      $region26: #{generator_forward.19} parent=23 // pred_check_branch
        %146 = sbr.rel (%p144) target = $region28
      $region27: #{generator_forward.19} parent=23 // pred_region
        %s147 = smul.u32 8, %s17
        %p148 = scmp.lt.s32.totalorder %s16, 1
        %s149 = scalar_select %p148, %s16, 1
        %p150 = scmp.lt.s32.totalorder %s147, 31
        %s151 = scalar_select %p150, %s147, 31
        %s152 = smul.addr %s151, 4
        %s153 = smul.addr %s149, 128
        %s154 = sadd.s32 %s152, %s153
        %s155 = smul.addr %s154, 4
        %s156 = scalar_lea.vmem %s0, %s155
        %s157 = smul.u32 8, %s17
      $region28: #{generator_forward.19} parent=23 // pred_fallthru
        _
    $region24: #{generator_forward.19} parent=5 // pred_fallthru
      _
    %p158 = scmp.le.s32.totalorder 1, %s9
    %p159 = scmp.lt.s32.totalorder %s9, 9
    %p160 = pnand %p158, %p159
    %p161 = pneg %p160
    // Predicated region
    $region29: #{generator_forward.19} parent=5 // pred_check
      _
    $region30: #{generator_forward.19} parent=5 // pred_check_branch
      %163 = sbr.rel (%p160) target = $region32
    $region31: #{generator_forward.19} parent=5 // pred_region
      %s164 = ssub.s32 %s9, 1
      %s165 = smul.u32 8, %s19
      %p166 = scmp.lt.s32.totalorder %s18, 1
      %s167 = scalar_select %p166, %s18, 1
      %p168 = scmp.lt.s32.totalorder %s165, 31
      %s169 = scalar_select %p168, %s165, 31
      %s170 = smul.addr %s169, 4
      %s171 = smul.addr %s167, 128
      %s172 = sadd.s32 %s170, %s171
      %s173 = smul.addr %s172, 4
      %s174 = scalar_lea.vmem %s0, %s173
      %p175 = pneg %p49
      %p176 = pneg %p46
      %p177 = pneg %p70
      %p178 = pneg %p67
      %p179 = pneg %p91
      %p180 = pneg %p88
      %p181 = pneg %p119
      %p182 = pneg %p116
      %s183 = smul.u32 8, %s19
      %p184 = scmp.lt.s32.totalorder %s18, 1
      %s185 = scalar_select %p184, %s18, 1
      %p186 = scmp.lt.s32.totalorder %s183, 31
      %s187 = scalar_select %p186, %s183, 31
      %s188 = smul.addr %s185, 32
      %s189 = sadd.s32 %s187, %s188
      %s190 = smul.addr %s189, 8
      %s191 = scalar_lea.vmem %s3, %s190
      %s192 = smul.u32 8, %s19
      %p193 = scmp.lt.s32.totalorder %s18, 1
      %s194 = scalar_select %p193, %s18, 1
      %p195 = scmp.lt.s32.totalorder %s192, 31
      %s196 = scalar_select %p195, %s192, 31
      %s197 = smul.addr %s196, 4
      %s198 = smul.addr %s194, 128
      %s199 = sadd.s32 %s197, %s198
      %s200 = smul.addr %s199, 4
      %s201 = scalar_lea.vmem %s0, %s200
      %s202 = smul.u32 8, %s19
      %s203 = smul.u32 8, %s19
      %p204 = scmp.lt.s32.totalorder %s18, 1
      %s205 = scalar_select %p204, %s18, 1
      %p206 = scmp.lt.s32.totalorder %s203, 31
      %s207 = scalar_select %p206, %s203, 31
      %s208 = smul.addr %s205, 32
      %s209 = sadd.s32 %s207, %s208
      %s210 = smul.addr %s209, 8
      %s211 = scalar_lea.vmem %s3, %s210
      %s212 = smul.u32 8, %s19
      %v214 = vld [vmem:[%s201] sm:$0xff]
      %v215 = vld [vmem:[%s201 + $0x8] sm:$0xff]
      %v216 = vld [vmem:[%s201 + $0x10] sm:$0xff]
      %v217 = vld [vmem:[%s201 + $0x18] sm:$0xff]
      %v218 = vld [vmem:[%s201 + $0x20] sm:$0xff]
      %v219 = vld [vmem:[%s201 + $0x28] sm:$0xff]
      %v220 = vld [vmem:[%s201 + $0x30] sm:$0xff]
      %v221 = vld [vmem:[%s201 + $0x38] sm:$0xff]
      %v222 = vld [vmem:[%s201 + $0x40] sm:$0xff]
      %v223 = vld [vmem:[%s201 + $0x48] sm:$0xff]
      %v224 = vld [vmem:[%s201 + $0x50] sm:$0xff]
      %v225 = vld [vmem:[%s201 + $0x58] sm:$0xff]
      %v226 = vld [vmem:[%s201 + $0x60] sm:$0xff]
      %v227 = vld [vmem:[%s201 + $0x68] sm:$0xff]
      %v228 = vld [vmem:[%s201 + $0x70] sm:$0xff]
      %v229 = vld [vmem:[%s201 + $0x78] sm:$0xff]
      %v230 = vld [vmem:[%s1] sm:$0xf]
      %v231 = vld [vmem:[%s1 + $0x4] sm:$0xf]
      %v232 = vld [vmem:[%s1 + $0x8] sm:$0xf]
      %v233 = vld [vmem:[%s1 + $0xc] sm:$0xf]
      %v234 = vld [vmem:[%s1 + $0x10] sm:$0xf]
      %v235 = vld [vmem:[%s1 + $0x14] sm:$0xf]
      %v236 = vld [vmem:[%s1 + $0x18] sm:$0xf]
      %v237 = vld [vmem:[%s1 + $0x1c] sm:$0xf]
      %v238 = vld [vmem:[%s1 + $0x20] sm:$0xf]
      %v239 = vld [vmem:[%s1 + $0x24] sm:$0xf]
      %v240 = vld [vmem:[%s1 + $0x28] sm:$0xf]
      %v241 = vld [vmem:[%s1 + $0x2c] sm:$0xf]
      %v242 = vld [vmem:[%s1 + $0x30] sm:$0xf]
      %v243 = vld [vmem:[%s1 + $0x34] sm:$0xf]
      %v244 = vld [vmem:[%s1 + $0x38] sm:$0xf]
      %v245 = vld [vmem:[%s1 + $0x3c] sm:$0xf]
      %v246 = vld [vmem:[%s1 + $0x40] sm:$0xf]
      %v247 = vld [vmem:[%s1 + $0x44] sm:$0xf]
      %v248 = vld [vmem:[%s1 + $0x48] sm:$0xf]
      %v249 = vld [vmem:[%s1 + $0x4c] sm:$0xf]
      %v250 = vld [vmem:[%s1 + $0x50] sm:$0xf]
      %v251 = vld [vmem:[%s1 + $0x54] sm:$0xf]
      %v252 = vld [vmem:[%s1 + $0x58] sm:$0xf]
      %v253 = vld [vmem:[%s1 + $0x5c] sm:$0xf]
      %v254 = vld [vmem:[%s1 + $0x60] sm:$0xf]
      %v255 = vld [vmem:[%s1 + $0x64] sm:$0xf]
      %v256 = vld [vmem:[%s1 + $0x68] sm:$0xf]
      %v257 = vld [vmem:[%s1 + $0x6c] sm:$0xf]
      %v258 = vld [vmem:[%s1 + $0x70] sm:$0xf]
      %v259 = vld [vmem:[%s1 + $0x74] sm:$0xf]
      %v260 = vld [vmem:[%s1 + $0x78] sm:$0xf]
      %v261 = vld [vmem:[%s1 + $0x7c] sm:$0xf]
      %v262 = vld [vmem:[%s1 + $0x80] sm:$0xf]
      %v263 = vld [vmem:[%s1 + $0x84] sm:$0xf]
      %v264 = vld [vmem:[%s1 + $0x88] sm:$0xf]
      %v265 = vld [vmem:[%s1 + $0x8c] sm:$0xf]
      %v266 = vld [vmem:[%s1 + $0x90] sm:$0xf]
      %v267 = vld [vmem:[%s1 + $0x94] sm:$0xf]
      %v268 = vld [vmem:[%s1 + $0x98] sm:$0xf]
      %v269 = vld [vmem:[%s1 + $0x9c] sm:$0xf]
      %v270 = vld [vmem:[%s1 + $0xa0] sm:$0xf]
      %v271 = vld [vmem:[%s1 + $0xa4] sm:$0xf]
      %v272 = vld [vmem:[%s1 + $0xa8] sm:$0xf]
      %v273 = vld [vmem:[%s1 + $0xac] sm:$0xf]
      %v274 = vld [vmem:[%s1 + $0xb0] sm:$0xf]
      %v275 = vld [vmem:[%s1 + $0xb4] sm:$0xf]
      %v276 = vld [vmem:[%s1 + $0xb8] sm:$0xf]
      %v277 = vld [vmem:[%s1 + $0xbc] sm:$0xf]
      %v278 = vld [vmem:[%s1 + $0xc0] sm:$0xf]
      %v279 = vld [vmem:[%s1 + $0xc4] sm:$0xf]
      %v280 = vld [vmem:[%s1 + $0xc8] sm:$0xf]
      %v281 = vld [vmem:[%s1 + $0xcc] sm:$0xf]
      %v282 = vld [vmem:[%s1 + $0xd0] sm:$0xf]
      %v283 = vld [vmem:[%s1 + $0xd4] sm:$0xf]
      %v284 = vld [vmem:[%s1 + $0xd8] sm:$0xf]
      %v285 = vld [vmem:[%s1 + $0xdc] sm:$0xf]
      %v286 = vld [vmem:[%s1 + $0xe0] sm:$0xf]
      %v287 = vld [vmem:[%s1 + $0xe4] sm:$0xf]
      %v288 = vld [vmem:[%s1 + $0xe8] sm:$0xf]
      %v289 = vld [vmem:[%s1 + $0xec] sm:$0xf]
      %v290 = vld [vmem:[%s1 + $0xf0] sm:$0xf]
      %v291 = vld [vmem:[%s1 + $0xf4] sm:$0xf]
      %v292 = vld [vmem:[%s1 + $0xf8] sm:$0xf]
      %v293 = vld [vmem:[%s1 + $0xfc] sm:$0xf]
      %v294 = vld [vmem:[%s2] sm:$0x1]
      %v296 = vlaneseq
      %v297 = vshrl.u32 %v296, 7
      %v298 = vsub.s32 0, %v297
      %v299 = vrot.slane %v294, %v298
      %v317 = vunpack.c.l.b16 %v214
      %v318 = vunpack.c.h.b16 %v214
      %v319 = vunpack.c.l.b16 %v215
      %v320 = vunpack.c.h.b16 %v215
      %v321 = vunpack.c.l.b16 %v216
      %v322 = vunpack.c.h.b16 %v216
      %v323 = vunpack.c.l.b16 %v217
      %v324 = vunpack.c.h.b16 %v217
      %v325 = vunpack.c.l.b16 %v218
      %v326 = vunpack.c.h.b16 %v218
      %v327 = vunpack.c.l.b16 %v219
      %v328 = vunpack.c.h.b16 %v219
      %v329 = vunpack.c.l.b16 %v220
      %v330 = vunpack.c.h.b16 %v220
      %v331 = vunpack.c.l.b16 %v221
      %v332 = vunpack.c.h.b16 %v221
      %v333 = vunpack.c.l.b16 %v222
      %v334 = vunpack.c.h.b16 %v222
      %v335 = vunpack.c.l.b16 %v223
      %v336 = vunpack.c.h.b16 %v223
      %v337 = vunpack.c.l.b16 %v224
      %v338 = vunpack.c.h.b16 %v224
      %v339 = vunpack.c.l.b16 %v225
      %v340 = vunpack.c.h.b16 %v225
      %v341 = vunpack.c.l.b16 %v226
      %v342 = vunpack.c.h.b16 %v226
      %v343 = vunpack.c.l.b16 %v227
      %v344 = vunpack.c.h.b16 %v227
      %v345 = vunpack.c.l.b16 %v228
      %v346 = vunpack.c.h.b16 %v228
      %v347 = vunpack.c.l.b16 %v229
      %v348 = vunpack.c.h.b16 %v229
      %v349 = vpack.c.b16 %v321, %v317
      %v350 = vpack.c.b16 %v322, %v318
      %v351 = vpack.c.b16 %v323, %v319
      %v352 = vpack.c.b16 %v324, %v320
      %v353 = vpack.c.b16 %v329, %v325
      %v354 = vpack.c.b16 %v330, %v326
      %v355 = vpack.c.b16 %v331, %v327
      %v356 = vpack.c.b16 %v332, %v328
      %v357 = vpack.c.b16 %v337, %v333
      %v358 = vpack.c.b16 %v338, %v334
      %v359 = vpack.c.b16 %v339, %v335
      %v360 = vpack.c.b16 %v340, %v336
      %v361 = vpack.c.b16 %v345, %v341
      %v362 = vpack.c.b16 %v346, %v342
      %v363 = vpack.c.b16 %v347, %v343
      %v364 = vpack.c.b16 %v348, %v344
      %v445 = vunpack.c.l.b16 %v230
      %v446 = vunpack.c.l.b16 %v231
      %v447 = vunpack.c.l.b16 %v232
      %v448 = vunpack.c.l.b16 %v233
      %v449 = vunpack.c.l.b16 %v234
      %v450 = vunpack.c.l.b16 %v235
      %v451 = vunpack.c.l.b16 %v236
      %v452 = vunpack.c.l.b16 %v237
      %v453 = vunpack.c.l.b16 %v238
      %v454 = vunpack.c.l.b16 %v239
      %v455 = vunpack.c.l.b16 %v240
      %v456 = vunpack.c.l.b16 %v241
      %v457 = vunpack.c.l.b16 %v242
      %v458 = vunpack.c.l.b16 %v243
      %v459 = vunpack.c.l.b16 %v244
      %v460 = vunpack.c.l.b16 %v245
      %v461 = vunpack.c.l.b16 %v246
      %v462 = vunpack.c.l.b16 %v247
      %v463 = vunpack.c.l.b16 %v248
      %v464 = vunpack.c.l.b16 %v249
      %v465 = vunpack.c.l.b16 %v250
      %v466 = vunpack.c.l.b16 %v251
      %v467 = vunpack.c.l.b16 %v252
      %v468 = vunpack.c.l.b16 %v253
      %v469 = vunpack.c.l.b16 %v254
      %v470 = vunpack.c.l.b16 %v255
      %v471 = vunpack.c.l.b16 %v256
      %v472 = vunpack.c.l.b16 %v257
      %v473 = vunpack.c.l.b16 %v258
      %v474 = vunpack.c.l.b16 %v259
      %v475 = vunpack.c.l.b16 %v260
      %v476 = vunpack.c.l.b16 %v261
      %v477 = vunpack.c.l.b16 %v262
      %v478 = vunpack.c.l.b16 %v263
      %v479 = vunpack.c.l.b16 %v264
      %v480 = vunpack.c.l.b16 %v265
      %v481 = vunpack.c.l.b16 %v266
      %v482 = vunpack.c.l.b16 %v267
      %v483 = vunpack.c.l.b16 %v268
      %v484 = vunpack.c.l.b16 %v269
      %v485 = vunpack.c.l.b16 %v270
      %v486 = vunpack.c.l.b16 %v271
      %v487 = vunpack.c.l.b16 %v272
      %v488 = vunpack.c.l.b16 %v273
      %v489 = vunpack.c.l.b16 %v274
      %v490 = vunpack.c.l.b16 %v275
      %v491 = vunpack.c.l.b16 %v276
      %v492 = vunpack.c.l.b16 %v277
      %v493 = vunpack.c.l.b16 %v278
      %v494 = vunpack.c.l.b16 %v279
      %v495 = vunpack.c.l.b16 %v280
      %v496 = vunpack.c.l.b16 %v281
      %v497 = vunpack.c.l.b16 %v282
      %v498 = vunpack.c.l.b16 %v283
      %v499 = vunpack.c.l.b16 %v284
      %v500 = vunpack.c.l.b16 %v285
      %v501 = vunpack.c.l.b16 %v286
      %v502 = vunpack.c.l.b16 %v287
      %v503 = vunpack.c.l.b16 %v288
      %v504 = vunpack.c.l.b16 %v289
      %v505 = vunpack.c.l.b16 %v290
      %v506 = vunpack.c.l.b16 %v291
      %v507 = vunpack.c.l.b16 %v292
      %v508 = vunpack.c.l.b16 %v293
      %v509 = vpack.c.b16 %v446, %v445
      %v510 = vpack.c.b16 %v448, %v447
      %v511 = vpack.c.b16 %v450, %v449
      %v512 = vpack.c.b16 %v452, %v451
      %v513 = vpack.c.b16 %v454, %v453
      %v514 = vpack.c.b16 %v456, %v455
      %v515 = vpack.c.b16 %v458, %v457
      %v516 = vpack.c.b16 %v460, %v459
      %v517 = vpack.c.b16 %v462, %v461
      %v518 = vpack.c.b16 %v464, %v463
      %v519 = vpack.c.b16 %v466, %v465
      %v520 = vpack.c.b16 %v468, %v467
      %v521 = vpack.c.b16 %v470, %v469
      %v522 = vpack.c.b16 %v472, %v471
      %v523 = vpack.c.b16 %v474, %v473
      %v524 = vpack.c.b16 %v476, %v475
      %v525 = vpack.c.b16 %v478, %v477
      %v526 = vpack.c.b16 %v480, %v479
      %v527 = vpack.c.b16 %v482, %v481
      %v528 = vpack.c.b16 %v484, %v483
      %v529 = vpack.c.b16 %v486, %v485
      %v530 = vpack.c.b16 %v488, %v487
      %v531 = vpack.c.b16 %v490, %v489
      %v532 = vpack.c.b16 %v492, %v491
      %v533 = vpack.c.b16 %v494, %v493
      %v534 = vpack.c.b16 %v496, %v495
      %v535 = vpack.c.b16 %v498, %v497
      %v536 = vpack.c.b16 %v500, %v499
      %v537 = vpack.c.b16 %v502, %v501
      %v538 = vpack.c.b16 %v504, %v503
      %v539 = vpack.c.b16 %v506, %v505
      %v540 = vpack.c.b16 %v508, %v507
      %573 = vmatprep.subr.bf16.mxu0 0
      %574 = vmatpush1.bf16.msra.mxu0 %v516
      %575 = vmatprep.subr.bf16.mxu0 0
      %576 = vmatpush1.bf16.msra.mxu0 %v515
      %577 = vmatprep.subr.bf16.mxu0 0
      %578 = vmatpush1.bf16.msra.mxu0 %v514
      %579 = vmatprep.subr.bf16.mxu0 0
      %580 = vmatpush1.bf16.msra.mxu0 %v513
      %581 = vmatprep.subr.bf16.mxu0 0
      %582 = vmatpush1.bf16.msra.mxu0 %v512
      %583 = vmatprep.subr.bf16.mxu0 0
      %584 = vmatpush1.bf16.msra.mxu0 %v511
      %585 = vmatprep.subr.bf16.mxu0 0
      %586 = vmatpush1.bf16.msra.mxu0 %v510
      %587 = vmatprep.subr.bf16.mxu0 0
      %588 = vmatpush1.bf16.msra.mxu0 %v509
      %589 = vmatprep.subr.bf16.mxu0 0
      %590 = vmatpush2.bf16.msra.mxu0 %v524
      %591 = vmatprep.subr.bf16.mxu0 0
      %592 = vmatpush2.bf16.msra.mxu0 %v523
      %593 = vmatprep.subr.bf16.mxu0 0
      %594 = vmatpush2.bf16.msra.mxu0 %v522
      %595 = vmatprep.subr.bf16.mxu0 0
      %596 = vmatpush2.bf16.msra.mxu0 %v521
      %597 = vmatprep.subr.bf16.mxu0 0
      %598 = vmatpush2.bf16.msra.mxu0 %v520
      %599 = vmatprep.subr.bf16.mxu0 0
      %600 = vmatpush2.bf16.msra.mxu0 %v519
      %601 = vmatprep.subr.bf16.mxu0 0
      %602 = vmatpush2.bf16.msra.mxu0 %v518
      %603 = vmatprep.subr.bf16.mxu0 0
      %604 = vmatpush2.bf16.msra.mxu0 %v517
      %605 = vmatprep.mubr.bf16.mxu0 %v350
      %606 = vmatmul.mubr.bf16.gmra.mxu0 %v349
      %v607 = vpop.f32.mrf.mxu0
      %v608 = vadd.f32 %v299, %v607
      %v609 = vpop.f32.mrf.mxu0
      %v610 = vpop.f32.mrf.mxu0
      %v611 = vadd.f32 %v299, %v610
      %v612 = vpop.f32.mrf.mxu0
      %613 = vmatprep.mubr.bf16.mxu0 %v354
      %614 = vmatmul.mubr.bf16.gmra.mxu0 %v353
      %v615 = vpop.f32.mrf.mxu0
      %v616 = vadd.f32 %v299, %v615
      %v617 = vpop.f32.mrf.mxu0
      %v618 = vpop.f32.mrf.mxu0
      %v619 = vadd.f32 %v299, %v618
      %v620 = vpop.f32.mrf.mxu0
      %621 = vmatprep.mubr.bf16.mxu0 %v358
      %622 = vmatmul.mubr.bf16.gmra.mxu0 %v357
      %v623 = vpop.f32.mrf.mxu0
      %v624 = vadd.f32 %v299, %v623
      %v625 = vpop.f32.mrf.mxu0
      %v626 = vpop.f32.mrf.mxu0
      %v627 = vadd.f32 %v299, %v626
      %v628 = vpop.f32.mrf.mxu0
      %629 = vmatprep.mubr.bf16.mxu0 %v362
      %630 = vmatmul.mubr.bf16.gmra.mxu0 %v361
      %v631 = vpop.f32.mrf.mxu0
      %v632 = vadd.f32 %v299, %v631
      %v633 = vpop.f32.mrf.mxu0
      %v634 = vpop.f32.mrf.mxu0
      %v635 = vadd.f32 %v299, %v634
      %v636 = vpop.f32.mrf.mxu0
      %637 = vdwg.mxu0
      %638 = vmatprep.subr.bf16.mxu0 0
      %639 = vmatpush1.bf16.msra.mxu0 %v532
      %640 = vmatprep.subr.bf16.mxu0 0
      %641 = vmatpush1.bf16.msra.mxu0 %v531
      %642 = vmatprep.subr.bf16.mxu0 0
      %643 = vmatpush1.bf16.msra.mxu0 %v530
      %644 = vmatprep.subr.bf16.mxu0 0
      %645 = vmatpush1.bf16.msra.mxu0 %v529
      %646 = vmatprep.subr.bf16.mxu0 0
      %647 = vmatpush1.bf16.msra.mxu0 %v528
      %648 = vmatprep.subr.bf16.mxu0 0
      %649 = vmatpush1.bf16.msra.mxu0 %v527
      %650 = vmatprep.subr.bf16.mxu0 0
      %651 = vmatpush1.bf16.msra.mxu0 %v526
      %652 = vmatprep.subr.bf16.mxu0 0
      %653 = vmatpush1.bf16.msra.mxu0 %v525
      %654 = vmatprep.subr.bf16.mxu0 0
      %655 = vmatpush2.bf16.msra.mxu0 %v540
      %656 = vmatprep.subr.bf16.mxu0 0
      %657 = vmatpush2.bf16.msra.mxu0 %v539
      %658 = vmatprep.subr.bf16.mxu0 0
      %659 = vmatpush2.bf16.msra.mxu0 %v538
      %660 = vmatprep.subr.bf16.mxu0 0
      %661 = vmatpush2.bf16.msra.mxu0 %v537
      %662 = vmatprep.subr.bf16.mxu0 0
      %663 = vmatpush2.bf16.msra.mxu0 %v536
      %664 = vmatprep.subr.bf16.mxu0 0
      %665 = vmatpush2.bf16.msra.mxu0 %v535
      %666 = vmatprep.subr.bf16.mxu0 0
      %667 = vmatpush2.bf16.msra.mxu0 %v534
      %668 = vmatprep.subr.bf16.mxu0 0
      %669 = vmatpush2.bf16.msra.mxu0 %v533
      %670 = vmatprep.mubr.bf16.mxu0 %v352
      %671 = vmatmul.mubr.bf16.gmra.mxu0 %v351
      %v672 = vpop.f32.mrf.mxu0
      %v673 = vadd.f32 %v608, %v672
      %v674 = vpop.f32.mrf.mxu0
      %v675 = vpop.f32.mrf.mxu0
      %v676 = vadd.f32 %v611, %v675
      %v677 = vpop.f32.mrf.mxu0
      %678 = vmatprep.mubr.bf16.mxu0 %v356
      %679 = vmatmul.mubr.bf16.gmra.mxu0 %v355
      %v680 = vpop.f32.mrf.mxu0
      %v681 = vadd.f32 %v616, %v680
      %v682 = vpop.f32.mrf.mxu0
      %v683 = vpop.f32.mrf.mxu0
      %v684 = vadd.f32 %v619, %v683
      %v685 = vpop.f32.mrf.mxu0
      %686 = vmatprep.mubr.bf16.mxu0 %v360
      %687 = vmatmul.mubr.bf16.gmra.mxu0 %v359
      %v688 = vpop.f32.mrf.mxu0
      %v689 = vadd.f32 %v624, %v688
      %v690 = vpop.f32.mrf.mxu0
      %v691 = vpop.f32.mrf.mxu0
      %v692 = vadd.f32 %v627, %v691
      %v693 = vpop.f32.mrf.mxu0
      %694 = vmatprep.mubr.bf16.mxu0 %v364
      %695 = vmatmul.mubr.bf16.gmra.mxu0 %v363
      %v696 = vpop.f32.mrf.mxu0
      %v697 = vadd.f32 %v632, %v696
      %v698 = vpop.f32.mrf.mxu0
      %v699 = vpop.f32.mrf.mxu0
      %v700 = vadd.f32 %v635, %v699
      %v701 = vpop.f32.mrf.mxu0
      %702 = vdwg.mxu0
      %v703 = vtanh.pop %v673
      %v704 = vtanh.pop %v676
      %v705 = vtanh.pop %v681
      %v706 = vtanh.pop %v684
      %v707 = vtanh.pop %v689
      %v708 = vtanh.pop %v692
      %v709 = vtanh.pop %v697
      %v710 = vtanh.pop %v700
      %711 = vst [vmem:[%s211] sm:$0xff] %v703
      %712 = vst [vmem:[%s211 + $0x8] sm:$0xff] %v704
      %713 = vst [vmem:[%s211 + $0x10] sm:$0xff] %v705
      %714 = vst [vmem:[%s211 + $0x18] sm:$0xff] %v706
      %715 = vst [vmem:[%s211 + $0x20] sm:$0xff] %v707
      %716 = vst [vmem:[%s211 + $0x28] sm:$0xff] %v708
      %717 = vst [vmem:[%s211 + $0x30] sm:$0xff] %v709
      %718 = vst [vmem:[%s211 + $0x38] sm:$0xff] %v710
      %s719 = smul.u32 8, %s19
      %p720 = scmp.lt.s32.totalorder %s18, 1
      %s721 = scalar_select %p720, %s18, 1
      %p722 = scmp.lt.s32.totalorder %s719, 31
      %s723 = scalar_select %p722, %s719, 31
      %s724 = smul.addr %s721, 32
      %s725 = sadd.s32 %s723, %s724
      %s726 = smul.addr %s725, 8
      %s727 = scalar_lea.vmem %s3, %s726
      // Predicated region
      $region33: #{generator_forward.19} parent=31 // pred_check
        %p728 = pneg %p116
      $region34: #{generator_forward.19} parent=31 // pred_check_branch
        %730 = sbr.rel (%p728) target = $region36
      $region35: #{generator_forward.19} parent=31 // pred_region
        %s731 = smul.u32 8, %s19
      $region36: #{generator_forward.19} parent=31 // pred_fallthru
        _
    $region32: #{generator_forward.19} parent=5 // pred_fallthru
      _
    %p732 = scmp.le.s32.totalorder 2, %s9
    // Predicated region
    $region37: #{generator_forward.19} parent=5 // pred_check
      %p733 = pneg %p732
    $region38: #{generator_forward.19} parent=5 // pred_check_branch
      %735 = sbr.rel (%p733) target = $region40
    $region39: #{generator_forward.19} parent=5 // pred_region
      %s736 = ssub.s32 %s9, 2
      // Predicated region
      $region41: #{generator_forward.19} parent=39 // pred_check
        %p737 = pneg %p122
      $region42: #{generator_forward.19} parent=39 // pred_check_branch
        %739 = sbr.rel (%p737) target = $region44
      $region43: #{generator_forward.19} parent=39 // pred_region
        %s740 = smul.u32 8, %s21
        %p741 = scmp.lt.s32.totalorder %s20, 1
        %s742 = scalar_select %p741, %s20, 1
        %p743 = scmp.lt.s32.totalorder %s740, 31
        %s744 = scalar_select %p743, %s740, 31
        %s745 = smul.addr %s742, 32
        %s746 = sadd.s32 %s744, %s745
        %s747 = smul.addr %s746, 8
        %s748 = scalar_lea.vmem %s3, %s747
      $region44: #{generator_forward.19} parent=39 // pred_fallthru
        _
    $region40: #{generator_forward.19} parent=5 // pred_fallthru
      _
  $region6: #{generator_forward.19} parent=0 // loop_footer
    %s13 = sadd.s32 1, %s9
  $region7: #{generator_forward.19} parent=0 // loop_footer_branch
    %8 = sbr.rel target = $region3
  $region8: #{generator_forward.19} parent=0 // loop_exit
    _

</llo_original>
